<compile_context>
chip_gen: v7x
topology: tpu7x:2x2x1
jax: 0.10.0
libtpu: 0.0.40
codegen_flags: <defaults>
</compile_context>

<pallas_src>
import jax
import jax.numpy as jnp
from jax import lax
from jax.experimental import pallas as pl
from jax.experimental.pallas import tpu as pltpu


# ---------------------------------------------------------------------------
# In-kernel helpers: 1-element shifts, each computed once per (image, channel)
# and reused by every tap that needs it (and by nothing else afterwards).
# ---------------------------------------------------------------------------
def _shift_right(v):
    # v[:, w] -> v[:, w-1]; zero fill at w == 0 (the left conv-padding column).
    return jnp.concatenate([jnp.zeros_like(v[:, :1]), v[:, :-1]], axis=1)


def _shift_down(v, top_row):
    # v[h, :] -> v[h-1, :]; row 0 comes from the halo (row above the tile,
    # which is the top conv-padding row for the first tile).
    return jnp.concatenate([top_row[None, :], v[:-1, :]], axis=0)


def _downsampler_kernel(ph_ref, halo_ref, w_ref, csh_ref, psc_ref, psh_ref,
                        out_ref):
    # ph_ref  : (BN, 4*Cin, TH, Wo) VMEM — stride-2 phases of x (no padding):
    #           channel (2*rp + cp)*Cin + ci  ==  x[ci, 2*ho + rp, 2*wo + cp]
    # halo_ref: (BN, 1, 2*Cin, Wo)  VMEM — odd-row phase of the row just above
    #           this tile (x row 2*row0-1), A-cols then B-cols; zeros for tile 0
    # w_ref   : (Cconv*Cin*9,) SMEM — conv weights (BN scale folded), [co][ci][ky][kx]
    # csh_ref : (Cconv,)       SMEM — conv-channel shift (conv bias + BN folded)
    # psc_ref : (Cin,)         SMEM — pool-channel BN scale
    # psh_ref : (Cin,)         SMEM — pool-channel BN shift
    # out_ref : (BN, Cout, TH, Wo) VMEM — NCHW output tile (per-channel stores)
    BN = ph_ref.shape[0]
    Cin = ph_ref.shape[1] // 4
    Cconv = csh_ref.shape[0]

    for b in range(BN):
        hal = halo_ref[b, 0]                       # (2*Cin, Wo)
        accs = [None] * Cconv

        for ci in range(Cin):
            # The four stride-2 phase planes of this input channel, (TH, Wo) each.
            peA = ph_ref[b, 0 * Cin + ci]          # x[2ho,   2wo]
            peB = ph_ref[b, 1 * Cin + ci]          # x[2ho,   2wo+1]
            poA = ph_ref[b, 2 * Cin + ci]          # x[2ho+1, 2wo]
            poB = ph_ref[b, 3 * Cin + ci]          # x[2ho+1, 2wo+1]

            # Shifted planes, built once and reused by all taps of this channel.
            peB_l = _shift_right(peB)              # x[2ho,   2wo-1]
            poB_l = _shift_right(poB)              # x[2ho+1, 2wo-1]
            poA_u = _shift_down(poA, hal[ci])          # x[2ho-1, 2wo]
            poB_u = _shift_down(poB, hal[Cin + ci])    # x[2ho-1, 2wo+1]
            poB_ul = _shift_right(poB_u)           # x[2ho-1, 2wo-1]

            # taps[ky*3 + kx] = x[2ho + ky - 1, 2wo + kx - 1]  (conv padding=1)
            taps = (poB_ul, poA_u, poB_u,          # ky = 0
                    peB_l,  peA,   peB,            # ky = 1
                    poB_l,  poA,   poB)            # ky = 2

            # Taps-outer / output-channel-inner: only Cconv accumulators plus
            # the current channel's taps stay live.
            for k in range(9):
                t = taps[k]
                for co in range(Cconv):
                    w_s = w_ref[(co * Cin + ci) * 9 + k]   # SMEM scalar
                    term = w_s * t
                    accs[co] = term if accs[co] is None else accs[co] + term

            # Max-pool channel ci: 2x2/stride-2 max == max of the four phases.
            pool = jnp.maximum(jnp.maximum(peA, peB), jnp.maximum(poA, poB))
            out_ref[b, Cconv + ci, :, :] = jnp.maximum(
                pool * psc_ref[ci] + psh_ref[ci], 0.0).astype(out_ref.dtype)

        # Conv channels: BN shift + ReLU, direct per-channel lane-dense stores.
        for co in range(Cconv):
            out_ref[b, co, :, :] = jnp.maximum(
                accs[co] + csh_ref[co], 0.0).astype(out_ref.dtype)


# ---------------------------------------------------------------------------
# Wrapper-side tiling helpers.
# ---------------------------------------------------------------------------
def _vmem_capacity_bytes():
    try:
        info = pltpu.get_tpu_info()
        cap = getattr(info, "vmem_capacity_bytes", None)
        if cap:
            return int(cap)
    except Exception:
        pass
    return 128 * (1 << 20)          # v5e/v6e default; v7x reports 64 MiB


def _pick_tile_rows(Ho, Wo, Cin, Cout):
    """Largest output-row tile that keeps the double-buffered working set small."""
    budget = _vmem_capacity_bytes() // 10      # ~12.8 MiB on v5e/v6e, ~6.4 MiB on v7x
    per_row = (4 * Cin + Cout) * Wo * 4 * 2    # f32, double-buffered, per output row
    target = budget // max(per_row, 1)
    if target >= Ho or Ho <= 8:
        return Ho
    cands = [d for d in range(8, int(target) + 1, 8) if Ho % d == 0]
    return max(cands) if cands else Ho


def downsampler_block(x_nchw, w_oihw, bias, gamma, beta, running_mean,
                      running_var, eps=1e-3):
    """Pallas implementation of DownsamplerBlock.forward (NCHW in / NCHW out)."""
    N, Cin, H, W = x_nchw.shape
    Cconv = int(w_oihw.shape[0])               # = out_channel - in_channel
    Cout = Cconv + Cin
    assert H % 2 == 0 and W % 2 == 0, "DownsamplerBlock requires even H and W"
    Ho, Wo = H // 2, W // 2
    f32 = jnp.float32

    # Fold eval-mode BatchNorm into per-channel scale/shift; fold the conv-channel
    # scale into the conv weights and the conv bias into the shift (tiny arrays).
    scale = (gamma / jnp.sqrt(running_var + eps)).astype(f32)
    shift = (beta - running_mean * scale).astype(f32)
    w_folded = (w_oihw.astype(f32) * scale[:Cconv, None, None, None]).reshape(-1)
    conv_shift = bias.astype(f32) * scale[:Cconv] + shift[:Cconv]
    pool_scale = scale[Cconv:]
    pool_shift = shift[Cconv:]

    # ONE fused space-to-depth of x (no padding): (N, rp, cp, Cin, Ho, Wo).
    # Lane width is exactly Wo; total bytes == input bytes.
    phases6 = jnp.transpose(
        x_nchw.astype(f32).reshape(N, Cin, Ho, 2, Wo, 2), (0, 3, 5, 1, 2, 4))
    phases = phases6.reshape(N, 4 * Cin, Ho, Wo)

    # Row tiling over Ho (VMEM-capacity aware -> smaller tiles on v7x).
    TH = _pick_tile_rows(Ho, Wo, Cin, Cout)
    T = Ho // TH

    # Halo: odd-row phases of the x row directly above each tile (x[2*t*TH - 1]),
    # zeros for the first tile (that row is the conv zero padding).
    if T > 1:
        sel = phases6[:, 1, :, :, TH - 1:Ho - 1:TH, :]     # (N, 2, Cin, T-1, Wo)
        sel = jnp.moveaxis(sel, 3, 1)                       # (N, T-1, 2, Cin, Wo)
        halo = jnp.concatenate(
            [jnp.zeros((N, 1, 2, Cin, Wo), f32), sel], axis=1)
    else:
        halo = jnp.zeros((N, 1, 2, Cin, Wo), f32)
    halo = halo.reshape(N, T, 2 * Cin, Wo)

    # Fold the whole batch into one block when the problem is tiny (avoids the
    # ~0.35 us/step grid overhead dominating toy shapes); else grid over N.
    per_image = (4 * Cin + Cout) * Ho * Wo * 4
    BN = N if (N <= 8 and N * per_image <= (2 << 20)) else 1

    blk_bytes = BN * ((4 * Cin) * TH * Wo + Cout * TH * Wo + 2 * Cin * Wo) * 4
    vmem_limit = int(min(48 << 20, max(16 << 20, 5 * blk_bytes)))

    smem = pltpu.MemorySpace.SMEM
    out = pl.pallas_call(
        _downsampler_kernel,
        out_shape=jax.ShapeDtypeStruct((N, Cout, Ho, Wo), f32),
        grid=(N // BN, T),
        in_specs=[
            pl.BlockSpec((BN, 4 * Cin, TH, Wo), lambda nb, t: (nb, 0, t, 0)),
            pl.BlockSpec((BN, 1, 2 * Cin, Wo), lambda nb, t: (nb, t, 0, 0)),
            pl.BlockSpec((Cconv * Cin * 9,), lambda nb, t: (0,), memory_space=smem),
            pl.BlockSpec((Cconv,), lambda nb, t: (0,), memory_space=smem),
            pl.BlockSpec((Cin,), lambda nb, t: (0,), memory_space=smem),
            pl.BlockSpec((Cin,), lambda nb, t: (0,), memory_space=smem),
        ],
        out_specs=pl.BlockSpec((BN, Cout, TH, Wo), lambda nb, t: (nb, 0, t, 0)),
        compiler_params=pltpu.CompilerParams(
            dimension_semantics=("parallel", "parallel"),
            vmem_limit_bytes=vmem_limit),
    )(phases, halo, w_folded, conv_shift, pool_scale, pool_shift)

    return out                                  # already NCHW — no output transpose


def _reference(x, w, b, gamma, beta, mean, var, eps=1e-3):
    """Pure-JAX reference matching the PyTorch forward (eval-mode BN)."""
    conv = lax.conv_general_dilated(
        x, w, window_strides=(2, 2), padding=((1, 1), (1, 1)),
        dimension_numbers=("NCHW", "OIHW", "NCHW"))
    conv = conv + b.reshape(1, -1, 1, 1)
    pool = lax.reduce_window(x, -jnp.inf, lax.max, (1, 1, 2, 2),
                             (1, 1, 2, 2), "VALID")
    z = jnp.concatenate([conv, pool], axis=1)
    scale = gamma / jnp.sqrt(var + eps)
    shift = beta - mean * scale
    z = z * scale.reshape(1, -1, 1, 1) + shift.reshape(1, -1, 1, 1)
    return jnp.maximum(z, 0.0)


if __name__ == "__main__":
    # Small shapes consistent with the module: in_channel=4, out_channel=8.
    N, Cin, H, W = 2, 4, 16, 16
    Cout = 8
    Cconv = Cout - Cin
    eps = 1e-3                        # nn.BatchNorm2d(out_channel, eps=0.001)

    key = jax.random.PRNGKey(0)
    kx, kw, kb, kg, kbt, km, kv = jax.random.split(key, 7)

    x = jax.random.normal(kx, (N, Cin, H, W), dtype=jnp.float32)
    w = jax.random.normal(kw, (Cconv, Cin, 3, 3), dtype=jnp.float32) * 0.1
    bias = jax.random.normal(kb, (Cconv,), dtype=jnp.float32) * 0.1
    gamma = jax.random.uniform(kg, (Cout,), minval=0.5, maxval=1.5,
                               dtype=jnp.float32)
    beta = jax.random.normal(kbt, (Cout,), dtype=jnp.float32) * 0.1
    running_mean = jax.random.normal(km, (Cout,), dtype=jnp.float32) * 0.1
    running_var = jax.random.uniform(kv, (Cout,), minval=0.5, maxval=1.5,
                                     dtype=jnp.float32)

    fwd = jax.jit(downsampler_block, static_argnames=("eps",))
    out = fwd(x, w, bias, gamma, beta, running_mean, running_var, eps=eps)
    out = jax.block_until_ready(out)

    ref = _reference(x, w, bias, gamma, beta, running_mean, running_var, eps=eps)
    assert out.shape == (N, Cout, H // 2, W // 2), out.shape
    assert jnp.allclose(out, ref, rtol=1e-4, atol=1e-4), "mismatch vs reference"

    print("KERNEL_OK")
</pallas_src>

<mosaic_0001>
module attributes {stable_mosaic.version = 11 : i64} {
  func.func @_downsampler_kernel(%arg0: i32, %arg1: i32, %arg2: memref<2x16x8x8xf32, #tpu.memory_space<vmem>>, %arg3: memref<2x1x8x8xf32, #tpu.memory_space<vmem>>, %arg4: memref<144xf32, #tpu.memory_space<smem>>, %arg5: memref<4xf32, #tpu.memory_space<smem>>, %arg6: memref<4xf32, #tpu.memory_space<smem>>, %arg7: memref<4xf32, #tpu.memory_space<smem>>, %arg8: memref<2x8x8x8xf32, #tpu.memory_space<vmem>>) attributes {dimension_semantics = [#tpu.dimension_semantics<parallel>, #tpu.dimension_semantics<parallel>], iteration_bounds = array<i64: 1, 1>, scalar_prefetch = 0 : i64, scratch_operands = 0 : i64, tpu.core_type = #tpu.core_type<tc>, window_params = [{transform_indices = @transform_0, window_bounds = array<i64: 2, 16, 8, 8>}, {transform_indices = @transform_1, window_bounds = array<i64: 2, 1, 8, 8>}, {transform_indices = @transform_2, window_bounds = array<i64: 144>}, {transform_indices = @transform_3, window_bounds = array<i64: 4>}, {transform_indices = @transform_4, window_bounds = array<i64: 4>}, {transform_indices = @transform_5, window_bounds = array<i64: 4>}, {transform_indices = @transform_6, window_bounds = array<i64: 2, 8, 8, 8>}]} {
    %c0 = arith.constant 0 : index
    %c0_0 = arith.constant 0 : index
    %c0_1 = arith.constant 0 : index
    %c0_2 = arith.constant 0 : index
    %0 = vector.load %arg3[%c0, %c0_0, %c0_1, %c0_2] : memref<2x1x8x8xf32, #tpu.memory_space<vmem>>, vector<1x1x8x8xf32>
    %1 = vector.shape_cast %0 : vector<1x1x8x8xf32> to vector<8x8xf32>
    %c0_3 = arith.constant 0 : index
    %c0_4 = arith.constant 0 : index
    %c0_5 = arith.constant 0 : index
    %c0_6 = arith.constant 0 : index
    %2 = vector.load %arg2[%c0_3, %c0_4, %c0_5, %c0_6] : memref<2x16x8x8xf32, #tpu.memory_space<vmem>>, vector<1x1x8x8xf32>
    %3 = vector.shape_cast %2 : vector<1x1x8x8xf32> to vector<8x8xf32>
    %c0_7 = arith.constant 0 : index
    %c4 = arith.constant 4 : index
    %c0_8 = arith.constant 0 : index
    %c0_9 = arith.constant 0 : index
    %4 = vector.load %arg2[%c0_7, %c4, %c0_8, %c0_9] : memref<2x16x8x8xf32, #tpu.memory_space<vmem>>, vector<1x1x8x8xf32>
    %5 = vector.shape_cast %4 : vector<1x1x8x8xf32> to vector<8x8xf32>
    %c0_10 = arith.constant 0 : index
    %c8 = arith.constant 8 : index
    %c0_11 = arith.constant 0 : index
    %c0_12 = arith.constant 0 : index
    %6 = vector.load %arg2[%c0_10, %c8, %c0_11, %c0_12] : memref<2x16x8x8xf32, #tpu.memory_space<vmem>>, vector<1x1x8x8xf32>
    %7 = vector.shape_cast %6 : vector<1x1x8x8xf32> to vector<8x8xf32>
    %c0_13 = arith.constant 0 : index
    %c12 = arith.constant 12 : index
    %c0_14 = arith.constant 0 : index
    %c0_15 = arith.constant 0 : index
    %8 = vector.load %arg2[%c0_13, %c12, %c0_14, %c0_15] : memref<2x16x8x8xf32, #tpu.memory_space<vmem>>, vector<1x1x8x8xf32>
    %9 = vector.shape_cast %8 : vector<1x1x8x8xf32> to vector<8x8xf32>
    %cst = arith.constant 0.000000e+00 : f32
    %10 = vector.broadcast %cst : f32 to vector<8x1xf32>
    %11 = vector.extract_strided_slice %5 {offsets = [0, 0], sizes = [8, 7], strides = [1, 1]} : vector<8x8xf32> to vector<8x7xf32>
    %12 = tpu.concatenate %10, %11 in 1 : vector<8x1xf32>, vector<8x7xf32> -> vector<8x8xf32>
    %cst_16 = arith.constant 0.000000e+00 : f32
    %13 = vector.broadcast %cst_16 : f32 to vector<8x1xf32>
    %14 = vector.extract_strided_slice %9 {offsets = [0, 0], sizes = [8, 7], strides = [1, 1]} : vector<8x8xf32> to vector<8x7xf32>
    %15 = tpu.concatenate %13, %14 in 1 : vector<8x1xf32>, vector<8x7xf32> -> vector<8x8xf32>
    %16 = vector.extract_strided_slice %1 {offsets = [0, 0], sizes = [1, 8], strides = [1, 1]} : vector<8x8xf32> to vector<1x8xf32>
    %17 = vector.shape_cast %16 : vector<1x8xf32> to vector<8xf32>
    %18 = vector.shape_cast %17 : vector<8xf32> to vector<1x8xf32>
    %19 = vector.extract_strided_slice %7 {offsets = [0, 0], sizes = [7, 8], strides = [1, 1]} : vector<8x8xf32> to vector<7x8xf32>
    %20 = tpu.concatenate %18, %19 in 0 : vector<1x8xf32>, vector<7x8xf32> -> vector<8x8xf32>
    %21 = vector.extract_strided_slice %1 {offsets = [4, 0], sizes = [1, 8], strides = [1, 1]} : vector<8x8xf32> to vector<1x8xf32>
    %22 = vector.shape_cast %21 : vector<1x8xf32> to vector<8xf32>
    %23 = vector.shape_cast %22 : vector<8xf32> to vector<1x8xf32>
    %24 = vector.extract_strided_slice %9 {offsets = [0, 0], sizes = [7, 8], strides = [1, 1]} : vector<8x8xf32> to vector<7x8xf32>
    %25 = tpu.concatenate %23, %24 in 0 : vector<1x8xf32>, vector<7x8xf32> -> vector<8x8xf32>
    %cst_17 = arith.constant 0.000000e+00 : f32
    %26 = vector.broadcast %cst_17 : f32 to vector<8x1xf32>
    %27 = vector.extract_strided_slice %25 {offsets = [0, 0], sizes = [8, 7], strides = [1, 1]} : vector<8x8xf32> to vector<8x7xf32>
    %28 = tpu.concatenate %26, %27 in 1 : vector<8x1xf32>, vector<8x7xf32> -> vector<8x8xf32>
    %c0_18 = arith.constant 0 : index
    %29 = memref.load %arg4[%c0_18] : memref<144xf32, #tpu.memory_space<smem>>
    %30 = vector.broadcast %29 : f32 to vector<8x8xf32>
    %31 = arith.mulf %30, %28 : vector<8x8xf32>
    %c36 = arith.constant 36 : index
    %32 = memref.load %arg4[%c36] : memref<144xf32, #tpu.memory_space<smem>>
    %33 = vector.broadcast %32 : f32 to vector<8x8xf32>
    %34 = arith.mulf %33, %28 : vector<8x8xf32>
    %c72 = arith.constant 72 : index
    %35 = memref.load %arg4[%c72] : memref<144xf32, #tpu.memory_space<smem>>
    %36 = vector.broadcast %35 : f32 to vector<8x8xf32>
    %37 = arith.mulf %36, %28 : vector<8x8xf32>
    %c108 = arith.constant 108 : index
    %38 = memref.load %arg4[%c108] : memref<144xf32, #tpu.memory_space<smem>>
    %39 = vector.broadcast %38 : f32 to vector<8x8xf32>
    %40 = arith.mulf %39, %28 : vector<8x8xf32>
    %c1 = arith.constant 1 : index
    %41 = memref.load %arg4[%c1] : memref<144xf32, #tpu.memory_space<smem>>
    %42 = vector.broadcast %41 : f32 to vector<8x8xf32>
    %43 = arith.mulf %42, %20 : vector<8x8xf32>
    %44 = arith.addf %31, %43 : vector<8x8xf32>
    %c37 = arith.constant 37 : index
    %45 = memref.load %arg4[%c37] : memref<144xf32, #tpu.memory_space<smem>>
    %46 = vector.broadcast %45 : f32 to vector<8x8xf32>
    %47 = arith.mulf %46, %20 : vector<8x8xf32>
    %48 = arith.addf %34, %47 : vector<8x8xf32>
    %c73 = arith.constant 73 : index
    %49 = memref.load %arg4[%c73] : memref<144xf32, #tpu.memory_space<smem>>
    %50 = vector.broadcast %49 : f32 to vector<8x8xf32>
    %51 = arith.mulf %50, %20 : vector<8x8xf32>
    %52 = arith.addf %37, %51 : vector<8x8xf32>
    %c109 = arith.constant 109 : index
    %53 = memref.load %arg4[%c109] : memref<144xf32, #tpu.memory_space<smem>>
    %54 = vector.broadcast %53 : f32 to vector<8x8xf32>
    %55 = arith.mulf %54, %20 : vector<8x8xf32>
    %56 = arith.addf %40, %55 : vector<8x8xf32>
    %c2 = arith.constant 2 : index
    %57 = memref.load %arg4[%c2] : memref<144xf32, #tpu.memory_space<smem>>
    %58 = vector.broadcast %57 : f32 to vector<8x8xf32>
    %59 = arith.mulf %58, %25 : vector<8x8xf32>
    %60 = arith.addf %44, %59 : vector<8x8xf32>
    %c38 = arith.constant 38 : index
    %61 = memref.load %arg4[%c38] : memref<144xf32, #tpu.memory_space<smem>>
    %62 = vector.broadcast %61 : f32 to vector<8x8xf32>
    %63 = arith.mulf %62, %25 : vector<8x8xf32>
    %64 = arith.addf %48, %63 : vector<8x8xf32>
    %c74 = arith.constant 74 : index
    %65 = memref.load %arg4[%c74] : memref<144xf32, #tpu.memory_space<smem>>
    %66 = vector.broadcast %65 : f32 to vector<8x8xf32>
    %67 = arith.mulf %66, %25 : vector<8x8xf32>
    %68 = arith.addf %52, %67 : vector<8x8xf32>
    %c110 = arith.constant 110 : index
    %69 = memref.load %arg4[%c110] : memref<144xf32, #tpu.memory_space<smem>>
    %70 = vector.broadcast %69 : f32 to vector<8x8xf32>
    %71 = arith.mulf %70, %25 : vector<8x8xf32>
    %72 = arith.addf %56, %71 : vector<8x8xf32>
    %c3 = arith.constant 3 : index
    %73 = memref.load %arg4[%c3] : memref<144xf32, #tpu.memory_space<smem>>
    %74 = vector.broadcast %73 : f32 to vector<8x8xf32>
    %75 = arith.mulf %74, %12 : vector<8x8xf32>
    %76 = arith.addf %60, %75 : vector<8x8xf32>
    %c39 = arith.constant 39 : index
    %77 = memref.load %arg4[%c39] : memref<144xf32, #tpu.memory_space<smem>>
    %78 = vector.broadcast %77 : f32 to vector<8x8xf32>
    %79 = arith.mulf %78, %12 : vector<8x8xf32>
    %80 = arith.addf %64, %79 : vector<8x8xf32>
    %c75 = arith.constant 75 : index
    %81 = memref.load %arg4[%c75] : memref<144xf32, #tpu.memory_space<smem>>
    %82 = vector.broadcast %81 : f32 to vector<8x8xf32>
    %83 = arith.mulf %82, %12 : vector<8x8xf32>
    %84 = arith.addf %68, %83 : vector<8x8xf32>
    %c111 = arith.constant 111 : index
    %85 = memref.load %arg4[%c111] : memref<144xf32, #tpu.memory_space<smem>>
    %86 = vector.broadcast %85 : f32 to vector<8x8xf32>
    %87 = arith.mulf %86, %12 : vector<8x8xf32>
    %88 = arith.addf %72, %87 : vector<8x8xf32>
    %c4_19 = arith.constant 4 : index
    %89 = memref.load %arg4[%c4_19] : memref<144xf32, #tpu.memory_space<smem>>
    %90 = vector.broadcast %89 : f32 to vector<8x8xf32>
    %91 = arith.mulf %90, %3 : vector<8x8xf32>
    %92 = arith.addf %76, %91 : vector<8x8xf32>
    %c40 = arith.constant 40 : index
    %93 = memref.load %arg4[%c40] : memref<144xf32, #tpu.memory_space<smem>>
    %94 = vector.broadcast %93 : f32 to vector<8x8xf32>
    %95 = arith.mulf %94, %3 : vector<8x8xf32>
    %96 = arith.addf %80, %95 : vector<8x8xf32>
    %c76 = arith.constant 76 : index
    %97 = memref.load %arg4[%c76] : memref<144xf32, #tpu.memory_space<smem>>
    %98 = vector.broadcast %97 : f32 to vector<8x8xf32>
    %99 = arith.mulf %98, %3 : vector<8x8xf32>
    %100 = arith.addf %84, %99 : vector<8x8xf32>
    %c112 = arith.constant 112 : index
    %101 = memref.load %arg4[%c112] : memref<144xf32, #tpu.memory_space<smem>>
    %102 = vector.broadcast %101 : f32 to vector<8x8xf32>
    %103 = arith.mulf %102, %3 : vector<8x8xf32>
    %104 = arith.addf %88, %103 : vector<8x8xf32>
    %c5 = arith.constant 5 : index
    %105 = memref.load %arg4[%c5] : memref<144xf32, #tpu.memory_space<smem>>
    %106 = vector.broadcast %105 : f32 to vector<8x8xf32>
    %107 = arith.mulf %106, %5 : vector<8x8xf32>
    %108 = arith.addf %92, %107 : vector<8x8xf32>
    %c41 = arith.constant 41 : index
    %109 = memref.load %arg4[%c41] : memref<144xf32, #tpu.memory_space<smem>>
    %110 = vector.broadcast %109 : f32 to vector<8x8xf32>
    %111 = arith.mulf %110, %5 : vector<8x8xf32>
    %112 = arith.addf %96, %111 : vector<8x8xf32>
    %c77 = arith.constant 77 : index
    %113 = memref.load %arg4[%c77] : memref<144xf32, #tpu.memory_space<smem>>
    %114 = vector.broadcast %113 : f32 to vector<8x8xf32>
    %115 = arith.mulf %114, %5 : vector<8x8xf32>
    %116 = arith.addf %100, %115 : vector<8x8xf32>
    %c113 = arith.constant 113 : index
    %117 = memref.load %arg4[%c113] : memref<144xf32, #tpu.memory_space<smem>>
    %118 = vector.broadcast %117 : f32 to vector<8x8xf32>
    %119 = arith.mulf %118, %5 : vector<8x8xf32>
    %120 = arith.addf %104, %119 : vector<8x8xf32>
    %c6 = arith.constant 6 : index
    %121 = memref.load %arg4[%c6] : memref<144xf32, #tpu.memory_space<smem>>
    %122 = vector.broadcast %121 : f32 to vector<8x8xf32>
    %123 = arith.mulf %122, %15 : vector<8x8xf32>
    %124 = arith.addf %108, %123 : vector<8x8xf32>
    %c42 = arith.constant 42 : index
    %125 = memref.load %arg4[%c42] : memref<144xf32, #tpu.memory_space<smem>>
    %126 = vector.broadcast %125 : f32 to vector<8x8xf32>
    %127 = arith.mulf %126, %15 : vector<8x8xf32>
    %128 = arith.addf %112, %127 : vector<8x8xf32>
    %c78 = arith.constant 78 : index
    %129 = memref.load %arg4[%c78] : memref<144xf32, #tpu.memory_space<smem>>
    %130 = vector.broadcast %129 : f32 to vector<8x8xf32>
    %131 = arith.mulf %130, %15 : vector<8x8xf32>
    %132 = arith.addf %116, %131 : vector<8x8xf32>
    %c114 = arith.constant 114 : index
    %133 = memref.load %arg4[%c114] : memref<144xf32, #tpu.memory_space<smem>>
    %134 = vector.broadcast %133 : f32 to vector<8x8xf32>
    %135 = arith.mulf %134, %15 : vector<8x8xf32>
    %136 = arith.addf %120, %135 : vector<8x8xf32>
    %c7 = arith.constant 7 : index
    %137 = memref.load %arg4[%c7] : memref<144xf32, #tpu.memory_space<smem>>
    %138 = vector.broadcast %137 : f32 to vector<8x8xf32>
    %139 = arith.mulf %138, %7 : vector<8x8xf32>
    %140 = arith.addf %124, %139 : vector<8x8xf32>
    %c43 = arith.constant 43 : index
    %141 = memref.load %arg4[%c43] : memref<144xf32, #tpu.memory_space<smem>>
    %142 = vector.broadcast %141 : f32 to vector<8x8xf32>
    %143 = arith.mulf %142, %7 : vector<8x8xf32>
    %144 = arith.addf %128, %143 : vector<8x8xf32>
    %c79 = arith.constant 79 : index
    %145 = memref.load %arg4[%c79] : memref<144xf32, #tpu.memory_space<smem>>
    %146 = vector.broadcast %145 : f32 to vector<8x8xf32>
    %147 = arith.mulf %146, %7 : vector<8x8xf32>
    %148 = arith.addf %132, %147 : vector<8x8xf32>
    %c115 = arith.constant 115 : index
    %149 = memref.load %arg4[%c115] : memref<144xf32, #tpu.memory_space<smem>>
    %150 = vector.broadcast %149 : f32 to vector<8x8xf32>
    %151 = arith.mulf %150, %7 : vector<8x8xf32>
    %152 = arith.addf %136, %151 : vector<8x8xf32>
    %c8_20 = arith.constant 8 : index
    %153 = memref.load %arg4[%c8_20] : memref<144xf32, #tpu.memory_space<smem>>
    %154 = vector.broadcast %153 : f32 to vector<8x8xf32>
    %155 = arith.mulf %154, %9 : vector<8x8xf32>
    %156 = arith.addf %140, %155 : vector<8x8xf32>
    %c44 = arith.constant 44 : index
    %157 = memref.load %arg4[%c44] : memref<144xf32, #tpu.memory_space<smem>>
    %158 = vector.broadcast %157 : f32 to vector<8x8xf32>
    %159 = arith.mulf %158, %9 : vector<8x8xf32>
    %160 = arith.addf %144, %159 : vector<8x8xf32>
    %c80 = arith.constant 80 : index
    %161 = memref.load %arg4[%c80] : memref<144xf32, #tpu.memory_space<smem>>
    %162 = vector.broadcast %161 : f32 to vector<8x8xf32>
    %163 = arith.mulf %162, %9 : vector<8x8xf32>
    %164 = arith.addf %148, %163 : vector<8x8xf32>
    %c116 = arith.constant 116 : index
    %165 = memref.load %arg4[%c116] : memref<144xf32, #tpu.memory_space<smem>>
    %166 = vector.broadcast %165 : f32 to vector<8x8xf32>
    %167 = arith.mulf %166, %9 : vector<8x8xf32>
    %168 = arith.addf %152, %167 : vector<8x8xf32>
    %169 = arith.maximumf %3, %5 : vector<8x8xf32>
    %170 = arith.maximumf %7, %9 : vector<8x8xf32>
    %171 = arith.maximumf %169, %170 : vector<8x8xf32>
    %c0_21 = arith.constant 0 : index
    %172 = memref.load %arg6[%c0_21] : memref<4xf32, #tpu.memory_space<smem>>
    %173 = vector.broadcast %172 : f32 to vector<8x8xf32>
    %174 = arith.mulf %171, %173 : vector<8x8xf32>
    %c0_22 = arith.constant 0 : index
    %175 = memref.load %arg7[%c0_22] : memref<4xf32, #tpu.memory_space<smem>>
    %176 = vector.broadcast %175 : f32 to vector<8x8xf32>
    %177 = arith.addf %174, %176 : vector<8x8xf32>
    %cst_23 = arith.constant 0.000000e+00 : f32
    %178 = vector.broadcast %cst_23 : f32 to vector<8x8xf32>
    %179 = arith.maximumf %177, %178 : vector<8x8xf32>
    %c0_24 = arith.constant 0 : index
    %c4_25 = arith.constant 4 : index
    %c0_26 = arith.constant 0 : index
    %c0_27 = arith.constant 0 : index
    %180 = vector.load %arg8[%c0_24, %c4_25, %c0_26, %c0_27] : memref<2x8x8x8xf32, #tpu.memory_space<vmem>>, vector<1x1x8x8xf32>
    %181 = vector.shape_cast %180 : vector<1x1x8x8xf32> to vector<8x8xf32>
    %182 = vector.shape_cast %179 : vector<8x8xf32> to vector<1x1x8x8xf32>
    tpu.vector_store %arg8[%c0_24, %c4_25, %c0_26, %c0_27], %182 {strides = array<i32>} : memref<2x8x8x8xf32, #tpu.memory_space<vmem>>, vector<1x1x8x8xf32>,
    %c0_28 = arith.constant 0 : index
    %c1_29 = arith.constant 1 : index
    %c0_30 = arith.constant 0 : index
    %c0_31 = arith.constant 0 : index
    %183 = vector.load %arg2[%c0_28, %c1_29, %c0_30, %c0_31] : memref<2x16x8x8xf32, #tpu.memory_space<vmem>>, vector<1x1x8x8xf32>
    %184 = vector.shape_cast %183 : vector<1x1x8x8xf32> to vector<8x8xf32>
    %c0_32 = arith.constant 0 : index
    %c5_33 = arith.constant 5 : index
    %c0_34 = arith.constant 0 : index
    %c0_35 = arith.constant 0 : index
    %185 = vector.load %arg2[%c0_32, %c5_33, %c0_34, %c0_35] : memref<2x16x8x8xf32, #tpu.memory_space<vmem>>, vector<1x1x8x8xf32>
    %186 = vector.shape_cast %185 : vector<1x1x8x8xf32> to vector<8x8xf32>
    %c0_36 = arith.constant 0 : index
    %c9 = arith.constant 9 : index
    %c0_37 = arith.constant 0 : index
    %c0_38 = arith.constant 0 : index
    %187 = vector.load %arg2[%c0_36, %c9, %c0_37, %c0_38] : memref<2x16x8x8xf32, #tpu.memory_space<vmem>>, vector<1x1x8x8xf32>
    %188 = vector.shape_cast %187 : vector<1x1x8x8xf32> to vector<8x8xf32>
    %c0_39 = arith.constant 0 : index
    %c13 = arith.constant 13 : index
    %c0_40 = arith.constant 0 : index
    %c0_41 = arith.constant 0 : index
    %189 = vector.load %arg2[%c0_39, %c13, %c0_40, %c0_41] : memref<2x16x8x8xf32, #tpu.memory_space<vmem>>, vector<1x1x8x8xf32>
    %190 = vector.shape_cast %189 : vector<1x1x8x8xf32> to vector<8x8xf32>
    %cst_42 = arith.constant 0.000000e+00 : f32
    %191 = vector.broadcast %cst_42 : f32 to vector<8x1xf32>
    %192 = vector.extract_strided_slice %186 {offsets = [0, 0], sizes = [8, 7], strides = [1, 1]} : vector<8x8xf32> to vector<8x7xf32>
    %193 = tpu.concatenate %191, %192 in 1 : vector<8x1xf32>, vector<8x7xf32> -> vector<8x8xf32>
    %cst_43 = arith.constant 0.000000e+00 : f32
    %194 = vector.broadcast %cst_43 : f32 to vector<8x1xf32>
    %195 = vector.extract_strided_slice %190 {offsets = [0, 0], sizes = [8, 7], strides = [1, 1]} : vector<8x8xf32> to vector<8x7xf32>
    %196 = tpu.concatenate %194, %195 in 1 : vector<8x1xf32>, vector<8x7xf32> -> vector<8x8xf32>
    %197 = vector.extract_strided_slice %1 {offsets = [1, 0], sizes = [1, 8], strides = [1, 1]} : vector<8x8xf32> to vector<1x8xf32>
    %198 = vector.shape_cast %197 : vector<1x8xf32> to vector<8xf32>
    %199 = vector.shape_cast %198 : vector<8xf32> to vector<1x8xf32>
    %200 = vector.extract_strided_slice %188 {offsets = [0, 0], sizes = [7, 8], strides = [1, 1]} : vector<8x8xf32> to vector<7x8xf32>
    %201 = tpu.concatenate %199, %200 in 0 : vector<1x8xf32>, vector<7x8xf32> -> vector<8x8xf32>
    %202 = vector.extract_strided_slice %1 {offsets = [5, 0], sizes = [1, 8], strides = [1, 1]} : vector<8x8xf32> to vector<1x8xf32>
    %203 = vector.shape_cast %202 : vector<1x8xf32> to vector<8xf32>
    %204 = vector.shape_cast %203 : vector<8xf32> to vector<1x8xf32>
    %205 = vector.extract_strided_slice %190 {offsets = [0, 0], sizes = [7, 8], strides = [1, 1]} : vector<8x8xf32> to vector<7x8xf32>
    %206 = tpu.concatenate %204, %205 in 0 : vector<1x8xf32>, vector<7x8xf32> -> vector<8x8xf32>
    %cst_44 = arith.constant 0.000000e+00 : f32
    %207 = vector.broadcast %cst_44 : f32 to vector<8x1xf32>
    %208 = vector.extract_strided_slice %206 {offsets = [0, 0], sizes = [8, 7], strides = [1, 1]} : vector<8x8xf32> to vector<8x7xf32>
    %209 = tpu.concatenate %207, %208 in 1 : vector<8x1xf32>, vector<8x7xf32> -> vector<8x8xf32>
    %c9_45 = arith.constant 9 : index
    %210 = memref.load %arg4[%c9_45] : memref<144xf32, #tpu.memory_space<smem>>
    %211 = vector.broadcast %210 : f32 to vector<8x8xf32>
    %212 = arith.mulf %211, %209 : vector<8x8xf32>
    %213 = arith.addf %156, %212 : vector<8x8xf32>
    %c45 = arith.constant 45 : index
    %214 = memref.load %arg4[%c45] : memref<144xf32, #tpu.memory_space<smem>>
    %215 = vector.broadcast %214 : f32 to vector<8x8xf32>
    %216 = arith.mulf %215, %209 : vector<8x8xf32>
    %217 = arith.addf %160, %216 : vector<8x8xf32>
    %c81 = arith.constant 81 : index
    %218 = memref.load %arg4[%c81] : memref<144xf32, #tpu.memory_space<smem>>
    %219 = vector.broadcast %218 : f32 to vector<8x8xf32>
    %220 = arith.mulf %219, %209 : vector<8x8xf32>
    %221 = arith.addf %164, %220 : vector<8x8xf32>
    %c117 = arith.constant 117 : index
    %222 = memref.load %arg4[%c117] : memref<144xf32, #tpu.memory_space<smem>>
    %223 = vector.broadcast %222 : f32 to vector<8x8xf32>
    %224 = arith.mulf %223, %209 : vector<8x8xf32>
    %225 = arith.addf %168, %224 : vector<8x8xf32>
    %c10 = arith.constant 10 : index
    %226 = memref.load %arg4[%c10] : memref<144xf32, #tpu.memory_space<smem>>
    %227 = vector.broadcast %226 : f32 to vector<8x8xf32>
    %228 = arith.mulf %227, %201 : vector<8x8xf32>
    %229 = arith.addf %213, %228 : vector<8x8xf32>
    %c46 = arith.constant 46 : index
    %230 = memref.load %arg4[%c46] : memref<144xf32, #tpu.memory_space<smem>>
    %231 = vector.broadcast %230 : f32 to vector<8x8xf32>
    %232 = arith.mulf %231, %201 : vector<8x8xf32>
    %233 = arith.addf %217, %232 : vector<8x8xf32>
    %c82 = arith.constant 82 : index
    %234 = memref.load %arg4[%c82] : memref<144xf32, #tpu.memory_space<smem>>
    %235 = vector.broadcast %234 : f32 to vector<8x8xf32>
    %236 = arith.mulf %235, %201 : vector<8x8xf32>
    %237 = arith.addf %221, %236 : vector<8x8xf32>
    %c118 = arith.constant 118 : index
    %238 = memref.load %arg4[%c118] : memref<144xf32, #tpu.memory_space<smem>>
    %239 = vector.broadcast %238 : f32 to vector<8x8xf32>
    %240 = arith.mulf %239, %201 : vector<8x8xf32>
    %241 = arith.addf %225, %240 : vector<8x8xf32>
    %c11 = arith.constant 11 : index
    %242 = memref.load %arg4[%c11] : memref<144xf32, #tpu.memory_space<smem>>
    %243 = vector.broadcast %242 : f32 to vector<8x8xf32>
    %244 = arith.mulf %243, %206 : vector<8x8xf32>
    %245 = arith.addf %229, %244 : vector<8x8xf32>
    %c47 = arith.constant 47 : index
    %246 = memref.load %arg4[%c47] : memref<144xf32, #tpu.memory_space<smem>>
    %247 = vector.broadcast %246 : f32 to vector<8x8xf32>
    %248 = arith.mulf %247, %206 : vector<8x8xf32>
    %249 = arith.addf %233, %248 : vector<8x8xf32>
    %c83 = arith.constant 83 : index
    %250 = memref.load %arg4[%c83] : memref<144xf32, #tpu.memory_space<smem>>
    %251 = vector.broadcast %250 : f32 to vector<8x8xf32>
    %252 = arith.mulf %251, %206 : vector<8x8xf32>
    %253 = arith.addf %237, %252 : vector<8x8xf32>
    %c119 = arith.constant 119 : index
    %254 = memref.load %arg4[%c119] : memref<144xf32, #tpu.memory_space<smem>>
    %255 = vector.broadcast %254 : f32 to vector<8x8xf32>
    %256 = arith.mulf %255, %206 : vector<8x8xf32>
    %257 = arith.addf %241, %256 : vector<8x8xf32>
    %c12_46 = arith.constant 12 : index
    %258 = memref.load %arg4[%c12_46] : memref<144xf32, #tpu.memory_space<smem>>
    %259 = vector.broadcast %258 : f32 to vector<8x8xf32>
    %260 = arith.mulf %259, %193 : vector<8x8xf32>
    %261 = arith.addf %245, %260 : vector<8x8xf32>
    %c48 = arith.constant 48 : index
    %262 = memref.load %arg4[%c48] : memref<144xf32, #tpu.memory_space<smem>>
    %263 = vector.broadcast %262 : f32 to vector<8x8xf32>
    %264 = arith.mulf %263, %193 : vector<8x8xf32>
    %265 = arith.addf %249, %264 : vector<8x8xf32>
    %c84 = arith.constant 84 : index
    %266 = memref.load %arg4[%c84] : memref<144xf32, #tpu.memory_space<smem>>
    %267 = vector.broadcast %266 : f32 to vector<8x8xf32>
    %268 = arith.mulf %267, %193 : vector<8x8xf32>
    %269 = arith.addf %253, %268 : vector<8x8xf32>
    %c120 = arith.constant 120 : index
    %270 = memref.load %arg4[%c120] : memref<144xf32, #tpu.memory_space<smem>>
    %271 = vector.broadcast %270 : f32 to vector<8x8xf32>
    %272 = arith.mulf %271, %193 : vector<8x8xf32>
    %273 = arith.addf %257, %272 : vector<8x8xf32>
    %c13_47 = arith.constant 13 : index
    %274 = memref.load %arg4[%c13_47] : memref<144xf32, #tpu.memory_space<smem>>
    %275 = vector.broadcast %274 : f32 to vector<8x8xf32>
    %276 = arith.mulf %275, %184 : vector<8x8xf32>
    %277 = arith.addf %261, %276 : vector<8x8xf32>
    %c49 = arith.constant 49 : index
    %278 = memref.load %arg4[%c49] : memref<144xf32, #tpu.memory_space<smem>>
    %279 = vector.broadcast %278 : f32 to vector<8x8xf32>
    %280 = arith.mulf %279, %184 : vector<8x8xf32>
    %281 = arith.addf %265, %280 : vector<8x8xf32>
    %c85 = arith.constant 85 : index
    %282 = memref.load %arg4[%c85] : memref<144xf32, #tpu.memory_space<smem>>
    %283 = vector.broadcast %282 : f32 to vector<8x8xf32>
    %284 = arith.mulf %283, %184 : vector<8x8xf32>
    %285 = arith.addf %269, %284 : vector<8x8xf32>
    %c121 = arith.constant 121 : index
    %286 = memref.load %arg4[%c121] : memref<144xf32, #tpu.memory_space<smem>>
    %287 = vector.broadcast %286 : f32 to vector<8x8xf32>
    %288 = arith.mulf %287, %184 : vector<8x8xf32>
    %289 = arith.addf %273, %288 : vector<8x8xf32>
    %c14 = arith.constant 14 : index
    %290 = memref.load %arg4[%c14] : memref<144xf32, #tpu.memory_space<smem>>
    %291 = vector.broadcast %290 : f32 to vector<8x8xf32>
    %292 = arith.mulf %291, %186 : vector<8x8xf32>
    %293 = arith.addf %277, %292 : vector<8x8xf32>
    %c50 = arith.constant 50 : index
    %294 = memref.load %arg4[%c50] : memref<144xf32, #tpu.memory_space<smem>>
    %295 = vector.broadcast %294 : f32 to vector<8x8xf32>
    %296 = arith.mulf %295, %186 : vector<8x8xf32>
    %297 = arith.addf %281, %296 : vector<8x8xf32>
    %c86 = arith.constant 86 : index
    %298 = memref.load %arg4[%c86] : memref<144xf32, #tpu.memory_space<smem>>
    %299 = vector.broadcast %298 : f32 to vector<8x8xf32>
    %300 = arith.mulf %299, %186 : vector<8x8xf32>
    %301 = arith.addf %285, %300 : vector<8x8xf32>
    %c122 = arith.constant 122 : index
    %302 = memref.load %arg4[%c122] : memref<144xf32, #tpu.memory_space<smem>>
    %303 = vector.broadcast %302 : f32 to vector<8x8xf32>
    %304 = arith.mulf %303, %186 : vector<8x8xf32>
    %305 = arith.addf %289, %304 : vector<8x8xf32>
    %c15 = arith.constant 15 : index
    %306 = memref.load %arg4[%c15] : memref<144xf32, #tpu.memory_space<smem>>
    %307 = vector.broadcast %306 : f32 to vector<8x8xf32>
    %308 = arith.mulf %307, %196 : vector<8x8xf32>
    %309 = arith.addf %293, %308 : vector<8x8xf32>
    %c51 = arith.constant 51 : index
    %310 = memref.load %arg4[%c51] : memref<144xf32, #tpu.memory_space<smem>>
    %311 = vector.broadcast %310 : f32 to vector<8x8xf32>
    %312 = arith.mulf %311, %196 : vector<8x8xf32>
    %313 = arith.addf %297, %312 : vector<8x8xf32>
    %c87 = arith.constant 87 : index
    %314 = memref.load %arg4[%c87] : memref<144xf32, #tpu.memory_space<smem>>
    %315 = vector.broadcast %314 : f32 to vector<8x8xf32>
    %316 = arith.mulf %315, %196 : vector<8x8xf32>
    %317 = arith.addf %301, %316 : vector<8x8xf32>
    %c123 = arith.constant 123 : index
    %318 = memref.load %arg4[%c123] : memref<144xf32, #tpu.memory_space<smem>>
    %319 = vector.broadcast %318 : f32 to vector<8x8xf32>
    %320 = arith.mulf %319, %196 : vector<8x8xf32>
    %321 = arith.addf %305, %320 : vector<8x8xf32>
    %c16 = arith.constant 16 : index
    %322 = memref.load %arg4[%c16] : memref<144xf32, #tpu.memory_space<smem>>
    %323 = vector.broadcast %322 : f32 to vector<8x8xf32>
    %324 = arith.mulf %323, %188 : vector<8x8xf32>
    %325 = arith.addf %309, %324 : vector<8x8xf32>
    %c52 = arith.constant 52 : index
    %326 = memref.load %arg4[%c52] : memref<144xf32, #tpu.memory_space<smem>>
    %327 = vector.broadcast %326 : f32 to vector<8x8xf32>
    %328 = arith.mulf %327, %188 : vector<8x8xf32>
    %329 = arith.addf %313, %328 : vector<8x8xf32>
    %c88 = arith.constant 88 : index
    %330 = memref.load %arg4[%c88] : memref<144xf32, #tpu.memory_space<smem>>
    %331 = vector.broadcast %330 : f32 to vector<8x8xf32>
    %332 = arith.mulf %331, %188 : vector<8x8xf32>
    %333 = arith.addf %317, %332 : vector<8x8xf32>
    %c124 = arith.constant 124 : index
    %334 = memref.load %arg4[%c124] : memref<144xf32, #tpu.memory_space<smem>>
    %335 = vector.broadcast %334 : f32 to vector<8x8xf32>
    %336 = arith.mulf %335, %188 : vector<8x8xf32>
    %337 = arith.addf %321, %336 : vector<8x8xf32>
    %c17 = arith.constant 17 : index
    %338 = memref.load %arg4[%c17] : memref<144xf32, #tpu.memory_space<smem>>
    %339 = vector.broadcast %338 : f32 to vector<8x8xf32>
    %340 = arith.mulf %339, %190 : vector<8x8xf32>
    %341 = arith.addf %325, %340 : vector<8x8xf32>
    %c53 = arith.constant 53 : index
    %342 = memref.load %arg4[%c53] : memref<144xf32, #tpu.memory_space<smem>>
    %343 = vector.broadcast %342 : f32 to vector<8x8xf32>
    %344 = arith.mulf %343, %190 : vector<8x8xf32>
    %345 = arith.addf %329, %344 : vector<8x8xf32>
    %c89 = arith.constant 89 : index
    %346 = memref.load %arg4[%c89] : memref<144xf32, #tpu.memory_space<smem>>
    %347 = vector.broadcast %346 : f32 to vector<8x8xf32>
    %348 = arith.mulf %347, %190 : vector<8x8xf32>
    %349 = arith.addf %333, %348 : vector<8x8xf32>
    %c125 = arith.constant 125 : index
    %350 = memref.load %arg4[%c125] : memref<144xf32, #tpu.memory_space<smem>>
    %351 = vector.broadcast %350 : f32 to vector<8x8xf32>
    %352 = arith.mulf %351, %190 : vector<8x8xf32>
    %353 = arith.addf %337, %352 : vector<8x8xf32>
    %354 = arith.maximumf %184, %186 : vector<8x8xf32>
    %355 = arith.maximumf %188, %190 : vector<8x8xf32>
    %356 = arith.maximumf %354, %355 : vector<8x8xf32>
    %c1_48 = arith.constant 1 : index
    %357 = memref.load %arg6[%c1_48] : memref<4xf32, #tpu.memory_space<smem>>
    %358 = vector.broadcast %357 : f32 to vector<8x8xf32>
    %359 = arith.mulf %356, %358 : vector<8x8xf32>
    %c1_49 = arith.constant 1 : index
    %360 = memref.load %arg7[%c1_49] : memref<4xf32, #tpu.memory_space<smem>>
    %361 = vector.broadcast %360 : f32 to vector<8x8xf32>
    %362 = arith.addf %359, %361 : vector<8x8xf32>
    %cst_50 = arith.constant 0.000000e+00 : f32
    %363 = vector.broadcast %cst_50 : f32 to vector<8x8xf32>
    %364 = arith.maximumf %362, %363 : vector<8x8xf32>
    %c0_51 = arith.constant 0 : index
    %c5_52 = arith.constant 5 : index
    %c0_53 = arith.constant 0 : index
    %c0_54 = arith.constant 0 : index
    %365 = vector.load %arg8[%c0_51, %c5_52, %c0_53, %c0_54] : memref<2x8x8x8xf32, #tpu.memory_space<vmem>>, vector<1x1x8x8xf32>
    %366 = vector.shape_cast %365 : vector<1x1x8x8xf32> to vector<8x8xf32>
    %367 = vector.shape_cast %364 : vector<8x8xf32> to vector<1x1x8x8xf32>
    tpu.vector_store %arg8[%c0_51, %c5_52, %c0_53, %c0_54], %367 {strides = array<i32>} : memref<2x8x8x8xf32, #tpu.memory_space<vmem>>, vector<1x1x8x8xf32>,
    %c0_55 = arith.constant 0 : index
    %c2_56 = arith.constant 2 : index
    %c0_57 = arith.constant 0 : index
    %c0_58 = arith.constant 0 : index
    %368 = vector.load %arg2[%c0_55, %c2_56, %c0_57, %c0_58] : memref<2x16x8x8xf32, #tpu.memory_space<vmem>>, vector<1x1x8x8xf32>
    %369 = vector.shape_cast %368 : vector<1x1x8x8xf32> to vector<8x8xf32>
    %c0_59 = arith.constant 0 : index
    %c6_60 = arith.constant 6 : index
    %c0_61 = arith.constant 0 : index
    %c0_62 = arith.constant 0 : index
    %370 = vector.load %arg2[%c0_59, %c6_60, %c0_61, %c0_62] : memref<2x16x8x8xf32, #tpu.memory_space<vmem>>, vector<1x1x8x8xf32>
    %371 = vector.shape_cast %370 : vector<1x1x8x8xf32> to vector<8x8xf32>
    %c0_63 = arith.constant 0 : index
    %c10_64 = arith.constant 10 : index
    %c0_65 = arith.constant 0 : index
    %c0_66 = arith.constant 0 : index
    %372 = vector.load %arg2[%c0_63, %c10_64, %c0_65, %c0_66] : memref<2x16x8x8xf32, #tpu.memory_space<vmem>>, vector<1x1x8x8xf32>
    %373 = vector.shape_cast %372 : vector<1x1x8x8xf32> to vector<8x8xf32>
    %c0_67 = arith.constant 0 : index
    %c14_68 = arith.constant 14 : index
    %c0_69 = arith.constant 0 : index
    %c0_70 = arith.constant 0 : index
    %374 = vector.load %arg2[%c0_67, %c14_68, %c0_69, %c0_70] : memref<2x16x8x8xf32, #tpu.memory_space<vmem>>, vector<1x1x8x8xf32>
    %375 = vector.shape_cast %374 : vector<1x1x8x8xf32> to vector<8x8xf32>
    %cst_71 = arith.constant 0.000000e+00 : f32
    %376 = vector.broadcast %cst_71 : f32 to vector<8x1xf32>
    %377 = vector.extract_strided_slice %371 {offsets = [0, 0], sizes = [8, 7], strides = [1, 1]} : vector<8x8xf32> to vector<8x7xf32>
    %378 = tpu.concatenate %376, %377 in 1 : vector<8x1xf32>, vector<8x7xf32> -> vector<8x8xf32>
    %cst_72 = arith.constant 0.000000e+00 : f32
    %379 = vector.broadcast %cst_72 : f32 to vector<8x1xf32>
    %380 = vector.extract_strided_slice %375 {offsets = [0, 0], sizes = [8, 7], strides = [1, 1]} : vector<8x8xf32> to vector<8x7xf32>
    %381 = tpu.concatenate %379, %380 in 1 : vector<8x1xf32>, vector<8x7xf32> -> vector<8x8xf32>
    %382 = vector.extract_strided_slice %1 {offsets = [2, 0], sizes = [1, 8], strides = [1, 1]} : vector<8x8xf32> to vector<1x8xf32>
    %383 = vector.shape_cast %382 : vector<1x8xf32> to vector<8xf32>
    %384 = vector.shape_cast %383 : vector<8xf32> to vector<1x8xf32>
    %385 = vector.extract_strided_slice %373 {offsets = [0, 0], sizes = [7, 8], strides = [1, 1]} : vector<8x8xf32> to vector<7x8xf32>
    %386 = tpu.concatenate %384, %385 in 0 : vector<1x8xf32>, vector<7x8xf32> -> vector<8x8xf32>
    %387 = vector.extract_strided_slice %1 {offsets = [6, 0], sizes = [1, 8], strides = [1, 1]} : vector<8x8xf32> to vector<1x8xf32>
    %388 = vector.shape_cast %387 : vector<1x8xf32> to vector<8xf32>
    %389 = vector.shape_cast %388 : vector<8xf32> to vector<1x8xf32>
    %390 = vector.extract_strided_slice %375 {offsets = [0, 0], sizes = [7, 8], strides = [1, 1]} : vector<8x8xf32> to vector<7x8xf32>
    %391 = tpu.concatenate %389, %390 in 0 : vector<1x8xf32>, vector<7x8xf32> -> vector<8x8xf32>
    %cst_73 = arith.constant 0.000000e+00 : f32
    %392 = vector.broadcast %cst_73 : f32 to vector<8x1xf32>
    %393 = vector.extract_strided_slice %391 {offsets = [0, 0], sizes = [8, 7], strides = [1, 1]} : vector<8x8xf32> to vector<8x7xf32>
    %394 = tpu.concatenate %392, %393 in 1 : vector<8x1xf32>, vector<8x7xf32> -> vector<8x8xf32>
    %c18 = arith.constant 18 : index
    %395 = memref.load %arg4[%c18] : memref<144xf32, #tpu.memory_space<smem>>
    %396 = vector.broadcast %395 : f32 to vector<8x8xf32>
    %397 = arith.mulf %396, %394 : vector<8x8xf32>
    %398 = arith.addf %341, %397 : vector<8x8xf32>
    %c54 = arith.constant 54 : index
    %399 = memref.load %arg4[%c54] : memref<144xf32, #tpu.memory_space<smem>>
    %400 = vector.broadcast %399 : f32 to vector<8x8xf32>
    %401 = arith.mulf %400, %394 : vector<8x8xf32>
    %402 = arith.addf %345, %401 : vector<8x8xf32>
    %c90 = arith.constant 90 : index
    %403 = memref.load %arg4[%c90] : memref<144xf32, #tpu.memory_space<smem>>
    %404 = vector.broadcast %403 : f32 to vector<8x8xf32>
    %405 = arith.mulf %404, %394 : vector<8x8xf32>
    %406 = arith.addf %349, %405 : vector<8x8xf32>
    %c126 = arith.constant 126 : index
    %407 = memref.load %arg4[%c126] : memref<144xf32, #tpu.memory_space<smem>>
    %408 = vector.broadcast %407 : f32 to vector<8x8xf32>
    %409 = arith.mulf %408, %394 : vector<8x8xf32>
    %410 = arith.addf %353, %409 : vector<8x8xf32>
    %c19 = arith.constant 19 : index
    %411 = memref.load %arg4[%c19] : memref<144xf32, #tpu.memory_space<smem>>
    %412 = vector.broadcast %411 : f32 to vector<8x8xf32>
    %413 = arith.mulf %412, %386 : vector<8x8xf32>
    %414 = arith.addf %398, %413 : vector<8x8xf32>
    %c55 = arith.constant 55 : index
    %415 = memref.load %arg4[%c55] : memref<144xf32, #tpu.memory_space<smem>>
    %416 = vector.broadcast %415 : f32 to vector<8x8xf32>
    %417 = arith.mulf %416, %386 : vector<8x8xf32>
    %418 = arith.addf %402, %417 : vector<8x8xf32>
    %c91 = arith.constant 91 : index
    %419 = memref.load %arg4[%c91] : memref<144xf32, #tpu.memory_space<smem>>
    %420 = vector.broadcast %419 : f32 to vector<8x8xf32>
    %421 = arith.mulf %420, %386 : vector<8x8xf32>
    %422 = arith.addf %406, %421 : vector<8x8xf32>
    %c127 = arith.constant 127 : index
    %423 = memref.load %arg4[%c127] : memref<144xf32, #tpu.memory_space<smem>>
    %424 = vector.broadcast %423 : f32 to vector<8x8xf32>
    %425 = arith.mulf %424, %386 : vector<8x8xf32>
    %426 = arith.addf %410, %425 : vector<8x8xf32>
    %c20 = arith.constant 20 : index
    %427 = memref.load %arg4[%c20] : memref<144xf32, #tpu.memory_space<smem>>
    %428 = vector.broadcast %427 : f32 to vector<8x8xf32>
    %429 = arith.mulf %428, %391 : vector<8x8xf32>
    %430 = arith.addf %414, %429 : vector<8x8xf32>
    %c56 = arith.constant 56 : index
    %431 = memref.load %arg4[%c56] : memref<144xf32, #tpu.memory_space<smem>>
    %432 = vector.broadcast %431 : f32 to vector<8x8xf32>
    %433 = arith.mulf %432, %391 : vector<8x8xf32>
    %434 = arith.addf %418, %433 : vector<8x8xf32>
    %c92 = arith.constant 92 : index
    %435 = memref.load %arg4[%c92] : memref<144xf32, #tpu.memory_space<smem>>
    %436 = vector.broadcast %435 : f32 to vector<8x8xf32>
    %437 = arith.mulf %436, %391 : vector<8x8xf32>
    %438 = arith.addf %422, %437 : vector<8x8xf32>
    %c128 = arith.constant 128 : index
    %439 = memref.load %arg4[%c128] : memref<144xf32, #tpu.memory_space<smem>>
    %440 = vector.broadcast %439 : f32 to vector<8x8xf32>
    %441 = arith.mulf %440, %391 : vector<8x8xf32>
    %442 = arith.addf %426, %441 : vector<8x8xf32>
    %c21 = arith.constant 21 : index
    %443 = memref.load %arg4[%c21] : memref<144xf32, #tpu.memory_space<smem>>
    %444 = vector.broadcast %443 : f32 to vector<8x8xf32>
    %445 = arith.mulf %444, %378 : vector<8x8xf32>
    %446 = arith.addf %430, %445 : vector<8x8xf32>
    %c57 = arith.constant 57 : index
    %447 = memref.load %arg4[%c57] : memref<144xf32, #tpu.memory_space<smem>>
    %448 = vector.broadcast %447 : f32 to vector<8x8xf32>
    %449 = arith.mulf %448, %378 : vector<8x8xf32>
    %450 = arith.addf %434, %449 : vector<8x8xf32>
    %c93 = arith.constant 93 : index
    %451 = memref.load %arg4[%c93] : memref<144xf32, #tpu.memory_space<smem>>
    %452 = vector.broadcast %451 : f32 to vector<8x8xf32>
    %453 = arith.mulf %452, %378 : vector<8x8xf32>
    %454 = arith.addf %438, %453 : vector<8x8xf32>
    %c129 = arith.constant 129 : index
    %455 = memref.load %arg4[%c129] : memref<144xf32, #tpu.memory_space<smem>>
    %456 = vector.broadcast %455 : f32 to vector<8x8xf32>
    %457 = arith.mulf %456, %378 : vector<8x8xf32>
    %458 = arith.addf %442, %457 : vector<8x8xf32>
    %c22 = arith.constant 22 : index
    %459 = memref.load %arg4[%c22] : memref<144xf32, #tpu.memory_space<smem>>
    %460 = vector.broadcast %459 : f32 to vector<8x8xf32>
    %461 = arith.mulf %460, %369 : vector<8x8xf32>
    %462 = arith.addf %446, %461 : vector<8x8xf32>
    %c58 = arith.constant 58 : index
    %463 = memref.load %arg4[%c58] : memref<144xf32, #tpu.memory_space<smem>>
    %464 = vector.broadcast %463 : f32 to vector<8x8xf32>
    %465 = arith.mulf %464, %369 : vector<8x8xf32>
    %466 = arith.addf %450, %465 : vector<8x8xf32>
    %c94 = arith.constant 94 : index
    %467 = memref.load %arg4[%c94] : memref<144xf32, #tpu.memory_space<smem>>
    %468 = vector.broadcast %467 : f32 to vector<8x8xf32>
    %469 = arith.mulf %468, %369 : vector<8x8xf32>
    %470 = arith.addf %454, %469 : vector<8x8xf32>
    %c130 = arith.constant 130 : index
    %471 = memref.load %arg4[%c130] : memref<144xf32, #tpu.memory_space<smem>>
    %472 = vector.broadcast %471 : f32 to vector<8x8xf32>
    %473 = arith.mulf %472, %369 : vector<8x8xf32>
    %474 = arith.addf %458, %473 : vector<8x8xf32>
    %c23 = arith.constant 23 : index
    %475 = memref.load %arg4[%c23] : memref<144xf32, #tpu.memory_space<smem>>
    %476 = vector.broadcast %475 : f32 to vector<8x8xf32>
    %477 = arith.mulf %476, %371 : vector<8x8xf32>
    %478 = arith.addf %462, %477 : vector<8x8xf32>
    %c59 = arith.constant 59 : index
    %479 = memref.load %arg4[%c59] : memref<144xf32, #tpu.memory_space<smem>>
    %480 = vector.broadcast %479 : f32 to vector<8x8xf32>
    %481 = arith.mulf %480, %371 : vector<8x8xf32>
    %482 = arith.addf %466, %481 : vector<8x8xf32>
    %c95 = arith.constant 95 : index
    %483 = memref.load %arg4[%c95] : memref<144xf32, #tpu.memory_space<smem>>
    %484 = vector.broadcast %483 : f32 to vector<8x8xf32>
    %485 = arith.mulf %484, %371 : vector<8x8xf32>
    %486 = arith.addf %470, %485 : vector<8x8xf32>
    %c131 = arith.constant 131 : index
    %487 = memref.load %arg4[%c131] : memref<144xf32, #tpu.memory_space<smem>>
    %488 = vector.broadcast %487 : f32 to vector<8x8xf32>
    %489 = arith.mulf %488, %371 : vector<8x8xf32>
    %490 = arith.addf %474, %489 : vector<8x8xf32>
    %c24 = arith.constant 24 : index
    %491 = memref.load %arg4[%c24] : memref<144xf32, #tpu.memory_space<smem>>
    %492 = vector.broadcast %491 : f32 to vector<8x8xf32>
    %493 = arith.mulf %492, %381 : vector<8x8xf32>
    %494 = arith.addf %478, %493 : vector<8x8xf32>
    %c60 = arith.constant 60 : index
    %495 = memref.load %arg4[%c60] : memref<144xf32, #tpu.memory_space<smem>>
    %496 = vector.broadcast %495 : f32 to vector<8x8xf32>
    %497 = arith.mulf %496, %381 : vector<8x8xf32>
    %498 = arith.addf %482, %497 : vector<8x8xf32>
    %c96 = arith.constant 96 : index
    %499 = memref.load %arg4[%c96] : memref<144xf32, #tpu.memory_space<smem>>
    %500 = vector.broadcast %499 : f32 to vector<8x8xf32>
    %501 = arith.mulf %500, %381 : vector<8x8xf32>
    %502 = arith.addf %486, %501 : vector<8x8xf32>
    %c132 = arith.constant 132 : index
    %503 = memref.load %arg4[%c132] : memref<144xf32, #tpu.memory_space<smem>>
    %504 = vector.broadcast %503 : f32 to vector<8x8xf32>
    %505 = arith.mulf %504, %381 : vector<8x8xf32>
    %506 = arith.addf %490, %505 : vector<8x8xf32>
    %c25 = arith.constant 25 : index
    %507 = memref.load %arg4[%c25] : memref<144xf32, #tpu.memory_space<smem>>
    %508 = vector.broadcast %507 : f32 to vector<8x8xf32>
    %509 = arith.mulf %508, %373 : vector<8x8xf32>
    %510 = arith.addf %494, %509 : vector<8x8xf32>
    %c61 = arith.constant 61 : index
    %511 = memref.load %arg4[%c61] : memref<144xf32, #tpu.memory_space<smem>>
    %512 = vector.broadcast %511 : f32 to vector<8x8xf32>
    %513 = arith.mulf %512, %373 : vector<8x8xf32>
    %514 = arith.addf %498, %513 : vector<8x8xf32>
    %c97 = arith.constant 97 : index
    %515 = memref.load %arg4[%c97] : memref<144xf32, #tpu.memory_space<smem>>
    %516 = vector.broadcast %515 : f32 to vector<8x8xf32>
    %517 = arith.mulf %516, %373 : vector<8x8xf32>
    %518 = arith.addf %502, %517 : vector<8x8xf32>
    %c133 = arith.constant 133 : index
    %519 = memref.load %arg4[%c133] : memref<144xf32, #tpu.memory_space<smem>>
    %520 = vector.broadcast %519 : f32 to vector<8x8xf32>
    %521 = arith.mulf %520, %373 : vector<8x8xf32>
    %522 = arith.addf %506, %521 : vector<8x8xf32>
    %c26 = arith.constant 26 : index
    %523 = memref.load %arg4[%c26] : memref<144xf32, #tpu.memory_space<smem>>
    %524 = vector.broadcast %523 : f32 to vector<8x8xf32>
    %525 = arith.mulf %524, %375 : vector<8x8xf32>
    %526 = arith.addf %510, %525 : vector<8x8xf32>
    %c62 = arith.constant 62 : index
    %527 = memref.load %arg4[%c62] : memref<144xf32, #tpu.memory_space<smem>>
    %528 = vector.broadcast %527 : f32 to vector<8x8xf32>
    %529 = arith.mulf %528, %375 : vector<8x8xf32>
    %530 = arith.addf %514, %529 : vector<8x8xf32>
    %c98 = arith.constant 98 : index
    %531 = memref.load %arg4[%c98] : memref<144xf32, #tpu.memory_space<smem>>
    %532 = vector.broadcast %531 : f32 to vector<8x8xf32>
    %533 = arith.mulf %532, %375 : vector<8x8xf32>
    %534 = arith.addf %518, %533 : vector<8x8xf32>
    %c134 = arith.constant 134 : index
    %535 = memref.load %arg4[%c134] : memref<144xf32, #tpu.memory_space<smem>>
    %536 = vector.broadcast %535 : f32 to vector<8x8xf32>
    %537 = arith.mulf %536, %375 : vector<8x8xf32>
    %538 = arith.addf %522, %537 : vector<8x8xf32>
    %539 = arith.maximumf %369, %371 : vector<8x8xf32>
    %540 = arith.maximumf %373, %375 : vector<8x8xf32>
    %541 = arith.maximumf %539, %540 : vector<8x8xf32>
    %c2_74 = arith.constant 2 : index
    %542 = memref.load %arg6[%c2_74] : memref<4xf32, #tpu.memory_space<smem>>
    %543 = vector.broadcast %542 : f32 to vector<8x8xf32>
    %544 = arith.mulf %541, %543 : vector<8x8xf32>
    %c2_75 = arith.constant 2 : index
    %545 = memref.load %arg7[%c2_75] : memref<4xf32, #tpu.memory_space<smem>>
    %546 = vector.broadcast %545 : f32 to vector<8x8xf32>
    %547 = arith.addf %544, %546 : vector<8x8xf32>
    %cst_76 = arith.constant 0.000000e+00 : f32
    %548 = vector.broadcast %cst_76 : f32 to vector<8x8xf32>
    %549 = arith.maximumf %547, %548 : vector<8x8xf32>
    %c0_77 = arith.constant 0 : index
    %c6_78 = arith.constant 6 : index
    %c0_79 = arith.constant 0 : index
    %c0_80 = arith.constant 0 : index
    %550 = vector.load %arg8[%c0_77, %c6_78, %c0_79, %c0_80] : memref<2x8x8x8xf32, #tpu.memory_space<vmem>>, vector<1x1x8x8xf32>
    %551 = vector.shape_cast %550 : vector<1x1x8x8xf32> to vector<8x8xf32>
    %552 = vector.shape_cast %549 : vector<8x8xf32> to vector<1x1x8x8xf32>
    tpu.vector_store %arg8[%c0_77, %c6_78, %c0_79, %c0_80], %552 {strides = array<i32>} : memref<2x8x8x8xf32, #tpu.memory_space<vmem>>, vector<1x1x8x8xf32>,
    %c0_81 = arith.constant 0 : index
    %c3_82 = arith.constant 3 : index
    %c0_83 = arith.constant 0 : index
    %c0_84 = arith.constant 0 : index
    %553 = vector.load %arg2[%c0_81, %c3_82, %c0_83, %c0_84] : memref<2x16x8x8xf32, #tpu.memory_space<vmem>>, vector<1x1x8x8xf32>
    %554 = vector.shape_cast %553 : vector<1x1x8x8xf32> to vector<8x8xf32>
    %c0_85 = arith.constant 0 : index
    %c7_86 = arith.constant 7 : index
    %c0_87 = arith.constant 0 : index
    %c0_88 = arith.constant 0 : index
    %555 = vector.load %arg2[%c0_85, %c7_86, %c0_87, %c0_88] : memref<2x16x8x8xf32, #tpu.memory_space<vmem>>, vector<1x1x8x8xf32>
    %556 = vector.shape_cast %555 : vector<1x1x8x8xf32> to vector<8x8xf32>
    %c0_89 = arith.constant 0 : index
    %c11_90 = arith.constant 11 : index
    %c0_91 = arith.constant 0 : index
    %c0_92 = arith.constant 0 : index
    %557 = vector.load %arg2[%c0_89, %c11_90, %c0_91, %c0_92] : memref<2x16x8x8xf32, #tpu.memory_space<vmem>>, vector<1x1x8x8xf32>
    %558 = vector.shape_cast %557 : vector<1x1x8x8xf32> to vector<8x8xf32>
    %c0_93 = arith.constant 0 : index
    %c15_94 = arith.constant 15 : index
    %c0_95 = arith.constant 0 : index
    %c0_96 = arith.constant 0 : index
    %559 = vector.load %arg2[%c0_93, %c15_94, %c0_95, %c0_96] : memref<2x16x8x8xf32, #tpu.memory_space<vmem>>, vector<1x1x8x8xf32>
    %560 = vector.shape_cast %559 : vector<1x1x8x8xf32> to vector<8x8xf32>
    %cst_97 = arith.constant 0.000000e+00 : f32
    %561 = vector.broadcast %cst_97 : f32 to vector<8x1xf32>
    %562 = vector.extract_strided_slice %556 {offsets = [0, 0], sizes = [8, 7], strides = [1, 1]} : vector<8x8xf32> to vector<8x7xf32>
    %563 = tpu.concatenate %561, %562 in 1 : vector<8x1xf32>, vector<8x7xf32> -> vector<8x8xf32>
    %cst_98 = arith.constant 0.000000e+00 : f32
    %564 = vector.broadcast %cst_98 : f32 to vector<8x1xf32>
    %565 = vector.extract_strided_slice %560 {offsets = [0, 0], sizes = [8, 7], strides = [1, 1]} : vector<8x8xf32> to vector<8x7xf32>
    %566 = tpu.concatenate %564, %565 in 1 : vector<8x1xf32>, vector<8x7xf32> -> vector<8x8xf32>
    %567 = vector.extract_strided_slice %1 {offsets = [3, 0], sizes = [1, 8], strides = [1, 1]} : vector<8x8xf32> to vector<1x8xf32>
    %568 = vector.shape_cast %567 : vector<1x8xf32> to vector<8xf32>
    %569 = vector.shape_cast %568 : vector<8xf32> to vector<1x8xf32>
    %570 = vector.extract_strided_slice %558 {offsets = [0, 0], sizes = [7, 8], strides = [1, 1]} : vector<8x8xf32> to vector<7x8xf32>
    %571 = tpu.concatenate %569, %570 in 0 : vector<1x8xf32>, vector<7x8xf32> -> vector<8x8xf32>
    %572 = vector.extract_strided_slice %1 {offsets = [7, 0], sizes = [1, 8], strides = [1, 1]} : vector<8x8xf32> to vector<1x8xf32>
    %573 = vector.shape_cast %572 : vector<1x8xf32> to vector<8xf32>
    %574 = vector.shape_cast %573 : vector<8xf32> to vector<1x8xf32>
    %575 = vector.extract_strided_slice %560 {offsets = [0, 0], sizes = [7, 8], strides = [1, 1]} : vector<8x8xf32> to vector<7x8xf32>
    %576 = tpu.concatenate %574, %575 in 0 : vector<1x8xf32>, vector<7x8xf32> -> vector<8x8xf32>
    %cst_99 = arith.constant 0.000000e+00 : f32
    %577 = vector.broadcast %cst_99 : f32 to vector<8x1xf32>
    %578 = vector.extract_strided_slice %576 {offsets = [0, 0], sizes = [8, 7], strides = [1, 1]} : vector<8x8xf32> to vector<8x7xf32>
    %579 = tpu.concatenate %577, %578 in 1 : vector<8x1xf32>, vector<8x7xf32> -> vector<8x8xf32>
    %c27 = arith.constant 27 : index
    %580 = memref.load %arg4[%c27] : memref<144xf32, #tpu.memory_space<smem>>
    %581 = vector.broadcast %580 : f32 to vector<8x8xf32>
    %582 = arith.mulf %581, %579 : vector<8x8xf32>
    %583 = arith.addf %526, %582 : vector<8x8xf32>
    %c63 = arith.constant 63 : index
    %584 = memref.load %arg4[%c63] : memref<144xf32, #tpu.memory_space<smem>>
    %585 = vector.broadcast %584 : f32 to vector<8x8xf32>
    %586 = arith.mulf %585, %579 : vector<8x8xf32>
    %587 = arith.addf %530, %586 : vector<8x8xf32>
    %c99 = arith.constant 99 : index
    %588 = memref.load %arg4[%c99] : memref<144xf32, #tpu.memory_space<smem>>
    %589 = vector.broadcast %588 : f32 to vector<8x8xf32>
    %590 = arith.mulf %589, %579 : vector<8x8xf32>
    %591 = arith.addf %534, %590 : vector<8x8xf32>
    %c135 = arith.constant 135 : index
    %592 = memref.load %arg4[%c135] : memref<144xf32, #tpu.memory_space<smem>>
    %593 = vector.broadcast %592 : f32 to vector<8x8xf32>
    %594 = arith.mulf %593, %579 : vector<8x8xf32>
    %595 = arith.addf %538, %594 : vector<8x8xf32>
    %c28 = arith.constant 28 : index
    %596 = memref.load %arg4[%c28] : memref<144xf32, #tpu.memory_space<smem>>
    %597 = vector.broadcast %596 : f32 to vector<8x8xf32>
    %598 = arith.mulf %597, %571 : vector<8x8xf32>
    %599 = arith.addf %583, %598 : vector<8x8xf32>
    %c64 = arith.constant 64 : index
    %600 = memref.load %arg4[%c64] : memref<144xf32, #tpu.memory_space<smem>>
    %601 = vector.broadcast %600 : f32 to vector<8x8xf32>
    %602 = arith.mulf %601, %571 : vector<8x8xf32>
    %603 = arith.addf %587, %602 : vector<8x8xf32>
    %c100 = arith.constant 100 : index
    %604 = memref.load %arg4[%c100] : memref<144xf32, #tpu.memory_space<smem>>
    %605 = vector.broadcast %604 : f32 to vector<8x8xf32>
    %606 = arith.mulf %605, %571 : vector<8x8xf32>
    %607 = arith.addf %591, %606 : vector<8x8xf32>
    %c136 = arith.constant 136 : index
    %608 = memref.load %arg4[%c136] : memref<144xf32, #tpu.memory_space<smem>>
    %609 = vector.broadcast %608 : f32 to vector<8x8xf32>
    %610 = arith.mulf %609, %571 : vector<8x8xf32>
    %611 = arith.addf %595, %610 : vector<8x8xf32>
    %c29 = arith.constant 29 : index
    %612 = memref.load %arg4[%c29] : memref<144xf32, #tpu.memory_space<smem>>
    %613 = vector.broadcast %612 : f32 to vector<8x8xf32>
    %614 = arith.mulf %613, %576 : vector<8x8xf32>
    %615 = arith.addf %599, %614 : vector<8x8xf32>
    %c65 = arith.constant 65 : index
    %616 = memref.load %arg4[%c65] : memref<144xf32, #tpu.memory_space<smem>>
    %617 = vector.broadcast %616 : f32 to vector<8x8xf32>
    %618 = arith.mulf %617, %576 : vector<8x8xf32>
    %619 = arith.addf %603, %618 : vector<8x8xf32>
    %c101 = arith.constant 101 : index
    %620 = memref.load %arg4[%c101] : memref<144xf32, #tpu.memory_space<smem>>
    %621 = vector.broadcast %620 : f32 to vector<8x8xf32>
    %622 = arith.mulf %621, %576 : vector<8x8xf32>
    %623 = arith.addf %607, %622 : vector<8x8xf32>
    %c137 = arith.constant 137 : index
    %624 = memref.load %arg4[%c137] : memref<144xf32, #tpu.memory_space<smem>>
    %625 = vector.broadcast %624 : f32 to vector<8x8xf32>
    %626 = arith.mulf %625, %576 : vector<8x8xf32>
    %627 = arith.addf %611, %626 : vector<8x8xf32>
    %c30 = arith.constant 30 : index
    %628 = memref.load %arg4[%c30] : memref<144xf32, #tpu.memory_space<smem>>
    %629 = vector.broadcast %628 : f32 to vector<8x8xf32>
    %630 = arith.mulf %629, %563 : vector<8x8xf32>
    %631 = arith.addf %615, %630 : vector<8x8xf32>
    %c66 = arith.constant 66 : index
    %632 = memref.load %arg4[%c66] : memref<144xf32, #tpu.memory_space<smem>>
    %633 = vector.broadcast %632 : f32 to vector<8x8xf32>
    %634 = arith.mulf %633, %563 : vector<8x8xf32>
    %635 = arith.addf %619, %634 : vector<8x8xf32>
    %c102 = arith.constant 102 : index
    %636 = memref.load %arg4[%c102] : memref<144xf32, #tpu.memory_space<smem>>
    %637 = vector.broadcast %636 : f32 to vector<8x8xf32>
    %638 = arith.mulf %637, %563 : vector<8x8xf32>
    %639 = arith.addf %623, %638 : vector<8x8xf32>
    %c138 = arith.constant 138 : index
    %640 = memref.load %arg4[%c138] : memref<144xf32, #tpu.memory_space<smem>>
    %641 = vector.broadcast %640 : f32 to vector<8x8xf32>
    %642 = arith.mulf %641, %563 : vector<8x8xf32>
    %643 = arith.addf %627, %642 : vector<8x8xf32>
    %c31 = arith.constant 31 : index
    %644 = memref.load %arg4[%c31] : memref<144xf32, #tpu.memory_space<smem>>
    %645 = vector.broadcast %644 : f32 to vector<8x8xf32>
    %646 = arith.mulf %645, %554 : vector<8x8xf32>
    %647 = arith.addf %631, %646 : vector<8x8xf32>
    %c67 = arith.constant 67 : index
    %648 = memref.load %arg4[%c67] : memref<144xf32, #tpu.memory_space<smem>>
    %649 = vector.broadcast %648 : f32 to vector<8x8xf32>
    %650 = arith.mulf %649, %554 : vector<8x8xf32>
    %651 = arith.addf %635, %650 : vector<8x8xf32>
    %c103 = arith.constant 103 : index
    %652 = memref.load %arg4[%c103] : memref<144xf32, #tpu.memory_space<smem>>
    %653 = vector.broadcast %652 : f32 to vector<8x8xf32>
    %654 = arith.mulf %653, %554 : vector<8x8xf32>
    %655 = arith.addf %639, %654 : vector<8x8xf32>
    %c139 = arith.constant 139 : index
    %656 = memref.load %arg4[%c139] : memref<144xf32, #tpu.memory_space<smem>>
    %657 = vector.broadcast %656 : f32 to vector<8x8xf32>
    %658 = arith.mulf %657, %554 : vector<8x8xf32>
    %659 = arith.addf %643, %658 : vector<8x8xf32>
    %c32 = arith.constant 32 : index
    %660 = memref.load %arg4[%c32] : memref<144xf32, #tpu.memory_space<smem>>
    %661 = vector.broadcast %660 : f32 to vector<8x8xf32>
    %662 = arith.mulf %661, %556 : vector<8x8xf32>
    %663 = arith.addf %647, %662 : vector<8x8xf32>
    %c68 = arith.constant 68 : index
    %664 = memref.load %arg4[%c68] : memref<144xf32, #tpu.memory_space<smem>>
    %665 = vector.broadcast %664 : f32 to vector<8x8xf32>
    %666 = arith.mulf %665, %556 : vector<8x8xf32>
    %667 = arith.addf %651, %666 : vector<8x8xf32>
    %c104 = arith.constant 104 : index
    %668 = memref.load %arg4[%c104] : memref<144xf32, #tpu.memory_space<smem>>
    %669 = vector.broadcast %668 : f32 to vector<8x8xf32>
    %670 = arith.mulf %669, %556 : vector<8x8xf32>
    %671 = arith.addf %655, %670 : vector<8x8xf32>
    %c140 = arith.constant 140 : index
    %672 = memref.load %arg4[%c140] : memref<144xf32, #tpu.memory_space<smem>>
    %673 = vector.broadcast %672 : f32 to vector<8x8xf32>
    %674 = arith.mulf %673, %556 : vector<8x8xf32>
    %675 = arith.addf %659, %674 : vector<8x8xf32>
    %c33 = arith.constant 33 : index
    %676 = memref.load %arg4[%c33] : memref<144xf32, #tpu.memory_space<smem>>
    %677 = vector.broadcast %676 : f32 to vector<8x8xf32>
    %678 = arith.mulf %677, %566 : vector<8x8xf32>
    %679 = arith.addf %663, %678 : vector<8x8xf32>
    %c69 = arith.constant 69 : index
    %680 = memref.load %arg4[%c69] : memref<144xf32, #tpu.memory_space<smem>>
    %681 = vector.broadcast %680 : f32 to vector<8x8xf32>
    %682 = arith.mulf %681, %566 : vector<8x8xf32>
    %683 = arith.addf %667, %682 : vector<8x8xf32>
    %c105 = arith.constant 105 : index
    %684 = memref.load %arg4[%c105] : memref<144xf32, #tpu.memory_space<smem>>
    %685 = vector.broadcast %684 : f32 to vector<8x8xf32>
    %686 = arith.mulf %685, %566 : vector<8x8xf32>
    %687 = arith.addf %671, %686 : vector<8x8xf32>
    %c141 = arith.constant 141 : index
    %688 = memref.load %arg4[%c141] : memref<144xf32, #tpu.memory_space<smem>>
    %689 = vector.broadcast %688 : f32 to vector<8x8xf32>
    %690 = arith.mulf %689, %566 : vector<8x8xf32>
    %691 = arith.addf %675, %690 : vector<8x8xf32>
    %c34 = arith.constant 34 : index
    %692 = memref.load %arg4[%c34] : memref<144xf32, #tpu.memory_space<smem>>
    %693 = vector.broadcast %692 : f32 to vector<8x8xf32>
    %694 = arith.mulf %693, %558 : vector<8x8xf32>
    %695 = arith.addf %679, %694 : vector<8x8xf32>
    %c70 = arith.constant 70 : index
    %696 = memref.load %arg4[%c70] : memref<144xf32, #tpu.memory_space<smem>>
    %697 = vector.broadcast %696 : f32 to vector<8x8xf32>
    %698 = arith.mulf %697, %558 : vector<8x8xf32>
    %699 = arith.addf %683, %698 : vector<8x8xf32>
    %c106 = arith.constant 106 : index
    %700 = memref.load %arg4[%c106] : memref<144xf32, #tpu.memory_space<smem>>
    %701 = vector.broadcast %700 : f32 to vector<8x8xf32>
    %702 = arith.mulf %701, %558 : vector<8x8xf32>
    %703 = arith.addf %687, %702 : vector<8x8xf32>
    %c142 = arith.constant 142 : index
    %704 = memref.load %arg4[%c142] : memref<144xf32, #tpu.memory_space<smem>>
    %705 = vector.broadcast %704 : f32 to vector<8x8xf32>
    %706 = arith.mulf %705, %558 : vector<8x8xf32>
    %707 = arith.addf %691, %706 : vector<8x8xf32>
    %c35 = arith.constant 35 : index
    %708 = memref.load %arg4[%c35] : memref<144xf32, #tpu.memory_space<smem>>
    %709 = vector.broadcast %708 : f32 to vector<8x8xf32>
    %710 = arith.mulf %709, %560 : vector<8x8xf32>
    %711 = arith.addf %695, %710 : vector<8x8xf32>
    %c71 = arith.constant 71 : index
    %712 = memref.load %arg4[%c71] : memref<144xf32, #tpu.memory_space<smem>>
    %713 = vector.broadcast %712 : f32 to vector<8x8xf32>
    %714 = arith.mulf %713, %560 : vector<8x8xf32>
    %715 = arith.addf %699, %714 : vector<8x8xf32>
    %c107 = arith.constant 107 : index
    %716 = memref.load %arg4[%c107] : memref<144xf32, #tpu.memory_space<smem>>
    %717 = vector.broadcast %716 : f32 to vector<8x8xf32>
    %718 = arith.mulf %717, %560 : vector<8x8xf32>
    %719 = arith.addf %703, %718 : vector<8x8xf32>
    %c143 = arith.constant 143 : index
    %720 = memref.load %arg4[%c143] : memref<144xf32, #tpu.memory_space<smem>>
    %721 = vector.broadcast %720 : f32 to vector<8x8xf32>
    %722 = arith.mulf %721, %560 : vector<8x8xf32>
    %723 = arith.addf %707, %722 : vector<8x8xf32>
    %724 = arith.maximumf %554, %556 : vector<8x8xf32>
    %725 = arith.maximumf %558, %560 : vector<8x8xf32>
    %726 = arith.maximumf %724, %725 : vector<8x8xf32>
    %c3_100 = arith.constant 3 : index
    %727 = memref.load %arg6[%c3_100] : memref<4xf32, #tpu.memory_space<smem>>
    %728 = vector.broadcast %727 : f32 to vector<8x8xf32>
    %729 = arith.mulf %726, %728 : vector<8x8xf32>
    %c3_101 = arith.constant 3 : index
    %730 = memref.load %arg7[%c3_101] : memref<4xf32, #tpu.memory_space<smem>>
    %731 = vector.broadcast %730 : f32 to vector<8x8xf32>
    %732 = arith.addf %729, %731 : vector<8x8xf32>
    %cst_102 = arith.constant 0.000000e+00 : f32
    %733 = vector.broadcast %cst_102 : f32 to vector<8x8xf32>
    %734 = arith.maximumf %732, %733 : vector<8x8xf32>
    %c0_103 = arith.constant 0 : index
    %c7_104 = arith.constant 7 : index
    %c0_105 = arith.constant 0 : index
    %c0_106 = arith.constant 0 : index
    %735 = vector.load %arg8[%c0_103, %c7_104, %c0_105, %c0_106] : memref<2x8x8x8xf32, #tpu.memory_space<vmem>>, vector<1x1x8x8xf32>
    %736 = vector.shape_cast %735 : vector<1x1x8x8xf32> to vector<8x8xf32>
    %737 = vector.shape_cast %734 : vector<8x8xf32> to vector<1x1x8x8xf32>
    tpu.vector_store %arg8[%c0_103, %c7_104, %c0_105, %c0_106], %737 {strides = array<i32>} : memref<2x8x8x8xf32, #tpu.memory_space<vmem>>, vector<1x1x8x8xf32>,
    %c0_107 = arith.constant 0 : index
    %738 = memref.load %arg5[%c0_107] : memref<4xf32, #tpu.memory_space<smem>>
    %739 = vector.broadcast %738 : f32 to vector<8x8xf32>
    %740 = arith.addf %711, %739 : vector<8x8xf32>
    %cst_108 = arith.constant 0.000000e+00 : f32
    %741 = vector.broadcast %cst_108 : f32 to vector<8x8xf32>
    %742 = arith.maximumf %740, %741 : vector<8x8xf32>
    %c0_109 = arith.constant 0 : index
    %c0_110 = arith.constant 0 : index
    %c0_111 = arith.constant 0 : index
    %c0_112 = arith.constant 0 : index
    %743 = vector.load %arg8[%c0_109, %c0_110, %c0_111, %c0_112] : memref<2x8x8x8xf32, #tpu.memory_space<vmem>>, vector<1x1x8x8xf32>
    %744 = vector.shape_cast %743 : vector<1x1x8x8xf32> to vector<8x8xf32>
    %745 = vector.shape_cast %742 : vector<8x8xf32> to vector<1x1x8x8xf32>
    tpu.vector_store %arg8[%c0_109, %c0_110, %c0_111, %c0_112], %745 {strides = array<i32>} : memref<2x8x8x8xf32, #tpu.memory_space<vmem>>, vector<1x1x8x8xf32>,
    %c1_113 = arith.constant 1 : index
    %746 = memref.load %arg5[%c1_113] : memref<4xf32, #tpu.memory_space<smem>>
    %747 = vector.broadcast %746 : f32 to vector<8x8xf32>
    %748 = arith.addf %715, %747 : vector<8x8xf32>
    %cst_114 = arith.constant 0.000000e+00 : f32
    %749 = vector.broadcast %cst_114 : f32 to vector<8x8xf32>
    %750 = arith.maximumf %748, %749 : vector<8x8xf32>
    %c0_115 = arith.constant 0 : index
    %c1_116 = arith.constant 1 : index
    %c0_117 = arith.constant 0 : index
    %c0_118 = arith.constant 0 : index
    %751 = vector.load %arg8[%c0_115, %c1_116, %c0_117, %c0_118] : memref<2x8x8x8xf32, #tpu.memory_space<vmem>>, vector<1x1x8x8xf32>
    %752 = vector.shape_cast %751 : vector<1x1x8x8xf32> to vector<8x8xf32>
    %753 = vector.shape_cast %750 : vector<8x8xf32> to vector<1x1x8x8xf32>
    tpu.vector_store %arg8[%c0_115, %c1_116, %c0_117, %c0_118], %753 {strides = array<i32>} : memref<2x8x8x8xf32, #tpu.memory_space<vmem>>, vector<1x1x8x8xf32>,
    %c2_119 = arith.constant 2 : index
    %754 = memref.load %arg5[%c2_119] : memref<4xf32, #tpu.memory_space<smem>>
    %755 = vector.broadcast %754 : f32 to vector<8x8xf32>
    %756 = arith.addf %719, %755 : vector<8x8xf32>
    %cst_120 = arith.constant 0.000000e+00 : f32
    %757 = vector.broadcast %cst_120 : f32 to vector<8x8xf32>
    %758 = arith.maximumf %756, %757 : vector<8x8xf32>
    %c0_121 = arith.constant 0 : index
    %c2_122 = arith.constant 2 : index
    %c0_123 = arith.constant 0 : index
    %c0_124 = arith.constant 0 : index
    %759 = vector.load %arg8[%c0_121, %c2_122, %c0_123, %c0_124] : memref<2x8x8x8xf32, #tpu.memory_space<vmem>>, vector<1x1x8x8xf32>
    %760 = vector.shape_cast %759 : vector<1x1x8x8xf32> to vector<8x8xf32>
    %761 = vector.shape_cast %758 : vector<8x8xf32> to vector<1x1x8x8xf32>
    tpu.vector_store %arg8[%c0_121, %c2_122, %c0_123, %c0_124], %761 {strides = array<i32>} : memref<2x8x8x8xf32, #tpu.memory_space<vmem>>, vector<1x1x8x8xf32>,
    %c3_125 = arith.constant 3 : index
    %762 = memref.load %arg5[%c3_125] : memref<4xf32, #tpu.memory_space<smem>>
    %763 = vector.broadcast %762 : f32 to vector<8x8xf32>
    %764 = arith.addf %723, %763 : vector<8x8xf32>
    %cst_126 = arith.constant 0.000000e+00 : f32
    %765 = vector.broadcast %cst_126 : f32 to vector<8x8xf32>
    %766 = arith.maximumf %764, %765 : vector<8x8xf32>
    %c0_127 = arith.constant 0 : index
    %c3_128 = arith.constant 3 : index
    %c0_129 = arith.constant 0 : index
    %c0_130 = arith.constant 0 : index
    %767 = vector.load %arg8[%c0_127, %c3_128, %c0_129, %c0_130] : memref<2x8x8x8xf32, #tpu.memory_space<vmem>>, vector<1x1x8x8xf32>
    %768 = vector.shape_cast %767 : vector<1x1x8x8xf32> to vector<8x8xf32>
    %769 = vector.shape_cast %766 : vector<8x8xf32> to vector<1x1x8x8xf32>
    tpu.vector_store %arg8[%c0_127, %c3_128, %c0_129, %c0_130], %769 {strides = array<i32>} : memref<2x8x8x8xf32, #tpu.memory_space<vmem>>, vector<1x1x8x8xf32>,
    %c1_131 = arith.constant 1 : index
    %c0_132 = arith.constant 0 : index
    %c0_133 = arith.constant 0 : index
    %c0_134 = arith.constant 0 : index
    %770 = vector.load %arg3[%c1_131, %c0_132, %c0_133, %c0_134] : memref<2x1x8x8xf32, #tpu.memory_space<vmem>>, vector<1x1x8x8xf32>
    %771 = vector.shape_cast %770 : vector<1x1x8x8xf32> to vector<8x8xf32>
    %c1_135 = arith.constant 1 : index
    %c0_136 = arith.constant 0 : index
    %c0_137 = arith.constant 0 : index
    %c0_138 = arith.constant 0 : index
    %772 = vector.load %arg2[%c1_135, %c0_136, %c0_137, %c0_138] : memref<2x16x8x8xf32, #tpu.memory_space<vmem>>, vector<1x1x8x8xf32>
    %773 = vector.shape_cast %772 : vector<1x1x8x8xf32> to vector<8x8xf32>
    %c1_139 = arith.constant 1 : index
    %c4_140 = arith.constant 4 : index
    %c0_141 = arith.constant 0 : index
    %c0_142 = arith.constant 0 : index
    %774 = vector.load %arg2[%c1_139, %c4_140, %c0_141, %c0_142] : memref<2x16x8x8xf32, #tpu.memory_space<vmem>>, vector<1x1x8x8xf32>
    %775 = vector.shape_cast %774 : vector<1x1x8x8xf32> to vector<8x8xf32>
    %c1_143 = arith.constant 1 : index
    %c8_144 = arith.constant 8 : index
    %c0_145 = arith.constant 0 : index
    %c0_146 = arith.constant 0 : index
    %776 = vector.load %arg2[%c1_143, %c8_144, %c0_145, %c0_146] : memref<2x16x8x8xf32, #tpu.memory_space<vmem>>, vector<1x1x8x8xf32>
    %777 = vector.shape_cast %776 : vector<1x1x8x8xf32> to vector<8x8xf32>
    %c1_147 = arith.constant 1 : index
    %c12_148 = arith.constant 12 : index
    %c0_149 = arith.constant 0 : index
    %c0_150 = arith.constant 0 : index
    %778 = vector.load %arg2[%c1_147, %c12_148, %c0_149, %c0_150] : memref<2x16x8x8xf32, #tpu.memory_space<vmem>>, vector<1x1x8x8xf32>
    %779 = vector.shape_cast %778 : vector<1x1x8x8xf32> to vector<8x8xf32>
    %cst_151 = arith.constant 0.000000e+00 : f32
    %780 = vector.broadcast %cst_151 : f32 to vector<8x1xf32>
    %781 = vector.extract_strided_slice %775 {offsets = [0, 0], sizes = [8, 7], strides = [1, 1]} : vector<8x8xf32> to vector<8x7xf32>
    %782 = tpu.concatenate %780, %781 in 1 : vector<8x1xf32>, vector<8x7xf32> -> vector<8x8xf32>
    %cst_152 = arith.constant 0.000000e+00 : f32
    %783 = vector.broadcast %cst_152 : f32 to vector<8x1xf32>
    %784 = vector.extract_strided_slice %779 {offsets = [0, 0], sizes = [8, 7], strides = [1, 1]} : vector<8x8xf32> to vector<8x7xf32>
    %785 = tpu.concatenate %783, %784 in 1 : vector<8x1xf32>, vector<8x7xf32> -> vector<8x8xf32>
    %786 = vector.extract_strided_slice %771 {offsets = [0, 0], sizes = [1, 8], strides = [1, 1]} : vector<8x8xf32> to vector<1x8xf32>
    %787 = vector.shape_cast %786 : vector<1x8xf32> to vector<8xf32>
    %788 = vector.shape_cast %787 : vector<8xf32> to vector<1x8xf32>
    %789 = vector.extract_strided_slice %777 {offsets = [0, 0], sizes = [7, 8], strides = [1, 1]} : vector<8x8xf32> to vector<7x8xf32>
    %790 = tpu.concatenate %788, %789 in 0 : vector<1x8xf32>, vector<7x8xf32> -> vector<8x8xf32>
    %791 = vector.extract_strided_slice %771 {offsets = [4, 0], sizes = [1, 8], strides = [1, 1]} : vector<8x8xf32> to vector<1x8xf32>
    %792 = vector.shape_cast %791 : vector<1x8xf32> to vector<8xf32>
    %793 = vector.shape_cast %792 : vector<8xf32> to vector<1x8xf32>
    %794 = vector.extract_strided_slice %779 {offsets = [0, 0], sizes = [7, 8], strides = [1, 1]} : vector<8x8xf32> to vector<7x8xf32>
    %795 = tpu.concatenate %793, %794 in 0 : vector<1x8xf32>, vector<7x8xf32> -> vector<8x8xf32>
    %cst_153 = arith.constant 0.000000e+00 : f32
    %796 = vector.broadcast %cst_153 : f32 to vector<8x1xf32>
    %797 = vector.extract_strided_slice %795 {offsets = [0, 0], sizes = [8, 7], strides = [1, 1]} : vector<8x8xf32> to vector<8x7xf32>
    %798 = tpu.concatenate %796, %797 in 1 : vector<8x1xf32>, vector<8x7xf32> -> vector<8x8xf32>
    %c0_154 = arith.constant 0 : index
    %799 = memref.load %arg4[%c0_154] : memref<144xf32, #tpu.memory_space<smem>>
    %800 = vector.broadcast %799 : f32 to vector<8x8xf32>
    %801 = arith.mulf %800, %798 : vector<8x8xf32>
    %c36_155 = arith.constant 36 : index
    %802 = memref.load %arg4[%c36_155] : memref<144xf32, #tpu.memory_space<smem>>
    %803 = vector.broadcast %802 : f32 to vector<8x8xf32>
    %804 = arith.mulf %803, %798 : vector<8x8xf32>
    %c72_156 = arith.constant 72 : index
    %805 = memref.load %arg4[%c72_156] : memref<144xf32, #tpu.memory_space<smem>>
    %806 = vector.broadcast %805 : f32 to vector<8x8xf32>
    %807 = arith.mulf %806, %798 : vector<8x8xf32>
    %c108_157 = arith.constant 108 : index
    %808 = memref.load %arg4[%c108_157] : memref<144xf32, #tpu.memory_space<smem>>
    %809 = vector.broadcast %808 : f32 to vector<8x8xf32>
    %810 = arith.mulf %809, %798 : vector<8x8xf32>
    %c1_158 = arith.constant 1 : index
    %811 = memref.load %arg4[%c1_158] : memref<144xf32, #tpu.memory_space<smem>>
    %812 = vector.broadcast %811 : f32 to vector<8x8xf32>
    %813 = arith.mulf %812, %790 : vector<8x8xf32>
    %814 = arith.addf %801, %813 : vector<8x8xf32>
    %c37_159 = arith.constant 37 : index
    %815 = memref.load %arg4[%c37_159] : memref<144xf32, #tpu.memory_space<smem>>
    %816 = vector.broadcast %815 : f32 to vector<8x8xf32>
    %817 = arith.mulf %816, %790 : vector<8x8xf32>
    %818 = arith.addf %804, %817 : vector<8x8xf32>
    %c73_160 = arith.constant 73 : index
    %819 = memref.load %arg4[%c73_160] : memref<144xf32, #tpu.memory_space<smem>>
    %820 = vector.broadcast %819 : f32 to vector<8x8xf32>
    %821 = arith.mulf %820, %790 : vector<8x8xf32>
    %822 = arith.addf %807, %821 : vector<8x8xf32>
    %c109_161 = arith.constant 109 : index
    %823 = memref.load %arg4[%c109_161] : memref<144xf32, #tpu.memory_space<smem>>
    %824 = vector.broadcast %823 : f32 to vector<8x8xf32>
    %825 = arith.mulf %824, %790 : vector<8x8xf32>
    %826 = arith.addf %810, %825 : vector<8x8xf32>
    %c2_162 = arith.constant 2 : index
    %827 = memref.load %arg4[%c2_162] : memref<144xf32, #tpu.memory_space<smem>>
    %828 = vector.broadcast %827 : f32 to vector<8x8xf32>
    %829 = arith.mulf %828, %795 : vector<8x8xf32>
    %830 = arith.addf %814, %829 : vector<8x8xf32>
    %c38_163 = arith.constant 38 : index
    %831 = memref.load %arg4[%c38_163] : memref<144xf32, #tpu.memory_space<smem>>
    %832 = vector.broadcast %831 : f32 to vector<8x8xf32>
    %833 = arith.mulf %832, %795 : vector<8x8xf32>
    %834 = arith.addf %818, %833 : vector<8x8xf32>
    %c74_164 = arith.constant 74 : index
    %835 = memref.load %arg4[%c74_164] : memref<144xf32, #tpu.memory_space<smem>>
    %836 = vector.broadcast %835 : f32 to vector<8x8xf32>
    %837 = arith.mulf %836, %795 : vector<8x8xf32>
    %838 = arith.addf %822, %837 : vector<8x8xf32>
    %c110_165 = arith.constant 110 : index
    %839 = memref.load %arg4[%c110_165] : memref<144xf32, #tpu.memory_space<smem>>
    %840 = vector.broadcast %839 : f32 to vector<8x8xf32>
    %841 = arith.mulf %840, %795 : vector<8x8xf32>
    %842 = arith.addf %826, %841 : vector<8x8xf32>
    %c3_166 = arith.constant 3 : index
    %843 = memref.load %arg4[%c3_166] : memref<144xf32, #tpu.memory_space<smem>>
    %844 = vector.broadcast %843 : f32 to vector<8x8xf32>
    %845 = arith.mulf %844, %782 : vector<8x8xf32>
    %846 = arith.addf %830, %845 : vector<8x8xf32>
    %c39_167 = arith.constant 39 : index
    %847 = memref.load %arg4[%c39_167] : memref<144xf32, #tpu.memory_space<smem>>
    %848 = vector.broadcast %847 : f32 to vector<8x8xf32>
    %849 = arith.mulf %848, %782 : vector<8x8xf32>
    %850 = arith.addf %834, %849 : vector<8x8xf32>
    %c75_168 = arith.constant 75 : index
    %851 = memref.load %arg4[%c75_168] : memref<144xf32, #tpu.memory_space<smem>>
    %852 = vector.broadcast %851 : f32 to vector<8x8xf32>
    %853 = arith.mulf %852, %782 : vector<8x8xf32>
    %854 = arith.addf %838, %853 : vector<8x8xf32>
    %c111_169 = arith.constant 111 : index
    %855 = memref.load %arg4[%c111_169] : memref<144xf32, #tpu.memory_space<smem>>
    %856 = vector.broadcast %855 : f32 to vector<8x8xf32>
    %857 = arith.mulf %856, %782 : vector<8x8xf32>
    %858 = arith.addf %842, %857 : vector<8x8xf32>
    %c4_170 = arith.constant 4 : index
    %859 = memref.load %arg4[%c4_170] : memref<144xf32, #tpu.memory_space<smem>>
    %860 = vector.broadcast %859 : f32 to vector<8x8xf32>
    %861 = arith.mulf %860, %773 : vector<8x8xf32>
    %862 = arith.addf %846, %861 : vector<8x8xf32>
    %c40_171 = arith.constant 40 : index
    %863 = memref.load %arg4[%c40_171] : memref<144xf32, #tpu.memory_space<smem>>
    %864 = vector.broadcast %863 : f32 to vector<8x8xf32>
    %865 = arith.mulf %864, %773 : vector<8x8xf32>
    %866 = arith.addf %850, %865 : vector<8x8xf32>
    %c76_172 = arith.constant 76 : index
    %867 = memref.load %arg4[%c76_172] : memref<144xf32, #tpu.memory_space<smem>>
    %868 = vector.broadcast %867 : f32 to vector<8x8xf32>
    %869 = arith.mulf %868, %773 : vector<8x8xf32>
    %870 = arith.addf %854, %869 : vector<8x8xf32>
    %c112_173 = arith.constant 112 : index
    %871 = memref.load %arg4[%c112_173] : memref<144xf32, #tpu.memory_space<smem>>
    %872 = vector.broadcast %871 : f32 to vector<8x8xf32>
    %873 = arith.mulf %872, %773 : vector<8x8xf32>
    %874 = arith.addf %858, %873 : vector<8x8xf32>
    %c5_174 = arith.constant 5 : index
    %875 = memref.load %arg4[%c5_174] : memref<144xf32, #tpu.memory_space<smem>>
    %876 = vector.broadcast %875 : f32 to vector<8x8xf32>
    %877 = arith.mulf %876, %775 : vector<8x8xf32>
    %878 = arith.addf %862, %877 : vector<8x8xf32>
    %c41_175 = arith.constant 41 : index
    %879 = memref.load %arg4[%c41_175] : memref<144xf32, #tpu.memory_space<smem>>
    %880 = vector.broadcast %879 : f32 to vector<8x8xf32>
    %881 = arith.mulf %880, %775 : vector<8x8xf32>
    %882 = arith.addf %866, %881 : vector<8x8xf32>
    %c77_176 = arith.constant 77 : index
    %883 = memref.load %arg4[%c77_176] : memref<144xf32, #tpu.memory_space<smem>>
    %884 = vector.broadcast %883 : f32 to vector<8x8xf32>
    %885 = arith.mulf %884, %775 : vector<8x8xf32>
    %886 = arith.addf %870, %885 : vector<8x8xf32>
    %c113_177 = arith.constant 113 : index
    %887 = memref.load %arg4[%c113_177] : memref<144xf32, #tpu.memory_space<smem>>
    %888 = vector.broadcast %887 : f32 to vector<8x8xf32>
    %889 = arith.mulf %888, %775 : vector<8x8xf32>
    %890 = arith.addf %874, %889 : vector<8x8xf32>
    %c6_178 = arith.constant 6 : index
    %891 = memref.load %arg4[%c6_178] : memref<144xf32, #tpu.memory_space<smem>>
    %892 = vector.broadcast %891 : f32 to vector<8x8xf32>
    %893 = arith.mulf %892, %785 : vector<8x8xf32>
    %894 = arith.addf %878, %893 : vector<8x8xf32>
    %c42_179 = arith.constant 42 : index
    %895 = memref.load %arg4[%c42_179] : memref<144xf32, #tpu.memory_space<smem>>
    %896 = vector.broadcast %895 : f32 to vector<8x8xf32>
    %897 = arith.mulf %896, %785 : vector<8x8xf32>
    %898 = arith.addf %882, %897 : vector<8x8xf32>
    %c78_180 = arith.constant 78 : index
    %899 = memref.load %arg4[%c78_180] : memref<144xf32, #tpu.memory_space<smem>>
    %900 = vector.broadcast %899 : f32 to vector<8x8xf32>
    %901 = arith.mulf %900, %785 : vector<8x8xf32>
    %902 = arith.addf %886, %901 : vector<8x8xf32>
    %c114_181 = arith.constant 114 : index
    %903 = memref.load %arg4[%c114_181] : memref<144xf32, #tpu.memory_space<smem>>
    %904 = vector.broadcast %903 : f32 to vector<8x8xf32>
    %905 = arith.mulf %904, %785 : vector<8x8xf32>
    %906 = arith.addf %890, %905 : vector<8x8xf32>
    %c7_182 = arith.constant 7 : index
    %907 = memref.load %arg4[%c7_182] : memref<144xf32, #tpu.memory_space<smem>>
    %908 = vector.broadcast %907 : f32 to vector<8x8xf32>
    %909 = arith.mulf %908, %777 : vector<8x8xf32>
    %910 = arith.addf %894, %909 : vector<8x8xf32>
    %c43_183 = arith.constant 43 : index
    %911 = memref.load %arg4[%c43_183] : memref<144xf32, #tpu.memory_space<smem>>
    %912 = vector.broadcast %911 : f32 to vector<8x8xf32>
    %913 = arith.mulf %912, %777 : vector<8x8xf32>
    %914 = arith.addf %898, %913 : vector<8x8xf32>
    %c79_184 = arith.constant 79 : index
    %915 = memref.load %arg4[%c79_184] : memref<144xf32, #tpu.memory_space<smem>>
    %916 = vector.broadcast %915 : f32 to vector<8x8xf32>
    %917 = arith.mulf %916, %777 : vector<8x8xf32>
    %918 = arith.addf %902, %917 : vector<8x8xf32>
    %c115_185 = arith.constant 115 : index
    %919 = memref.load %arg4[%c115_185] : memref<144xf32, #tpu.memory_space<smem>>
    %920 = vector.broadcast %919 : f32 to vector<8x8xf32>
    %921 = arith.mulf %920, %777 : vector<8x8xf32>
    %922 = arith.addf %906, %921 : vector<8x8xf32>
    %c8_186 = arith.constant 8 : index
    %923 = memref.load %arg4[%c8_186] : memref<144xf32, #tpu.memory_space<smem>>
    %924 = vector.broadcast %923 : f32 to vector<8x8xf32>
    %925 = arith.mulf %924, %779 : vector<8x8xf32>
    %926 = arith.addf %910, %925 : vector<8x8xf32>
    %c44_187 = arith.constant 44 : index
    %927 = memref.load %arg4[%c44_187] : memref<144xf32, #tpu.memory_space<smem>>
    %928 = vector.broadcast %927 : f32 to vector<8x8xf32>
    %929 = arith.mulf %928, %779 : vector<8x8xf32>
    %930 = arith.addf %914, %929 : vector<8x8xf32>
    %c80_188 = arith.constant 80 : index
    %931 = memref.load %arg4[%c80_188] : memref<144xf32, #tpu.memory_space<smem>>
    %932 = vector.broadcast %931 : f32 to vector<8x8xf32>
    %933 = arith.mulf %932, %779 : vector<8x8xf32>
    %934 = arith.addf %918, %933 : vector<8x8xf32>
    %c116_189 = arith.constant 116 : index
    %935 = memref.load %arg4[%c116_189] : memref<144xf32, #tpu.memory_space<smem>>
    %936 = vector.broadcast %935 : f32 to vector<8x8xf32>
    %937 = arith.mulf %936, %779 : vector<8x8xf32>
    %938 = arith.addf %922, %937 : vector<8x8xf32>
    %939 = arith.maximumf %773, %775 : vector<8x8xf32>
    %940 = arith.maximumf %777, %779 : vector<8x8xf32>
    %941 = arith.maximumf %939, %940 : vector<8x8xf32>
    %c0_190 = arith.constant 0 : index
    %942 = memref.load %arg6[%c0_190] : memref<4xf32, #tpu.memory_space<smem>>
    %943 = vector.broadcast %942 : f32 to vector<8x8xf32>
    %944 = arith.mulf %941, %943 : vector<8x8xf32>
    %c0_191 = arith.constant 0 : index
    %945 = memref.load %arg7[%c0_191] : memref<4xf32, #tpu.memory_space<smem>>
    %946 = vector.broadcast %945 : f32 to vector<8x8xf32>
    %947 = arith.addf %944, %946 : vector<8x8xf32>
    %cst_192 = arith.constant 0.000000e+00 : f32
    %948 = vector.broadcast %cst_192 : f32 to vector<8x8xf32>
    %949 = arith.maximumf %947, %948 : vector<8x8xf32>
    %c1_193 = arith.constant 1 : index
    %c4_194 = arith.constant 4 : index
    %c0_195 = arith.constant 0 : index
    %c0_196 = arith.constant 0 : index
    %950 = vector.load %arg8[%c1_193, %c4_194, %c0_195, %c0_196] : memref<2x8x8x8xf32, #tpu.memory_space<vmem>>, vector<1x1x8x8xf32>
    %951 = vector.shape_cast %950 : vector<1x1x8x8xf32> to vector<8x8xf32>
    %952 = vector.shape_cast %949 : vector<8x8xf32> to vector<1x1x8x8xf32>
    tpu.vector_store %arg8[%c1_193, %c4_194, %c0_195, %c0_196], %952 {strides = array<i32>} : memref<2x8x8x8xf32, #tpu.memory_space<vmem>>, vector<1x1x8x8xf32>,
    %c1_197 = arith.constant 1 : index
    %c1_198 = arith.constant 1 : index
    %c0_199 = arith.constant 0 : index
    %c0_200 = arith.constant 0 : index
    %953 = vector.load %arg2[%c1_197, %c1_198, %c0_199, %c0_200] : memref<2x16x8x8xf32, #tpu.memory_space<vmem>>, vector<1x1x8x8xf32>
    %954 = vector.shape_cast %953 : vector<1x1x8x8xf32> to vector<8x8xf32>
    %c1_201 = arith.constant 1 : index
    %c5_202 = arith.constant 5 : index
    %c0_203 = arith.constant 0 : index
    %c0_204 = arith.constant 0 : index
    %955 = vector.load %arg2[%c1_201, %c5_202, %c0_203, %c0_204] : memref<2x16x8x8xf32, #tpu.memory_space<vmem>>, vector<1x1x8x8xf32>
    %956 = vector.shape_cast %955 : vector<1x1x8x8xf32> to vector<8x8xf32>
    %c1_205 = arith.constant 1 : index
    %c9_206 = arith.constant 9 : index
    %c0_207 = arith.constant 0 : index
    %c0_208 = arith.constant 0 : index
    %957 = vector.load %arg2[%c1_205, %c9_206, %c0_207, %c0_208] : memref<2x16x8x8xf32, #tpu.memory_space<vmem>>, vector<1x1x8x8xf32>
    %958 = vector.shape_cast %957 : vector<1x1x8x8xf32> to vector<8x8xf32>
    %c1_209 = arith.constant 1 : index
    %c13_210 = arith.constant 13 : index
    %c0_211 = arith.constant 0 : index
    %c0_212 = arith.constant 0 : index
    %959 = vector.load %arg2[%c1_209, %c13_210, %c0_211, %c0_212] : memref<2x16x8x8xf32, #tpu.memory_space<vmem>>, vector<1x1x8x8xf32>
    %960 = vector.shape_cast %959 : vector<1x1x8x8xf32> to vector<8x8xf32>
    %cst_213 = arith.constant 0.000000e+00 : f32
    %961 = vector.broadcast %cst_213 : f32 to vector<8x1xf32>
    %962 = vector.extract_strided_slice %956 {offsets = [0, 0], sizes = [8, 7], strides = [1, 1]} : vector<8x8xf32> to vector<8x7xf32>
    %963 = tpu.concatenate %961, %962 in 1 : vector<8x1xf32>, vector<8x7xf32> -> vector<8x8xf32>
    %cst_214 = arith.constant 0.000000e+00 : f32
    %964 = vector.broadcast %cst_214 : f32 to vector<8x1xf32>
    %965 = vector.extract_strided_slice %960 {offsets = [0, 0], sizes = [8, 7], strides = [1, 1]} : vector<8x8xf32> to vector<8x7xf32>
    %966 = tpu.concatenate %964, %965 in 1 : vector<8x1xf32>, vector<8x7xf32> -> vector<8x8xf32>
    %967 = vector.extract_strided_slice %771 {offsets = [1, 0], sizes = [1, 8], strides = [1, 1]} : vector<8x8xf32> to vector<1x8xf32>
    %968 = vector.shape_cast %967 : vector<1x8xf32> to vector<8xf32>
    %969 = vector.shape_cast %968 : vector<8xf32> to vector<1x8xf32>
    %970 = vector.extract_strided_slice %958 {offsets = [0, 0], sizes = [7, 8], strides = [1, 1]} : vector<8x8xf32> to vector<7x8xf32>
    %971 = tpu.concatenate %969, %970 in 0 : vector<1x8xf32>, vector<7x8xf32> -> vector<8x8xf32>
    %972 = vector.extract_strided_slice %771 {offsets = [5, 0], sizes = [1, 8], strides = [1, 1]} : vector<8x8xf32> to vector<1x8xf32>
    %973 = vector.shape_cast %972 : vector<1x8xf32> to vector<8xf32>
    %974 = vector.shape_cast %973 : vector<8xf32> to vector<1x8xf32>
    %975 = vector.extract_strided_slice %960 {offsets = [0, 0], sizes = [7, 8], strides = [1, 1]} : vector<8x8xf32> to vector<7x8xf32>
    %976 = tpu.concatenate %974, %975 in 0 : vector<1x8xf32>, vector<7x8xf32> -> vector<8x8xf32>
    %cst_215 = arith.constant 0.000000e+00 : f32
    %977 = vector.broadcast %cst_215 : f32 to vector<8x1xf32>
    %978 = vector.extract_strided_slice %976 {offsets = [0, 0], sizes = [8, 7], strides = [1, 1]} : vector<8x8xf32> to vector<8x7xf32>
    %979 = tpu.concatenate %977, %978 in 1 : vector<8x1xf32>, vector<8x7xf32> -> vector<8x8xf32>
    %c9_216 = arith.constant 9 : index
    %980 = memref.load %arg4[%c9_216] : memref<144xf32, #tpu.memory_space<smem>>
    %981 = vector.broadcast %980 : f32 to vector<8x8xf32>
    %982 = arith.mulf %981, %979 : vector<8x8xf32>
    %983 = arith.addf %926, %982 : vector<8x8xf32>
    %c45_217 = arith.constant 45 : index
    %984 = memref.load %arg4[%c45_217] : memref<144xf32, #tpu.memory_space<smem>>
    %985 = vector.broadcast %984 : f32 to vector<8x8xf32>
    %986 = arith.mulf %985, %979 : vector<8x8xf32>
    %987 = arith.addf %930, %986 : vector<8x8xf32>
    %c81_218 = arith.constant 81 : index
    %988 = memref.load %arg4[%c81_218] : memref<144xf32, #tpu.memory_space<smem>>
    %989 = vector.broadcast %988 : f32 to vector<8x8xf32>
    %990 = arith.mulf %989, %979 : vector<8x8xf32>
    %991 = arith.addf %934, %990 : vector<8x8xf32>
    %c117_219 = arith.constant 117 : index
    %992 = memref.load %arg4[%c117_219] : memref<144xf32, #tpu.memory_space<smem>>
    %993 = vector.broadcast %992 : f32 to vector<8x8xf32>
    %994 = arith.mulf %993, %979 : vector<8x8xf32>
    %995 = arith.addf %938, %994 : vector<8x8xf32>
    %c10_220 = arith.constant 10 : index
    %996 = memref.load %arg4[%c10_220] : memref<144xf32, #tpu.memory_space<smem>>
    %997 = vector.broadcast %996 : f32 to vector<8x8xf32>
    %998 = arith.mulf %997, %971 : vector<8x8xf32>
    %999 = arith.addf %983, %998 : vector<8x8xf32>
    %c46_221 = arith.constant 46 : index
    %1000 = memref.load %arg4[%c46_221] : memref<144xf32, #tpu.memory_space<smem>>
    %1001 = vector.broadcast %1000 : f32 to vector<8x8xf32>
    %1002 = arith.mulf %1001, %971 : vector<8x8xf32>
    %1003 = arith.addf %987, %1002 : vector<8x8xf32>
    %c82_222 = arith.constant 82 : index
    %1004 = memref.load %arg4[%c82_222] : memref<144xf32, #tpu.memory_space<smem>>
    %1005 = vector.broadcast %1004 : f32 to vector<8x8xf32>
    %1006 = arith.mulf %1005, %971 : vector<8x8xf32>
    %1007 = arith.addf %991, %1006 : vector<8x8xf32>
    %c118_223 = arith.constant 118 : index
    %1008 = memref.load %arg4[%c118_223] : memref<144xf32, #tpu.memory_space<smem>>
    %1009 = vector.broadcast %1008 : f32 to vector<8x8xf32>
    %1010 = arith.mulf %1009, %971 : vector<8x8xf32>
    %1011 = arith.addf %995, %1010 : vector<8x8xf32>
    %c11_224 = arith.constant 11 : index
    %1012 = memref.load %arg4[%c11_224] : memref<144xf32, #tpu.memory_space<smem>>
    %1013 = vector.broadcast %1012 : f32 to vector<8x8xf32>
    %1014 = arith.mulf %1013, %976 : vector<8x8xf32>
    %1015 = arith.addf %999, %1014 : vector<8x8xf32>
    %c47_225 = arith.constant 47 : index
    %1016 = memref.load %arg4[%c47_225] : memref<144xf32, #tpu.memory_space<smem>>
    %1017 = vector.broadcast %1016 : f32 to vector<8x8xf32>
    %1018 = arith.mulf %1017, %976 : vector<8x8xf32>
    %1019 = arith.addf %1003, %1018 : vector<8x8xf32>
    %c83_226 = arith.constant 83 : index
    %1020 = memref.load %arg4[%c83_226] : memref<144xf32, #tpu.memory_space<smem>>
    %1021 = vector.broadcast %1020 : f32 to vector<8x8xf32>
    %1022 = arith.mulf %1021, %976 : vector<8x8xf32>
    %1023 = arith.addf %1007, %1022 : vector<8x8xf32>
    %c119_227 = arith.constant 119 : index
    %1024 = memref.load %arg4[%c119_227] : memref<144xf32, #tpu.memory_space<smem>>
    %1025 = vector.broadcast %1024 : f32 to vector<8x8xf32>
    %1026 = arith.mulf %1025, %976 : vector<8x8xf32>
    %1027 = arith.addf %1011, %1026 : vector<8x8xf32>
    %c12_228 = arith.constant 12 : index
    %1028 = memref.load %arg4[%c12_228] : memref<144xf32, #tpu.memory_space<smem>>
    %1029 = vector.broadcast %1028 : f32 to vector<8x8xf32>
    %1030 = arith.mulf %1029, %963 : vector<8x8xf32>
    %1031 = arith.addf %1015, %1030 : vector<8x8xf32>
    %c48_229 = arith.constant 48 : index
    %1032 = memref.load %arg4[%c48_229] : memref<144xf32, #tpu.memory_space<smem>>
    %1033 = vector.broadcast %1032 : f32 to vector<8x8xf32>
    %1034 = arith.mulf %1033, %963 : vector<8x8xf32>
    %1035 = arith.addf %1019, %1034 : vector<8x8xf32>
    %c84_230 = arith.constant 84 : index
    %1036 = memref.load %arg4[%c84_230] : memref<144xf32, #tpu.memory_space<smem>>
    %1037 = vector.broadcast %1036 : f32 to vector<8x8xf32>
    %1038 = arith.mulf %1037, %963 : vector<8x8xf32>
    %1039 = arith.addf %1023, %1038 : vector<8x8xf32>
    %c120_231 = arith.constant 120 : index
    %1040 = memref.load %arg4[%c120_231] : memref<144xf32, #tpu.memory_space<smem>>
    %1041 = vector.broadcast %1040 : f32 to vector<8x8xf32>
    %1042 = arith.mulf %1041, %963 : vector<8x8xf32>
    %1043 = arith.addf %1027, %1042 : vector<8x8xf32>
    %c13_232 = arith.constant 13 : index
    %1044 = memref.load %arg4[%c13_232] : memref<144xf32, #tpu.memory_space<smem>>
    %1045 = vector.broadcast %1044 : f32 to vector<8x8xf32>
    %1046 = arith.mulf %1045, %954 : vector<8x8xf32>
    %1047 = arith.addf %1031, %1046 : vector<8x8xf32>
    %c49_233 = arith.constant 49 : index
    %1048 = memref.load %arg4[%c49_233] : memref<144xf32, #tpu.memory_space<smem>>
    %1049 = vector.broadcast %1048 : f32 to vector<8x8xf32>
    %1050 = arith.mulf %1049, %954 : vector<8x8xf32>
    %1051 = arith.addf %1035, %1050 : vector<8x8xf32>
    %c85_234 = arith.constant 85 : index
    %1052 = memref.load %arg4[%c85_234] : memref<144xf32, #tpu.memory_space<smem>>
    %1053 = vector.broadcast %1052 : f32 to vector<8x8xf32>
    %1054 = arith.mulf %1053, %954 : vector<8x8xf32>
    %1055 = arith.addf %1039, %1054 : vector<8x8xf32>
    %c121_235 = arith.constant 121 : index
    %1056 = memref.load %arg4[%c121_235] : memref<144xf32, #tpu.memory_space<smem>>
    %1057 = vector.broadcast %1056 : f32 to vector<8x8xf32>
    %1058 = arith.mulf %1057, %954 : vector<8x8xf32>
    %1059 = arith.addf %1043, %1058 : vector<8x8xf32>
    %c14_236 = arith.constant 14 : index
    %1060 = memref.load %arg4[%c14_236] : memref<144xf32, #tpu.memory_space<smem>>
    %1061 = vector.broadcast %1060 : f32 to vector<8x8xf32>
    %1062 = arith.mulf %1061, %956 : vector<8x8xf32>
    %1063 = arith.addf %1047, %1062 : vector<8x8xf32>
    %c50_237 = arith.constant 50 : index
    %1064 = memref.load %arg4[%c50_237] : memref<144xf32, #tpu.memory_space<smem>>
    %1065 = vector.broadcast %1064 : f32 to vector<8x8xf32>
    %1066 = arith.mulf %1065, %956 : vector<8x8xf32>
    %1067 = arith.addf %1051, %1066 : vector<8x8xf32>
    %c86_238 = arith.constant 86 : index
    %1068 = memref.load %arg4[%c86_238] : memref<144xf32, #tpu.memory_space<smem>>
    %1069 = vector.broadcast %1068 : f32 to vector<8x8xf32>
    %1070 = arith.mulf %1069, %956 : vector<8x8xf32>
    %1071 = arith.addf %1055, %1070 : vector<8x8xf32>
    %c122_239 = arith.constant 122 : index
    %1072 = memref.load %arg4[%c122_239] : memref<144xf32, #tpu.memory_space<smem>>
    %1073 = vector.broadcast %1072 : f32 to vector<8x8xf32>
    %1074 = arith.mulf %1073, %956 : vector<8x8xf32>
    %1075 = arith.addf %1059, %1074 : vector<8x8xf32>
    %c15_240 = arith.constant 15 : index
    %1076 = memref.load %arg4[%c15_240] : memref<144xf32, #tpu.memory_space<smem>>
    %1077 = vector.broadcast %1076 : f32 to vector<8x8xf32>
    %1078 = arith.mulf %1077, %966 : vector<8x8xf32>
    %1079 = arith.addf %1063, %1078 : vector<8x8xf32>
    %c51_241 = arith.constant 51 : index
    %1080 = memref.load %arg4[%c51_241] : memref<144xf32, #tpu.memory_space<smem>>
    %1081 = vector.broadcast %1080 : f32 to vector<8x8xf32>
    %1082 = arith.mulf %1081, %966 : vector<8x8xf32>
    %1083 = arith.addf %1067, %1082 : vector<8x8xf32>
    %c87_242 = arith.constant 87 : index
    %1084 = memref.load %arg4[%c87_242] : memref<144xf32, #tpu.memory_space<smem>>
    %1085 = vector.broadcast %1084 : f32 to vector<8x8xf32>
    %1086 = arith.mulf %1085, %966 : vector<8x8xf32>
    %1087 = arith.addf %1071, %1086 : vector<8x8xf32>
    %c123_243 = arith.constant 123 : index
    %1088 = memref.load %arg4[%c123_243] : memref<144xf32, #tpu.memory_space<smem>>
    %1089 = vector.broadcast %1088 : f32 to vector<8x8xf32>
    %1090 = arith.mulf %1089, %966 : vector<8x8xf32>
    %1091 = arith.addf %1075, %1090 : vector<8x8xf32>
    %c16_244 = arith.constant 16 : index
    %1092 = memref.load %arg4[%c16_244] : memref<144xf32, #tpu.memory_space<smem>>
    %1093 = vector.broadcast %1092 : f32 to vector<8x8xf32>
    %1094 = arith.mulf %1093, %958 : vector<8x8xf32>
    %1095 = arith.addf %1079, %1094 : vector<8x8xf32>
    %c52_245 = arith.constant 52 : index
    %1096 = memref.load %arg4[%c52_245] : memref<144xf32, #tpu.memory_space<smem>>
    %1097 = vector.broadcast %1096 : f32 to vector<8x8xf32>
    %1098 = arith.mulf %1097, %958 : vector<8x8xf32>
    %1099 = arith.addf %1083, %1098 : vector<8x8xf32>
    %c88_246 = arith.constant 88 : index
    %1100 = memref.load %arg4[%c88_246] : memref<144xf32, #tpu.memory_space<smem>>
    %1101 = vector.broadcast %1100 : f32 to vector<8x8xf32>
    %1102 = arith.mulf %1101, %958 : vector<8x8xf32>
    %1103 = arith.addf %1087, %1102 : vector<8x8xf32>
    %c124_247 = arith.constant 124 : index
    %1104 = memref.load %arg4[%c124_247] : memref<144xf32, #tpu.memory_space<smem>>
    %1105 = vector.broadcast %1104 : f32 to vector<8x8xf32>
    %1106 = arith.mulf %1105, %958 : vector<8x8xf32>
    %1107 = arith.addf %1091, %1106 : vector<8x8xf32>
    %c17_248 = arith.constant 17 : index
    %1108 = memref.load %arg4[%c17_248] : memref<144xf32, #tpu.memory_space<smem>>
    %1109 = vector.broadcast %1108 : f32 to vector<8x8xf32>
    %1110 = arith.mulf %1109, %960 : vector<8x8xf32>
    %1111 = arith.addf %1095, %1110 : vector<8x8xf32>
    %c53_249 = arith.constant 53 : index
    %1112 = memref.load %arg4[%c53_249] : memref<144xf32, #tpu.memory_space<smem>>
    %1113 = vector.broadcast %1112 : f32 to vector<8x8xf32>
    %1114 = arith.mulf %1113, %960 : vector<8x8xf32>
    %1115 = arith.addf %1099, %1114 : vector<8x8xf32>
    %c89_250 = arith.constant 89 : index
    %1116 = memref.load %arg4[%c89_250] : memref<144xf32, #tpu.memory_space<smem>>
    %1117 = vector.broadcast %1116 : f32 to vector<8x8xf32>
    %1118 = arith.mulf %1117, %960 : vector<8x8xf32>
    %1119 = arith.addf %1103, %1118 : vector<8x8xf32>
    %c125_251 = arith.constant 125 : index
    %1120 = memref.load %arg4[%c125_251] : memref<144xf32, #tpu.memory_space<smem>>
    %1121 = vector.broadcast %1120 : f32 to vector<8x8xf32>
    %1122 = arith.mulf %1121, %960 : vector<8x8xf32>
    %1123 = arith.addf %1107, %1122 : vector<8x8xf32>
    %1124 = arith.maximumf %954, %956 : vector<8x8xf32>
    %1125 = arith.maximumf %958, %960 : vector<8x8xf32>
    %1126 = arith.maximumf %1124, %1125 : vector<8x8xf32>
    %c1_252 = arith.constant 1 : index
    %1127 = memref.load %arg6[%c1_252] : memref<4xf32, #tpu.memory_space<smem>>
    %1128 = vector.broadcast %1127 : f32 to vector<8x8xf32>
    %1129 = arith.mulf %1126, %1128 : vector<8x8xf32>
    %c1_253 = arith.constant 1 : index
    %1130 = memref.load %arg7[%c1_253] : memref<4xf32, #tpu.memory_space<smem>>
    %1131 = vector.broadcast %1130 : f32 to vector<8x8xf32>
    %1132 = arith.addf %1129, %1131 : vector<8x8xf32>
    %cst_254 = arith.constant 0.000000e+00 : f32
    %1133 = vector.broadcast %cst_254 : f32 to vector<8x8xf32>
    %1134 = arith.maximumf %1132, %1133 : vector<8x8xf32>
    %c1_255 = arith.constant 1 : index
    %c5_256 = arith.constant 5 : index
    %c0_257 = arith.constant 0 : index
    %c0_258 = arith.constant 0 : index
    %1135 = vector.load %arg8[%c1_255, %c5_256, %c0_257, %c0_258] : memref<2x8x8x8xf32, #tpu.memory_space<vmem>>, vector<1x1x8x8xf32>
    %1136 = vector.shape_cast %1135 : vector<1x1x8x8xf32> to vector<8x8xf32>
    %1137 = vector.shape_cast %1134 : vector<8x8xf32> to vector<1x1x8x8xf32>
    tpu.vector_store %arg8[%c1_255, %c5_256, %c0_257, %c0_258], %1137 {strides = array<i32>} : memref<2x8x8x8xf32, #tpu.memory_space<vmem>>, vector<1x1x8x8xf32>,
    %c1_259 = arith.constant 1 : index
    %c2_260 = arith.constant 2 : index
    %c0_261 = arith.constant 0 : index
    %c0_262 = arith.constant 0 : index
    %1138 = vector.load %arg2[%c1_259, %c2_260, %c0_261, %c0_262] : memref<2x16x8x8xf32, #tpu.memory_space<vmem>>, vector<1x1x8x8xf32>
    %1139 = vector.shape_cast %1138 : vector<1x1x8x8xf32> to vector<8x8xf32>
    %c1_263 = arith.constant 1 : index
    %c6_264 = arith.constant 6 : index
    %c0_265 = arith.constant 0 : index
    %c0_266 = arith.constant 0 : index
    %1140 = vector.load %arg2[%c1_263, %c6_264, %c0_265, %c0_266] : memref<2x16x8x8xf32, #tpu.memory_space<vmem>>, vector<1x1x8x8xf32>
    %1141 = vector.shape_cast %1140 : vector<1x1x8x8xf32> to vector<8x8xf32>
    %c1_267 = arith.constant 1 : index
    %c10_268 = arith.constant 10 : index
    %c0_269 = arith.constant 0 : index
    %c0_270 = arith.constant 0 : index
    %1142 = vector.load %arg2[%c1_267, %c10_268, %c0_269, %c0_270] : memref<2x16x8x8xf32, #tpu.memory_space<vmem>>, vector<1x1x8x8xf32>
    %1143 = vector.shape_cast %1142 : vector<1x1x8x8xf32> to vector<8x8xf32>
    %c1_271 = arith.constant 1 : index
    %c14_272 = arith.constant 14 : index
    %c0_273 = arith.constant 0 : index
    %c0_274 = arith.constant 0 : index
    %1144 = vector.load %arg2[%c1_271, %c14_272, %c0_273, %c0_274] : memref<2x16x8x8xf32, #tpu.memory_space<vmem>>, vector<1x1x8x8xf32>
    %1145 = vector.shape_cast %1144 : vector<1x1x8x8xf32> to vector<8x8xf32>
    %cst_275 = arith.constant 0.000000e+00 : f32
    %1146 = vector.broadcast %cst_275 : f32 to vector<8x1xf32>
    %1147 = vector.extract_strided_slice %1141 {offsets = [0, 0], sizes = [8, 7], strides = [1, 1]} : vector<8x8xf32> to vector<8x7xf32>
    %1148 = tpu.concatenate %1146, %1147 in 1 : vector<8x1xf32>, vector<8x7xf32> -> vector<8x8xf32>
    %cst_276 = arith.constant 0.000000e+00 : f32
    %1149 = vector.broadcast %cst_276 : f32 to vector<8x1xf32>
    %1150 = vector.extract_strided_slice %1145 {offsets = [0, 0], sizes = [8, 7], strides = [1, 1]} : vector<8x8xf32> to vector<8x7xf32>
    %1151 = tpu.concatenate %1149, %1150 in 1 : vector<8x1xf32>, vector<8x7xf32> -> vector<8x8xf32>
    %1152 = vector.extract_strided_slice %771 {offsets = [2, 0], sizes = [1, 8], strides = [1, 1]} : vector<8x8xf32> to vector<1x8xf32>
    %1153 = vector.shape_cast %1152 : vector<1x8xf32> to vector<8xf32>
    %1154 = vector.shape_cast %1153 : vector<8xf32> to vector<1x8xf32>
    %1155 = vector.extract_strided_slice %1143 {offsets = [0, 0], sizes = [7, 8], strides = [1, 1]} : vector<8x8xf32> to vector<7x8xf32>
    %1156 = tpu.concatenate %1154, %1155 in 0 : vector<1x8xf32>, vector<7x8xf32> -> vector<8x8xf32>
    %1157 = vector.extract_strided_slice %771 {offsets = [6, 0], sizes = [1, 8], strides = [1, 1]} : vector<8x8xf32> to vector<1x8xf32>
    %1158 = vector.shape_cast %1157 : vector<1x8xf32> to vector<8xf32>
    %1159 = vector.shape_cast %1158 : vector<8xf32> to vector<1x8xf32>
    %1160 = vector.extract_strided_slice %1145 {offsets = [0, 0], sizes = [7, 8], strides = [1, 1]} : vector<8x8xf32> to vector<7x8xf32>
    %1161 = tpu.concatenate %1159, %1160 in 0 : vector<1x8xf32>, vector<7x8xf32> -> vector<8x8xf32>
    %cst_277 = arith.constant 0.000000e+00 : f32
    %1162 = vector.broadcast %cst_277 : f32 to vector<8x1xf32>
    %1163 = vector.extract_strided_slice %1161 {offsets = [0, 0], sizes = [8, 7], strides = [1, 1]} : vector<8x8xf32> to vector<8x7xf32>
    %1164 = tpu.concatenate %1162, %1163 in 1 : vector<8x1xf32>, vector<8x7xf32> -> vector<8x8xf32>
    %c18_278 = arith.constant 18 : index
    %1165 = memref.load %arg4[%c18_278] : memref<144xf32, #tpu.memory_space<smem>>
    %1166 = vector.broadcast %1165 : f32 to vector<8x8xf32>
    %1167 = arith.mulf %1166, %1164 : vector<8x8xf32>
    %1168 = arith.addf %1111, %1167 : vector<8x8xf32>
    %c54_279 = arith.constant 54 : index
    %1169 = memref.load %arg4[%c54_279] : memref<144xf32, #tpu.memory_space<smem>>
    %1170 = vector.broadcast %1169 : f32 to vector<8x8xf32>
    %1171 = arith.mulf %1170, %1164 : vector<8x8xf32>
    %1172 = arith.addf %1115, %1171 : vector<8x8xf32>
    %c90_280 = arith.constant 90 : index
    %1173 = memref.load %arg4[%c90_280] : memref<144xf32, #tpu.memory_space<smem>>
    %1174 = vector.broadcast %1173 : f32 to vector<8x8xf32>
    %1175 = arith.mulf %1174, %1164 : vector<8x8xf32>
    %1176 = arith.addf %1119, %1175 : vector<8x8xf32>
    %c126_281 = arith.constant 126 : index
    %1177 = memref.load %arg4[%c126_281] : memref<144xf32, #tpu.memory_space<smem>>
    %1178 = vector.broadcast %1177 : f32 to vector<8x8xf32>
    %1179 = arith.mulf %1178, %1164 : vector<8x8xf32>
    %1180 = arith.addf %1123, %1179 : vector<8x8xf32>
    %c19_282 = arith.constant 19 : index
    %1181 = memref.load %arg4[%c19_282] : memref<144xf32, #tpu.memory_space<smem>>
    %1182 = vector.broadcast %1181 : f32 to vector<8x8xf32>
    %1183 = arith.mulf %1182, %1156 : vector<8x8xf32>
    %1184 = arith.addf %1168, %1183 : vector<8x8xf32>
    %c55_283 = arith.constant 55 : index
    %1185 = memref.load %arg4[%c55_283] : memref<144xf32, #tpu.memory_space<smem>>
    %1186 = vector.broadcast %1185 : f32 to vector<8x8xf32>
    %1187 = arith.mulf %1186, %1156 : vector<8x8xf32>
    %1188 = arith.addf %1172, %1187 : vector<8x8xf32>
    %c91_284 = arith.constant 91 : index
    %1189 = memref.load %arg4[%c91_284] : memref<144xf32, #tpu.memory_space<smem>>
    %1190 = vector.broadcast %1189 : f32 to vector<8x8xf32>
    %1191 = arith.mulf %1190, %1156 : vector<8x8xf32>
    %1192 = arith.addf %1176, %1191 : vector<8x8xf32>
    %c127_285 = arith.constant 127 : index
    %1193 = memref.load %arg4[%c127_285] : memref<144xf32, #tpu.memory_space<smem>>
    %1194 = vector.broadcast %1193 : f32 to vector<8x8xf32>
    %1195 = arith.mulf %1194, %1156 : vector<8x8xf32>
    %1196 = arith.addf %1180, %1195 : vector<8x8xf32>
    %c20_286 = arith.constant 20 : index
    %1197 = memref.load %arg4[%c20_286] : memref<144xf32, #tpu.memory_space<smem>>
    %1198 = vector.broadcast %1197 : f32 to vector<8x8xf32>
    %1199 = arith.mulf %1198, %1161 : vector<8x8xf32>
    %1200 = arith.addf %1184, %1199 : vector<8x8xf32>
    %c56_287 = arith.constant 56 : index
    %1201 = memref.load %arg4[%c56_287] : memref<144xf32, #tpu.memory_space<smem>>
    %1202 = vector.broadcast %1201 : f32 to vector<8x8xf32>
    %1203 = arith.mulf %1202, %1161 : vector<8x8xf32>
    %1204 = arith.addf %1188, %1203 : vector<8x8xf32>
    %c92_288 = arith.constant 92 : index
    %1205 = memref.load %arg4[%c92_288] : memref<144xf32, #tpu.memory_space<smem>>
    %1206 = vector.broadcast %1205 : f32 to vector<8x8xf32>
    %1207 = arith.mulf %1206, %1161 : vector<8x8xf32>
    %1208 = arith.addf %1192, %1207 : vector<8x8xf32>
    %c128_289 = arith.constant 128 : index
    %1209 = memref.load %arg4[%c128_289] : memref<144xf32, #tpu.memory_space<smem>>
    %1210 = vector.broadcast %1209 : f32 to vector<8x8xf32>
    %1211 = arith.mulf %1210, %1161 : vector<8x8xf32>
    %1212 = arith.addf %1196, %1211 : vector<8x8xf32>
    %c21_290 = arith.constant 21 : index
    %1213 = memref.load %arg4[%c21_290] : memref<144xf32, #tpu.memory_space<smem>>
    %1214 = vector.broadcast %1213 : f32 to vector<8x8xf32>
    %1215 = arith.mulf %1214, %1148 : vector<8x8xf32>
    %1216 = arith.addf %1200, %1215 : vector<8x8xf32>
    %c57_291 = arith.constant 57 : index
    %1217 = memref.load %arg4[%c57_291] : memref<144xf32, #tpu.memory_space<smem>>
    %1218 = vector.broadcast %1217 : f32 to vector<8x8xf32>
    %1219 = arith.mulf %1218, %1148 : vector<8x8xf32>
    %1220 = arith.addf %1204, %1219 : vector<8x8xf32>
    %c93_292 = arith.constant 93 : index
    %1221 = memref.load %arg4[%c93_292] : memref<144xf32, #tpu.memory_space<smem>>
    %1222 = vector.broadcast %1221 : f32 to vector<8x8xf32>
    %1223 = arith.mulf %1222, %1148 : vector<8x8xf32>
    %1224 = arith.addf %1208, %1223 : vector<8x8xf32>
    %c129_293 = arith.constant 129 : index
    %1225 = memref.load %arg4[%c129_293] : memref<144xf32, #tpu.memory_space<smem>>
    %1226 = vector.broadcast %1225 : f32 to vector<8x8xf32>
    %1227 = arith.mulf %1226, %1148 : vector<8x8xf32>
    %1228 = arith.addf %1212, %1227 : vector<8x8xf32>
    %c22_294 = arith.constant 22 : index
    %1229 = memref.load %arg4[%c22_294] : memref<144xf32, #tpu.memory_space<smem>>
    %1230 = vector.broadcast %1229 : f32 to vector<8x8xf32>
    %1231 = arith.mulf %1230, %1139 : vector<8x8xf32>
    %1232 = arith.addf %1216, %1231 : vector<8x8xf32>
    %c58_295 = arith.constant 58 : index
    %1233 = memref.load %arg4[%c58_295] : memref<144xf32, #tpu.memory_space<smem>>
    %1234 = vector.broadcast %1233 : f32 to vector<8x8xf32>
    %1235 = arith.mulf %1234, %1139 : vector<8x8xf32>
    %1236 = arith.addf %1220, %1235 : vector<8x8xf32>
    %c94_296 = arith.constant 94 : index
    %1237 = memref.load %arg4[%c94_296] : memref<144xf32, #tpu.memory_space<smem>>
    %1238 = vector.broadcast %1237 : f32 to vector<8x8xf32>
    %1239 = arith.mulf %1238, %1139 : vector<8x8xf32>
    %1240 = arith.addf %1224, %1239 : vector<8x8xf32>
    %c130_297 = arith.constant 130 : index
    %1241 = memref.load %arg4[%c130_297] : memref<144xf32, #tpu.memory_space<smem>>
    %1242 = vector.broadcast %1241 : f32 to vector<8x8xf32>
    %1243 = arith.mulf %1242, %1139 : vector<8x8xf32>
    %1244 = arith.addf %1228, %1243 : vector<8x8xf32>
    %c23_298 = arith.constant 23 : index
    %1245 = memref.load %arg4[%c23_298] : memref<144xf32, #tpu.memory_space<smem>>
    %1246 = vector.broadcast %1245 : f32 to vector<8x8xf32>
    %1247 = arith.mulf %1246, %1141 : vector<8x8xf32>
    %1248 = arith.addf %1232, %1247 : vector<8x8xf32>
    %c59_299 = arith.constant 59 : index
    %1249 = memref.load %arg4[%c59_299] : memref<144xf32, #tpu.memory_space<smem>>
    %1250 = vector.broadcast %1249 : f32 to vector<8x8xf32>
    %1251 = arith.mulf %1250, %1141 : vector<8x8xf32>
    %1252 = arith.addf %1236, %1251 : vector<8x8xf32>
    %c95_300 = arith.constant 95 : index
    %1253 = memref.load %arg4[%c95_300] : memref<144xf32, #tpu.memory_space<smem>>
    %1254 = vector.broadcast %1253 : f32 to vector<8x8xf32>
    %1255 = arith.mulf %1254, %1141 : vector<8x8xf32>
    %1256 = arith.addf %1240, %1255 : vector<8x8xf32>
    %c131_301 = arith.constant 131 : index
    %1257 = memref.load %arg4[%c131_301] : memref<144xf32, #tpu.memory_space<smem>>
    %1258 = vector.broadcast %1257 : f32 to vector<8x8xf32>
    %1259 = arith.mulf %1258, %1141 : vector<8x8xf32>
    %1260 = arith.addf %1244, %1259 : vector<8x8xf32>
    %c24_302 = arith.constant 24 : index
    %1261 = memref.load %arg4[%c24_302] : memref<144xf32, #tpu.memory_space<smem>>
    %1262 = vector.broadcast %1261 : f32 to vector<8x8xf32>
    %1263 = arith.mulf %1262, %1151 : vector<8x8xf32>
    %1264 = arith.addf %1248, %1263 : vector<8x8xf32>
    %c60_303 = arith.constant 60 : index
    %1265 = memref.load %arg4[%c60_303] : memref<144xf32, #tpu.memory_space<smem>>
    %1266 = vector.broadcast %1265 : f32 to vector<8x8xf32>
    %1267 = arith.mulf %1266, %1151 : vector<8x8xf32>
    %1268 = arith.addf %1252, %1267 : vector<8x8xf32>
    %c96_304 = arith.constant 96 : index
    %1269 = memref.load %arg4[%c96_304] : memref<144xf32, #tpu.memory_space<smem>>
    %1270 = vector.broadcast %1269 : f32 to vector<8x8xf32>
    %1271 = arith.mulf %1270, %1151 : vector<8x8xf32>
    %1272 = arith.addf %1256, %1271 : vector<8x8xf32>
    %c132_305 = arith.constant 132 : index
    %1273 = memref.load %arg4[%c132_305] : memref<144xf32, #tpu.memory_space<smem>>
    %1274 = vector.broadcast %1273 : f32 to vector<8x8xf32>
    %1275 = arith.mulf %1274, %1151 : vector<8x8xf32>
    %1276 = arith.addf %1260, %1275 : vector<8x8xf32>
    %c25_306 = arith.constant 25 : index
    %1277 = memref.load %arg4[%c25_306] : memref<144xf32, #tpu.memory_space<smem>>
    %1278 = vector.broadcast %1277 : f32 to vector<8x8xf32>
    %1279 = arith.mulf %1278, %1143 : vector<8x8xf32>
    %1280 = arith.addf %1264, %1279 : vector<8x8xf32>
    %c61_307 = arith.constant 61 : index
    %1281 = memref.load %arg4[%c61_307] : memref<144xf32, #tpu.memory_space<smem>>
    %1282 = vector.broadcast %1281 : f32 to vector<8x8xf32>
    %1283 = arith.mulf %1282, %1143 : vector<8x8xf32>
    %1284 = arith.addf %1268, %1283 : vector<8x8xf32>
    %c97_308 = arith.constant 97 : index
    %1285 = memref.load %arg4[%c97_308] : memref<144xf32, #tpu.memory_space<smem>>
    %1286 = vector.broadcast %1285 : f32 to vector<8x8xf32>
    %1287 = arith.mulf %1286, %1143 : vector<8x8xf32>
    %1288 = arith.addf %1272, %1287 : vector<8x8xf32>
    %c133_309 = arith.constant 133 : index
    %1289 = memref.load %arg4[%c133_309] : memref<144xf32, #tpu.memory_space<smem>>
    %1290 = vector.broadcast %1289 : f32 to vector<8x8xf32>
    %1291 = arith.mulf %1290, %1143 : vector<8x8xf32>
    %1292 = arith.addf %1276, %1291 : vector<8x8xf32>
    %c26_310 = arith.constant 26 : index
    %1293 = memref.load %arg4[%c26_310] : memref<144xf32, #tpu.memory_space<smem>>
    %1294 = vector.broadcast %1293 : f32 to vector<8x8xf32>
    %1295 = arith.mulf %1294, %1145 : vector<8x8xf32>
    %1296 = arith.addf %1280, %1295 : vector<8x8xf32>
    %c62_311 = arith.constant 62 : index
    %1297 = memref.load %arg4[%c62_311] : memref<144xf32, #tpu.memory_space<smem>>
    %1298 = vector.broadcast %1297 : f32 to vector<8x8xf32>
    %1299 = arith.mulf %1298, %1145 : vector<8x8xf32>
    %1300 = arith.addf %1284, %1299 : vector<8x8xf32>
    %c98_312 = arith.constant 98 : index
    %1301 = memref.load %arg4[%c98_312] : memref<144xf32, #tpu.memory_space<smem>>
    %1302 = vector.broadcast %1301 : f32 to vector<8x8xf32>
    %1303 = arith.mulf %1302, %1145 : vector<8x8xf32>
    %1304 = arith.addf %1288, %1303 : vector<8x8xf32>
    %c134_313 = arith.constant 134 : index
    %1305 = memref.load %arg4[%c134_313] : memref<144xf32, #tpu.memory_space<smem>>
    %1306 = vector.broadcast %1305 : f32 to vector<8x8xf32>
    %1307 = arith.mulf %1306, %1145 : vector<8x8xf32>
    %1308 = arith.addf %1292, %1307 : vector<8x8xf32>
    %1309 = arith.maximumf %1139, %1141 : vector<8x8xf32>
    %1310 = arith.maximumf %1143, %1145 : vector<8x8xf32>
    %1311 = arith.maximumf %1309, %1310 : vector<8x8xf32>
    %c2_314 = arith.constant 2 : index
    %1312 = memref.load %arg6[%c2_314] : memref<4xf32, #tpu.memory_space<smem>>
    %1313 = vector.broadcast %1312 : f32 to vector<8x8xf32>
    %1314 = arith.mulf %1311, %1313 : vector<8x8xf32>
    %c2_315 = arith.constant 2 : index
    %1315 = memref.load %arg7[%c2_315] : memref<4xf32, #tpu.memory_space<smem>>
    %1316 = vector.broadcast %1315 : f32 to vector<8x8xf32>
    %1317 = arith.addf %1314, %1316 : vector<8x8xf32>
    %cst_316 = arith.constant 0.000000e+00 : f32
    %1318 = vector.broadcast %cst_316 : f32 to vector<8x8xf32>
    %1319 = arith.maximumf %1317, %1318 : vector<8x8xf32>
    %c1_317 = arith.constant 1 : index
    %c6_318 = arith.constant 6 : index
    %c0_319 = arith.constant 0 : index
    %c0_320 = arith.constant 0 : index
    %1320 = vector.load %arg8[%c1_317, %c6_318, %c0_319, %c0_320] : memref<2x8x8x8xf32, #tpu.memory_space<vmem>>, vector<1x1x8x8xf32>
    %1321 = vector.shape_cast %1320 : vector<1x1x8x8xf32> to vector<8x8xf32>
    %1322 = vector.shape_cast %1319 : vector<8x8xf32> to vector<1x1x8x8xf32>
    tpu.vector_store %arg8[%c1_317, %c6_318, %c0_319, %c0_320], %1322 {strides = array<i32>} : memref<2x8x8x8xf32, #tpu.memory_space<vmem>>, vector<1x1x8x8xf32>,
    %c1_321 = arith.constant 1 : index
    %c3_322 = arith.constant 3 : index
    %c0_323 = arith.constant 0 : index
    %c0_324 = arith.constant 0 : index
    %1323 = vector.load %arg2[%c1_321, %c3_322, %c0_323, %c0_324] : memref<2x16x8x8xf32, #tpu.memory_space<vmem>>, vector<1x1x8x8xf32>
    %1324 = vector.shape_cast %1323 : vector<1x1x8x8xf32> to vector<8x8xf32>
    %c1_325 = arith.constant 1 : index
    %c7_326 = arith.constant 7 : index
    %c0_327 = arith.constant 0 : index
    %c0_328 = arith.constant 0 : index
    %1325 = vector.load %arg2[%c1_325, %c7_326, %c0_327, %c0_328] : memref<2x16x8x8xf32, #tpu.memory_space<vmem>>, vector<1x1x8x8xf32>
    %1326 = vector.shape_cast %1325 : vector<1x1x8x8xf32> to vector<8x8xf32>
    %c1_329 = arith.constant 1 : index
    %c11_330 = arith.constant 11 : index
    %c0_331 = arith.constant 0 : index
    %c0_332 = arith.constant 0 : index
    %1327 = vector.load %arg2[%c1_329, %c11_330, %c0_331, %c0_332] : memref<2x16x8x8xf32, #tpu.memory_space<vmem>>, vector<1x1x8x8xf32>
    %1328 = vector.shape_cast %1327 : vector<1x1x8x8xf32> to vector<8x8xf32>
    %c1_333 = arith.constant 1 : index
    %c15_334 = arith.constant 15 : index
    %c0_335 = arith.constant 0 : index
    %c0_336 = arith.constant 0 : index
    %1329 = vector.load %arg2[%c1_333, %c15_334, %c0_335, %c0_336] : memref<2x16x8x8xf32, #tpu.memory_space<vmem>>, vector<1x1x8x8xf32>
    %1330 = vector.shape_cast %1329 : vector<1x1x8x8xf32> to vector<8x8xf32>
    %cst_337 = arith.constant 0.000000e+00 : f32
    %1331 = vector.broadcast %cst_337 : f32 to vector<8x1xf32>
    %1332 = vector.extract_strided_slice %1326 {offsets = [0, 0], sizes = [8, 7], strides = [1, 1]} : vector<8x8xf32> to vector<8x7xf32>
    %1333 = tpu.concatenate %1331, %1332 in 1 : vector<8x1xf32>, vector<8x7xf32> -> vector<8x8xf32>
    %cst_338 = arith.constant 0.000000e+00 : f32
    %1334 = vector.broadcast %cst_338 : f32 to vector<8x1xf32>
    %1335 = vector.extract_strided_slice %1330 {offsets = [0, 0], sizes = [8, 7], strides = [1, 1]} : vector<8x8xf32> to vector<8x7xf32>
    %1336 = tpu.concatenate %1334, %1335 in 1 : vector<8x1xf32>, vector<8x7xf32> -> vector<8x8xf32>
    %1337 = vector.extract_strided_slice %771 {offsets = [3, 0], sizes = [1, 8], strides = [1, 1]} : vector<8x8xf32> to vector<1x8xf32>
    %1338 = vector.shape_cast %1337 : vector<1x8xf32> to vector<8xf32>
    %1339 = vector.shape_cast %1338 : vector<8xf32> to vector<1x8xf32>
    %1340 = vector.extract_strided_slice %1328 {offsets = [0, 0], sizes = [7, 8], strides = [1, 1]} : vector<8x8xf32> to vector<7x8xf32>
    %1341 = tpu.concatenate %1339, %1340 in 0 : vector<1x8xf32>, vector<7x8xf32> -> vector<8x8xf32>
    %1342 = vector.extract_strided_slice %771 {offsets = [7, 0], sizes = [1, 8], strides = [1, 1]} : vector<8x8xf32> to vector<1x8xf32>
    %1343 = vector.shape_cast %1342 : vector<1x8xf32> to vector<8xf32>
    %1344 = vector.shape_cast %1343 : vector<8xf32> to vector<1x8xf32>
    %1345 = vector.extract_strided_slice %1330 {offsets = [0, 0], sizes = [7, 8], strides = [1, 1]} : vector<8x8xf32> to vector<7x8xf32>
    %1346 = tpu.concatenate %1344, %1345 in 0 : vector<1x8xf32>, vector<7x8xf32> -> vector<8x8xf32>
    %cst_339 = arith.constant 0.000000e+00 : f32
    %1347 = vector.broadcast %cst_339 : f32 to vector<8x1xf32>
    %1348 = vector.extract_strided_slice %1346 {offsets = [0, 0], sizes = [8, 7], strides = [1, 1]} : vector<8x8xf32> to vector<8x7xf32>
    %1349 = tpu.concatenate %1347, %1348 in 1 : vector<8x1xf32>, vector<8x7xf32> -> vector<8x8xf32>
    %c27_340 = arith.constant 27 : index
    %1350 = memref.load %arg4[%c27_340] : memref<144xf32, #tpu.memory_space<smem>>
    %1351 = vector.broadcast %1350 : f32 to vector<8x8xf32>
    %1352 = arith.mulf %1351, %1349 : vector<8x8xf32>
    %1353 = arith.addf %1296, %1352 : vector<8x8xf32>
    %c63_341 = arith.constant 63 : index
    %1354 = memref.load %arg4[%c63_341] : memref<144xf32, #tpu.memory_space<smem>>
    %1355 = vector.broadcast %1354 : f32 to vector<8x8xf32>
    %1356 = arith.mulf %1355, %1349 : vector<8x8xf32>
    %1357 = arith.addf %1300, %1356 : vector<8x8xf32>
    %c99_342 = arith.constant 99 : index
    %1358 = memref.load %arg4[%c99_342] : memref<144xf32, #tpu.memory_space<smem>>
    %1359 = vector.broadcast %1358 : f32 to vector<8x8xf32>
    %1360 = arith.mulf %1359, %1349 : vector<8x8xf32>
    %1361 = arith.addf %1304, %1360 : vector<8x8xf32>
    %c135_343 = arith.constant 135 : index
    %1362 = memref.load %arg4[%c135_343] : memref<144xf32, #tpu.memory_space<smem>>
    %1363 = vector.broadcast %1362 : f32 to vector<8x8xf32>
    %1364 = arith.mulf %1363, %1349 : vector<8x8xf32>
    %1365 = arith.addf %1308, %1364 : vector<8x8xf32>
    %c28_344 = arith.constant 28 : index
    %1366 = memref.load %arg4[%c28_344] : memref<144xf32, #tpu.memory_space<smem>>
    %1367 = vector.broadcast %1366 : f32 to vector<8x8xf32>
    %1368 = arith.mulf %1367, %1341 : vector<8x8xf32>
    %1369 = arith.addf %1353, %1368 : vector<8x8xf32>
    %c64_345 = arith.constant 64 : index
    %1370 = memref.load %arg4[%c64_345] : memref<144xf32, #tpu.memory_space<smem>>
    %1371 = vector.broadcast %1370 : f32 to vector<8x8xf32>
    %1372 = arith.mulf %1371, %1341 : vector<8x8xf32>
    %1373 = arith.addf %1357, %1372 : vector<8x8xf32>
    %c100_346 = arith.constant 100 : index
    %1374 = memref.load %arg4[%c100_346] : memref<144xf32, #tpu.memory_space<smem>>
    %1375 = vector.broadcast %1374 : f32 to vector<8x8xf32>
    %1376 = arith.mulf %1375, %1341 : vector<8x8xf32>
    %1377 = arith.addf %1361, %1376 : vector<8x8xf32>
    %c136_347 = arith.constant 136 : index
    %1378 = memref.load %arg4[%c136_347] : memref<144xf32, #tpu.memory_space<smem>>
    %1379 = vector.broadcast %1378 : f32 to vector<8x8xf32>
    %1380 = arith.mulf %1379, %1341 : vector<8x8xf32>
    %1381 = arith.addf %1365, %1380 : vector<8x8xf32>
    %c29_348 = arith.constant 29 : index
    %1382 = memref.load %arg4[%c29_348] : memref<144xf32, #tpu.memory_space<smem>>
    %1383 = vector.broadcast %1382 : f32 to vector<8x8xf32>
    %1384 = arith.mulf %1383, %1346 : vector<8x8xf32>
    %1385 = arith.addf %1369, %1384 : vector<8x8xf32>
    %c65_349 = arith.constant 65 : index
    %1386 = memref.load %arg4[%c65_349] : memref<144xf32, #tpu.memory_space<smem>>
    %1387 = vector.broadcast %1386 : f32 to vector<8x8xf32>
    %1388 = arith.mulf %1387, %1346 : vector<8x8xf32>
    %1389 = arith.addf %1373, %1388 : vector<8x8xf32>
    %c101_350 = arith.constant 101 : index
    %1390 = memref.load %arg4[%c101_350] : memref<144xf32, #tpu.memory_space<smem>>
    %1391 = vector.broadcast %1390 : f32 to vector<8x8xf32>
    %1392 = arith.mulf %1391, %1346 : vector<8x8xf32>
    %1393 = arith.addf %1377, %1392 : vector<8x8xf32>
    %c137_351 = arith.constant 137 : index
    %1394 = memref.load %arg4[%c137_351] : memref<144xf32, #tpu.memory_space<smem>>
    %1395 = vector.broadcast %1394 : f32 to vector<8x8xf32>
    %1396 = arith.mulf %1395, %1346 : vector<8x8xf32>
    %1397 = arith.addf %1381, %1396 : vector<8x8xf32>
    %c30_352 = arith.constant 30 : index
    %1398 = memref.load %arg4[%c30_352] : memref<144xf32, #tpu.memory_space<smem>>
    %1399 = vector.broadcast %1398 : f32 to vector<8x8xf32>
    %1400 = arith.mulf %1399, %1333 : vector<8x8xf32>
    %1401 = arith.addf %1385, %1400 : vector<8x8xf32>
    %c66_353 = arith.constant 66 : index
    %1402 = memref.load %arg4[%c66_353] : memref<144xf32, #tpu.memory_space<smem>>
    %1403 = vector.broadcast %1402 : f32 to vector<8x8xf32>
    %1404 = arith.mulf %1403, %1333 : vector<8x8xf32>
    %1405 = arith.addf %1389, %1404 : vector<8x8xf32>
    %c102_354 = arith.constant 102 : index
    %1406 = memref.load %arg4[%c102_354] : memref<144xf32, #tpu.memory_space<smem>>
    %1407 = vector.broadcast %1406 : f32 to vector<8x8xf32>
    %1408 = arith.mulf %1407, %1333 : vector<8x8xf32>
    %1409 = arith.addf %1393, %1408 : vector<8x8xf32>
    %c138_355 = arith.constant 138 : index
    %1410 = memref.load %arg4[%c138_355] : memref<144xf32, #tpu.memory_space<smem>>
    %1411 = vector.broadcast %1410 : f32 to vector<8x8xf32>
    %1412 = arith.mulf %1411, %1333 : vector<8x8xf32>
    %1413 = arith.addf %1397, %1412 : vector<8x8xf32>
    %c31_356 = arith.constant 31 : index
    %1414 = memref.load %arg4[%c31_356] : memref<144xf32, #tpu.memory_space<smem>>
    %1415 = vector.broadcast %1414 : f32 to vector<8x8xf32>
    %1416 = arith.mulf %1415, %1324 : vector<8x8xf32>
    %1417 = arith.addf %1401, %1416 : vector<8x8xf32>
    %c67_357 = arith.constant 67 : index
    %1418 = memref.load %arg4[%c67_357] : memref<144xf32, #tpu.memory_space<smem>>
    %1419 = vector.broadcast %1418 : f32 to vector<8x8xf32>
    %1420 = arith.mulf %1419, %1324 : vector<8x8xf32>
    %1421 = arith.addf %1405, %1420 : vector<8x8xf32>
    %c103_358 = arith.constant 103 : index
    %1422 = memref.load %arg4[%c103_358] : memref<144xf32, #tpu.memory_space<smem>>
    %1423 = vector.broadcast %1422 : f32 to vector<8x8xf32>
    %1424 = arith.mulf %1423, %1324 : vector<8x8xf32>
    %1425 = arith.addf %1409, %1424 : vector<8x8xf32>
    %c139_359 = arith.constant 139 : index
    %1426 = memref.load %arg4[%c139_359] : memref<144xf32, #tpu.memory_space<smem>>
    %1427 = vector.broadcast %1426 : f32 to vector<8x8xf32>
    %1428 = arith.mulf %1427, %1324 : vector<8x8xf32>
    %1429 = arith.addf %1413, %1428 : vector<8x8xf32>
    %c32_360 = arith.constant 32 : index
    %1430 = memref.load %arg4[%c32_360] : memref<144xf32, #tpu.memory_space<smem>>
    %1431 = vector.broadcast %1430 : f32 to vector<8x8xf32>
    %1432 = arith.mulf %1431, %1326 : vector<8x8xf32>
    %1433 = arith.addf %1417, %1432 : vector<8x8xf32>
    %c68_361 = arith.constant 68 : index
    %1434 = memref.load %arg4[%c68_361] : memref<144xf32, #tpu.memory_space<smem>>
    %1435 = vector.broadcast %1434 : f32 to vector<8x8xf32>
    %1436 = arith.mulf %1435, %1326 : vector<8x8xf32>
    %1437 = arith.addf %1421, %1436 : vector<8x8xf32>
    %c104_362 = arith.constant 104 : index
    %1438 = memref.load %arg4[%c104_362] : memref<144xf32, #tpu.memory_space<smem>>
    %1439 = vector.broadcast %1438 : f32 to vector<8x8xf32>
    %1440 = arith.mulf %1439, %1326 : vector<8x8xf32>
    %1441 = arith.addf %1425, %1440 : vector<8x8xf32>
    %c140_363 = arith.constant 140 : index
    %1442 = memref.load %arg4[%c140_363] : memref<144xf32, #tpu.memory_space<smem>>
    %1443 = vector.broadcast %1442 : f32 to vector<8x8xf32>
    %1444 = arith.mulf %1443, %1326 : vector<8x8xf32>
    %1445 = arith.addf %1429, %1444 : vector<8x8xf32>
    %c33_364 = arith.constant 33 : index
    %1446 = memref.load %arg4[%c33_364] : memref<144xf32, #tpu.memory_space<smem>>
    %1447 = vector.broadcast %1446 : f32 to vector<8x8xf32>
    %1448 = arith.mulf %1447, %1336 : vector<8x8xf32>
    %1449 = arith.addf %1433, %1448 : vector<8x8xf32>
    %c69_365 = arith.constant 69 : index
    %1450 = memref.load %arg4[%c69_365] : memref<144xf32, #tpu.memory_space<smem>>
    %1451 = vector.broadcast %1450 : f32 to vector<8x8xf32>
    %1452 = arith.mulf %1451, %1336 : vector<8x8xf32>
    %1453 = arith.addf %1437, %1452 : vector<8x8xf32>
    %c105_366 = arith.constant 105 : index
    %1454 = memref.load %arg4[%c105_366] : memref<144xf32, #tpu.memory_space<smem>>
    %1455 = vector.broadcast %1454 : f32 to vector<8x8xf32>
    %1456 = arith.mulf %1455, %1336 : vector<8x8xf32>
    %1457 = arith.addf %1441, %1456 : vector<8x8xf32>
    %c141_367 = arith.constant 141 : index
    %1458 = memref.load %arg4[%c141_367] : memref<144xf32, #tpu.memory_space<smem>>
    %1459 = vector.broadcast %1458 : f32 to vector<8x8xf32>
    %1460 = arith.mulf %1459, %1336 : vector<8x8xf32>
    %1461 = arith.addf %1445, %1460 : vector<8x8xf32>
    %c34_368 = arith.constant 34 : index
    %1462 = memref.load %arg4[%c34_368] : memref<144xf32, #tpu.memory_space<smem>>
    %1463 = vector.broadcast %1462 : f32 to vector<8x8xf32>
    %1464 = arith.mulf %1463, %1328 : vector<8x8xf32>
    %1465 = arith.addf %1449, %1464 : vector<8x8xf32>
    %c70_369 = arith.constant 70 : index
    %1466 = memref.load %arg4[%c70_369] : memref<144xf32, #tpu.memory_space<smem>>
    %1467 = vector.broadcast %1466 : f32 to vector<8x8xf32>
    %1468 = arith.mulf %1467, %1328 : vector<8x8xf32>
    %1469 = arith.addf %1453, %1468 : vector<8x8xf32>
    %c106_370 = arith.constant 106 : index
    %1470 = memref.load %arg4[%c106_370] : memref<144xf32, #tpu.memory_space<smem>>
    %1471 = vector.broadcast %1470 : f32 to vector<8x8xf32>
    %1472 = arith.mulf %1471, %1328 : vector<8x8xf32>
    %1473 = arith.addf %1457, %1472 : vector<8x8xf32>
    %c142_371 = arith.constant 142 : index
    %1474 = memref.load %arg4[%c142_371] : memref<144xf32, #tpu.memory_space<smem>>
    %1475 = vector.broadcast %1474 : f32 to vector<8x8xf32>
    %1476 = arith.mulf %1475, %1328 : vector<8x8xf32>
    %1477 = arith.addf %1461, %1476 : vector<8x8xf32>
    %c35_372 = arith.constant 35 : index
    %1478 = memref.load %arg4[%c35_372] : memref<144xf32, #tpu.memory_space<smem>>
    %1479 = vector.broadcast %1478 : f32 to vector<8x8xf32>
    %1480 = arith.mulf %1479, %1330 : vector<8x8xf32>
    %1481 = arith.addf %1465, %1480 : vector<8x8xf32>
    %c71_373 = arith.constant 71 : index
    %1482 = memref.load %arg4[%c71_373] : memref<144xf32, #tpu.memory_space<smem>>
    %1483 = vector.broadcast %1482 : f32 to vector<8x8xf32>
    %1484 = arith.mulf %1483, %1330 : vector<8x8xf32>
    %1485 = arith.addf %1469, %1484 : vector<8x8xf32>
    %c107_374 = arith.constant 107 : index
    %1486 = memref.load %arg4[%c107_374] : memref<144xf32, #tpu.memory_space<smem>>
    %1487 = vector.broadcast %1486 : f32 to vector<8x8xf32>
    %1488 = arith.mulf %1487, %1330 : vector<8x8xf32>
    %1489 = arith.addf %1473, %1488 : vector<8x8xf32>
    %c143_375 = arith.constant 143 : index
    %1490 = memref.load %arg4[%c143_375] : memref<144xf32, #tpu.memory_space<smem>>
    %1491 = vector.broadcast %1490 : f32 to vector<8x8xf32>
    %1492 = arith.mulf %1491, %1330 : vector<8x8xf32>
    %1493 = arith.addf %1477, %1492 : vector<8x8xf32>
    %1494 = arith.maximumf %1324, %1326 : vector<8x8xf32>
    %1495 = arith.maximumf %1328, %1330 : vector<8x8xf32>
    %1496 = arith.maximumf %1494, %1495 : vector<8x8xf32>
    %c3_376 = arith.constant 3 : index
    %1497 = memref.load %arg6[%c3_376] : memref<4xf32, #tpu.memory_space<smem>>
    %1498 = vector.broadcast %1497 : f32 to vector<8x8xf32>
    %1499 = arith.mulf %1496, %1498 : vector<8x8xf32>
    %c3_377 = arith.constant 3 : index
    %1500 = memref.load %arg7[%c3_377] : memref<4xf32, #tpu.memory_space<smem>>
    %1501 = vector.broadcast %1500 : f32 to vector<8x8xf32>
    %1502 = arith.addf %1499, %1501 : vector<8x8xf32>
    %cst_378 = arith.constant 0.000000e+00 : f32
    %1503 = vector.broadcast %cst_378 : f32 to vector<8x8xf32>
    %1504 = arith.maximumf %1502, %1503 : vector<8x8xf32>
    %c1_379 = arith.constant 1 : index
    %c7_380 = arith.constant 7 : index
    %c0_381 = arith.constant 0 : index
    %c0_382 = arith.constant 0 : index
    %1505 = vector.load %arg8[%c1_379, %c7_380, %c0_381, %c0_382] : memref<2x8x8x8xf32, #tpu.memory_space<vmem>>, vector<1x1x8x8xf32>
    %1506 = vector.shape_cast %1505 : vector<1x1x8x8xf32> to vector<8x8xf32>
    %1507 = vector.shape_cast %1504 : vector<8x8xf32> to vector<1x1x8x8xf32>
    tpu.vector_store %arg8[%c1_379, %c7_380, %c0_381, %c0_382], %1507 {strides = array<i32>} : memref<2x8x8x8xf32, #tpu.memory_space<vmem>>, vector<1x1x8x8xf32>,
    %c0_383 = arith.constant 0 : index
    %1508 = memref.load %arg5[%c0_383] : memref<4xf32, #tpu.memory_space<smem>>
    %1509 = vector.broadcast %1508 : f32 to vector<8x8xf32>
    %1510 = arith.addf %1481, %1509 : vector<8x8xf32>
    %cst_384 = arith.constant 0.000000e+00 : f32
    %1511 = vector.broadcast %cst_384 : f32 to vector<8x8xf32>
    %1512 = arith.maximumf %1510, %1511 : vector<8x8xf32>
    %c1_385 = arith.constant 1 : index
    %c0_386 = arith.constant 0 : index
    %c0_387 = arith.constant 0 : index
    %c0_388 = arith.constant 0 : index
    %1513 = vector.load %arg8[%c1_385, %c0_386, %c0_387, %c0_388] : memref<2x8x8x8xf32, #tpu.memory_space<vmem>>, vector<1x1x8x8xf32>
    %1514 = vector.shape_cast %1513 : vector<1x1x8x8xf32> to vector<8x8xf32>
    %1515 = vector.shape_cast %1512 : vector<8x8xf32> to vector<1x1x8x8xf32>
    tpu.vector_store %arg8[%c1_385, %c0_386, %c0_387, %c0_388], %1515 {strides = array<i32>} : memref<2x8x8x8xf32, #tpu.memory_space<vmem>>, vector<1x1x8x8xf32>,
    %c1_389 = arith.constant 1 : index
    %1516 = memref.load %arg5[%c1_389] : memref<4xf32, #tpu.memory_space<smem>>
    %1517 = vector.broadcast %1516 : f32 to vector<8x8xf32>
    %1518 = arith.addf %1485, %1517 : vector<8x8xf32>
    %cst_390 = arith.constant 0.000000e+00 : f32
    %1519 = vector.broadcast %cst_390 : f32 to vector<8x8xf32>
    %1520 = arith.maximumf %1518, %1519 : vector<8x8xf32>
    %c1_391 = arith.constant 1 : index
    %c1_392 = arith.constant 1 : index
    %c0_393 = arith.constant 0 : index
    %c0_394 = arith.constant 0 : index
    %1521 = vector.load %arg8[%c1_391, %c1_392, %c0_393, %c0_394] : memref<2x8x8x8xf32, #tpu.memory_space<vmem>>, vector<1x1x8x8xf32>
    %1522 = vector.shape_cast %1521 : vector<1x1x8x8xf32> to vector<8x8xf32>
    %1523 = vector.shape_cast %1520 : vector<8x8xf32> to vector<1x1x8x8xf32>
    tpu.vector_store %arg8[%c1_391, %c1_392, %c0_393, %c0_394], %1523 {strides = array<i32>} : memref<2x8x8x8xf32, #tpu.memory_space<vmem>>, vector<1x1x8x8xf32>,
    %c2_395 = arith.constant 2 : index
    %1524 = memref.load %arg5[%c2_395] : memref<4xf32, #tpu.memory_space<smem>>
    %1525 = vector.broadcast %1524 : f32 to vector<8x8xf32>
    %1526 = arith.addf %1489, %1525 : vector<8x8xf32>
    %cst_396 = arith.constant 0.000000e+00 : f32
    %1527 = vector.broadcast %cst_396 : f32 to vector<8x8xf32>
    %1528 = arith.maximumf %1526, %1527 : vector<8x8xf32>
    %c1_397 = arith.constant 1 : index
    %c2_398 = arith.constant 2 : index
    %c0_399 = arith.constant 0 : index
    %c0_400 = arith.constant 0 : index
    %1529 = vector.load %arg8[%c1_397, %c2_398, %c0_399, %c0_400] : memref<2x8x8x8xf32, #tpu.memory_space<vmem>>, vector<1x1x8x8xf32>
    %1530 = vector.shape_cast %1529 : vector<1x1x8x8xf32> to vector<8x8xf32>
    %1531 = vector.shape_cast %1528 : vector<8x8xf32> to vector<1x1x8x8xf32>
    tpu.vector_store %arg8[%c1_397, %c2_398, %c0_399, %c0_400], %1531 {strides = array<i32>} : memref<2x8x8x8xf32, #tpu.memory_space<vmem>>, vector<1x1x8x8xf32>,
    %c3_401 = arith.constant 3 : index
    %1532 = memref.load %arg5[%c3_401] : memref<4xf32, #tpu.memory_space<smem>>
    %1533 = vector.broadcast %1532 : f32 to vector<8x8xf32>
    %1534 = arith.addf %1493, %1533 : vector<8x8xf32>
    %cst_402 = arith.constant 0.000000e+00 : f32
    %1535 = vector.broadcast %cst_402 : f32 to vector<8x8xf32>
    %1536 = arith.maximumf %1534, %1535 : vector<8x8xf32>
    %c1_403 = arith.constant 1 : index
    %c3_404 = arith.constant 3 : index
    %c0_405 = arith.constant 0 : index
    %c0_406 = arith.constant 0 : index
    %1537 = vector.load %arg8[%c1_403, %c3_404, %c0_405, %c0_406] : memref<2x8x8x8xf32, #tpu.memory_space<vmem>>, vector<1x1x8x8xf32>
    %1538 = vector.shape_cast %1537 : vector<1x1x8x8xf32> to vector<8x8xf32>
    %1539 = vector.shape_cast %1536 : vector<8x8xf32> to vector<1x1x8x8xf32>
    tpu.vector_store %arg8[%c1_403, %c3_404, %c0_405, %c0_406], %1539 {strides = array<i32>} : memref<2x8x8x8xf32, #tpu.memory_space<vmem>>, vector<1x1x8x8xf32>,
    return
  }
  func.func @transform_0(%arg0: i32, %arg1: i32) -> (i32, i32, i32, i32) {
    %c0_i32 = arith.constant 0 : i32
    %c0_i32_0 = arith.constant 0 : i32
    %c0_i32_1 = arith.constant 0 : i32
    return %arg0, %c0_i32, %arg1, %c0_i32_0 : i32, i32, i32, i32
  }
  func.func @transform_1(%arg0: i32, %arg1: i32) -> (i32, i32, i32, i32) {
    %c0_i32 = arith.constant 0 : i32
    %c0_i32_0 = arith.constant 0 : i32
    %c0_i32_1 = arith.constant 0 : i32
    return %arg0, %arg1, %c0_i32, %c0_i32_0 : i32, i32, i32, i32
  }
  func.func @transform_2(%arg0: i32, %arg1: i32) -> i32 {
    %c0_i32 = arith.constant 0 : i32
    %c0_i32_0 = arith.constant 0 : i32
    return %c0_i32 : i32
  }
  func.func @transform_3(%arg0: i32, %arg1: i32) -> i32 {
    %c0_i32 = arith.constant 0 : i32
    %c0_i32_0 = arith.constant 0 : i32
    return %c0_i32 : i32
  }
  func.func @transform_4(%arg0: i32, %arg1: i32) -> i32 {
    %c0_i32 = arith.constant 0 : i32
    %c0_i32_0 = arith.constant 0 : i32
    return %c0_i32 : i32
  }
  func.func @transform_5(%arg0: i32, %arg1: i32) -> i32 {
    %c0_i32 = arith.constant 0 : i32
    %c0_i32_0 = arith.constant 0 : i32
    return %c0_i32 : i32
  }
  func.func @transform_6(%arg0: i32, %arg1: i32) -> (i32, i32, i32, i32) {
    %c0_i32 = arith.constant 0 : i32
    %c0_i32_0 = arith.constant 0 : i32
    %c0_i32_1 = arith.constant 0 : i32
    return %arg0, %c0_i32, %arg1, %c0_i32_0 : i32, i32, i32, i32
  }
}

</mosaic_0001>

<llo_original>
// kernel: downsampler_block.1
$region0: #{downsampler_block.1}
  #allocation0 [shape = 'u32[]', space=smem, size = 0x4, offset = 0x4, fixed_abs, tag = 'smem constant byte address 0x4 - core index']
  #allocation1 [shape = 'u32[144,128]{1,0:T(1,128)}', space=vmem, size = 0x12000, scoped, tag = 'internal scratch']
  %s0 = inlined_call_operand.vmem [shape: f32[2,16,8,8], index: 0, kind: input, shape index: {}]
  %s1 = inlined_call_operand.vmem [shape: f32[2,1,8,8], index: 1, kind: input, shape index: {}]
  %s2 = inlined_call_operand.vmem [shape: f32[144], index: 2, kind: input, shape index: {}]
  %s3 = inlined_call_operand.vmem [shape: f32[4], index: 3, kind: input, shape index: {}]
  %s4 = inlined_call_operand.vmem [shape: f32[4], index: 4, kind: input, shape index: {}]
  %s5 = inlined_call_operand.vmem [shape: f32[4], index: 5, kind: input, shape index: {}]
  %s6 = inlined_call_operand.hbm [shape: f32[2,8,8,8], index: 6, kind: output, shape index: {}]
  %s7 = sld [smem:[#allocation0]]
  $region50: #{downsampler_block.1} parent=0
    _
  %s9 = ssub.s32 1, %s7
  %s10 = scalar_select 0, %s9, %s7
  $region1: #{downsampler_block.1} parent=0
    #allocation2 [shape = 'u8[1024]{0}', space=smem, size = 0x400, scoped, tag = 'input window, operand 2, single buffered']
    #allocation3 [shape = 's32[1]{0}', space=sflag, size = 0x4, scoped, tag = 'scoped memory for downsampler_block.1']
    #allocation4 [shape = 's32[1]{0}', space=sflag, size = 0x4, scoped, tag = 'scoped memory for downsampler_block.1']
    #allocation5 [shape = 'u8[512]{0}', space=smem, size = 0x200, scoped, tag = 'input window, operand 3, single buffered']
    #allocation6 [shape = 's32[1]{0}', space=sflag, size = 0x4, scoped, tag = 'scoped memory for downsampler_block.1']
    #allocation7 [shape = 'u8[512]{0}', space=smem, size = 0x200, scoped, tag = 'input window, operand 4, single buffered']
    #allocation8 [shape = 'u8[512]{0}', space=smem, size = 0x200, scoped, tag = 'input window, operand 5, single buffered']
    #allocation9 [shape = 's32[1]{0}', space=sflag, size = 0x4, scoped, tag = 'scoped memory for downsampler_block.1']
    #allocation10 [shape = 'u8[65536]{0}', space=vmem, size = 0x10000, scoped, tag = 'output window, operand 0, single buffered']
    %11 = vsyncpa [#allocation4], 0
    %12 = vsyncpa [#allocation6], 0
    %13 = vsyncpa [#allocation9], 0
    %14 = vsyncpa [#allocation3], 0
    // Predicated region
    $region2: #{downsampler_block.1} parent=1 // pred_check
      _
    $region3: #{downsampler_block.1} parent=1 // pred_check_branch
      %16 = sbr.rel (0) target = $region5
    $region4: #{downsampler_block.1} parent=1 // pred_region
      _
    $region5: #{downsampler_block.1} parent=1 // pred_fallthru
      _
    // Predicated region
    $region6: #{downsampler_block.1} parent=1 // pred_check
      _
    $region7: #{downsampler_block.1} parent=1 // pred_check_branch
      %18 = sbr.rel (0) target = $region9
    $region8: #{downsampler_block.1} parent=1 // pred_region
      _
    $region9: #{downsampler_block.1} parent=1 // pred_fallthru
      _
    // Predicated region
    $region10: #{downsampler_block.1} parent=1 // pred_check
      _
    $region11: #{downsampler_block.1} parent=1 // pred_check_branch
      %20 = sbr.rel (0) target = $region13
    $region12: #{downsampler_block.1} parent=1 // pred_region
      %s22 = ssub.s32 32, 32
      %23 = vsyncadd [#allocation4], %s22
      %s25 = sshll.u32 %s2, 4
      %s26 = int_to_ptr.vmem [resolvable:$true] %s25
      %28 = dma.vmem_to_smem %s26, 32, [#allocation2], [#allocation4]
    $region13: #{downsampler_block.1} parent=1 // pred_fallthru
      _
    // Predicated region
    $region14: #{downsampler_block.1} parent=1 // pred_check
      _
    $region15: #{downsampler_block.1} parent=1 // pred_check_branch
      %30 = sbr.rel (0) target = $region17
    $region16: #{downsampler_block.1} parent=1 // pred_region
      %s32 = ssub.s32 16, 16
      %33 = vsyncadd [#allocation6], %s32
      %s35 = sshll.u32 %s3, 4
      %s36 = int_to_ptr.vmem [resolvable:$true] %s35
      %38 = dma.vmem_to_smem %s36, 16, [#allocation5], [#allocation6]
    $region17: #{downsampler_block.1} parent=1 // pred_fallthru
      _
    // Predicated region
    $region18: #{downsampler_block.1} parent=1 // pred_check
      _
    $region19: #{downsampler_block.1} parent=1 // pred_check_branch
      %40 = sbr.rel (0) target = $region21
    $region20: #{downsampler_block.1} parent=1 // pred_region
      %s42 = ssub.s32 16, 16
      %43 = vsyncadd [#allocation6], %s42
      %s45 = sshll.u32 %s4, 4
      %s46 = int_to_ptr.vmem [resolvable:$true] %s45
      %48 = dma.vmem_to_smem %s46, 16, [#allocation7], [#allocation6]
    $region21: #{downsampler_block.1} parent=1 // pred_fallthru
      _
    // Predicated region
    $region22: #{downsampler_block.1} parent=1 // pred_check
      _
    $region23: #{downsampler_block.1} parent=1 // pred_check_branch
      %50 = sbr.rel (0) target = $region25
    $region24: #{downsampler_block.1} parent=1 // pred_region
      %s52 = ssub.s32 16, 16
      %53 = vsyncadd [#allocation9], %s52
      %s55 = sshll.u32 %s5, 4
      %s56 = int_to_ptr.vmem [resolvable:$true] %s55
      %58 = dma.vmem_to_smem %s56, 16, [#allocation8], [#allocation9]
    $region25: #{downsampler_block.1} parent=1 // pred_fallthru
      _
    // Predicated region
    $region26: #{downsampler_block.1} parent=1 // pred_check
      _
    $region27: #{downsampler_block.1} parent=1 // pred_check_branch
      %60 = sbr.rel (0) target = $region29
    $region28: #{downsampler_block.1} parent=1 // pred_region
      %61 = dma.done [#allocation4], 32
    $region29: #{downsampler_block.1} parent=1 // pred_fallthru
      _
    // Predicated region
    $region30: #{downsampler_block.1} parent=1 // pred_check
      _
    $region31: #{downsampler_block.1} parent=1 // pred_check_branch
      %63 = sbr.rel (0) target = $region33
    $region32: #{downsampler_block.1} parent=1 // pred_region
      %64 = dma.done [#allocation6], 16
    $region33: #{downsampler_block.1} parent=1 // pred_fallthru
      _
    // Predicated region
    $region34: #{downsampler_block.1} parent=1 // pred_check
      _
    $region35: #{downsampler_block.1} parent=1 // pred_check_branch
      %66 = sbr.rel (0) target = $region37
    $region36: #{downsampler_block.1} parent=1 // pred_region
      %67 = dma.done [#allocation6], 16
    $region37: #{downsampler_block.1} parent=1 // pred_fallthru
      _
    // Predicated region
    $region38: #{downsampler_block.1} parent=1 // pred_check
      _
    $region39: #{downsampler_block.1} parent=1 // pred_check_branch
      %69 = sbr.rel (0) target = $region41
    $region40: #{downsampler_block.1} parent=1 // pred_region
      %70 = dma.done [#allocation9], 16
    $region41: #{downsampler_block.1} parent=1 // pred_fallthru
      _
    %71 = sfence
    %v72 = vld [vmem:[%s1] sm:$0xff]
    %v73 = vld [vmem:[%s0] sm:$0xff]
    %s74 = scalar_lea.vmem %s0, 32
    %v75 = vld [vmem:[%s74] sm:$0xff]
    %s76 = scalar_lea.vmem %s0, 64
    %v77 = vld [vmem:[%s76] sm:$0xff]
    %s78 = scalar_lea.vmem %s0, 96
    %v79 = vld [vmem:[%s78] sm:$0xff]
    %81 = vrot.lane.b32.xlu0 %v75, 1
    %v82 = vpop.permute.xlu0 %81
    %vm84 = vcmask 7168
    %v85 = vsel %vm84, 0.0, %v82
    %87 = vrot.lane.b32.xlu0 %v79, 1
    %v88 = vpop.permute.xlu0 %87
    %v90 = vsel %vm84, 0.0, %v88
    %v92 = vrot.slane %v77, 7
    %vm94 = vcmask 1040384
    %v95 = vsel %vm94, %v72, %v92
    %v97 = vrot.slane %v72, 4
    %v99 = vrot.slane %v79, 7
    %v101 = vsel %vm94, %v97, %v99
    %103 = vrot.lane.b32.xlu0 %v101, 1
    %v104 = vpop.permute.xlu0 %103
    %v106 = vsel %vm84, 0.0, %v104
    %s107 = sld [smem:[#allocation2]]
    %v108 = vstv %s107
    %v109 = vmul.f32 %v108, %v106
    %s110 = sld [smem:[#allocation2 + $0x24]]
    %v111 = vstv %s110
    %v112 = vmul.f32 %v111, %v106
    %s113 = sld [smem:[#allocation2 + $0x48]]
    %v114 = vstv %s113
    %v115 = vmul.f32 %v114, %v106
    %s116 = sld [smem:[#allocation2 + $0x6c]]
    %v117 = vstv %s116
    %v118 = vmul.f32 %v117, %v106
    %s119 = sld [smem:[#allocation2 + $0x1]]
    %v120 = vstv %s119
    %v121 = vmul.f32 %v120, %v95
    %v122 = vadd.f32 %v109, %v121
    %s123 = sld [smem:[#allocation2 + $0x25]]
    %v124 = vstv %s123
    %v125 = vmul.f32 %v124, %v95
    %v126 = vadd.f32 %v112, %v125
    %s127 = sld [smem:[#allocation2 + $0x49]]
    %v128 = vstv %s127
    %v129 = vmul.f32 %v128, %v95
    %v130 = vadd.f32 %v115, %v129
    %s131 = sld [smem:[#allocation2 + $0x6d]]
    %v132 = vstv %s131
    %v133 = vmul.f32 %v132, %v95
    %v134 = vadd.f32 %v118, %v133
    %s135 = sld [smem:[#allocation2 + $0x2]]
    %v136 = vstv %s135
    %v137 = vmul.f32 %v136, %v101
    %v138 = vadd.f32 %v122, %v137
    %s139 = sld [smem:[#allocation2 + $0x26]]
    %v140 = vstv %s139
    %v141 = vmul.f32 %v140, %v101
    %v142 = vadd.f32 %v126, %v141
    %s143 = sld [smem:[#allocation2 + $0x4a]]
    %v144 = vstv %s143
    %v145 = vmul.f32 %v144, %v101
    %v146 = vadd.f32 %v130, %v145
    %s147 = sld [smem:[#allocation2 + $0x6e]]
    %v148 = vstv %s147
    %v149 = vmul.f32 %v148, %v101
    %v150 = vadd.f32 %v134, %v149
    %s151 = sld [smem:[#allocation2 + $0x3]]
    %v152 = vstv %s151
    %v153 = vmul.f32 %v152, %v85
    %v154 = vadd.f32 %v138, %v153
    %s155 = sld [smem:[#allocation2 + $0x27]]
    %v156 = vstv %s155
    %v157 = vmul.f32 %v156, %v85
    %v158 = vadd.f32 %v142, %v157
    %s159 = sld [smem:[#allocation2 + $0x4b]]
    %v160 = vstv %s159
    %v161 = vmul.f32 %v160, %v85
    %v162 = vadd.f32 %v146, %v161
    %s163 = sld [smem:[#allocation2 + $0x6f]]
    %v164 = vstv %s163
    %v165 = vmul.f32 %v164, %v85
    %v166 = vadd.f32 %v150, %v165
    %s167 = sld [smem:[#allocation2 + $0x4]]
    %v168 = vstv %s167
    %v169 = vmul.f32 %v168, %v73
    %v170 = vadd.f32 %v154, %v169
    %s171 = sld [smem:[#allocation2 + $0x28]]
    %v172 = vstv %s171
    %v173 = vmul.f32 %v172, %v73
    %v174 = vadd.f32 %v158, %v173
    %s175 = sld [smem:[#allocation2 + $0x4c]]
    %v176 = vstv %s175
    %v177 = vmul.f32 %v176, %v73
    %v178 = vadd.f32 %v162, %v177
    %s179 = sld [smem:[#allocation2 + $0x70]]
    %v180 = vstv %s179
    %v181 = vmul.f32 %v180, %v73
    %v182 = vadd.f32 %v166, %v181
    %s183 = sld [smem:[#allocation2 + $0x5]]
    %v184 = vstv %s183
    %v185 = vmul.f32 %v184, %v75
    %v186 = vadd.f32 %v170, %v185
    %s187 = sld [smem:[#allocation2 + $0x29]]
    %v188 = vstv %s187
    %v189 = vmul.f32 %v188, %v75
    %v190 = vadd.f32 %v174, %v189
    %s191 = sld [smem:[#allocation2 + $0x4d]]
    %v192 = vstv %s191
    %v193 = vmul.f32 %v192, %v75
    %v194 = vadd.f32 %v178, %v193
    %s195 = sld [smem:[#allocation2 + $0x71]]
    %v196 = vstv %s195
    %v197 = vmul.f32 %v196, %v75
    %v198 = vadd.f32 %v182, %v197
    %s199 = sld [smem:[#allocation2 + $0x6]]
    %v200 = vstv %s199
    %v201 = vmul.f32 %v200, %v90
    %v202 = vadd.f32 %v186, %v201
    %s203 = sld [smem:[#allocation2 + $0x2a]]
    %v204 = vstv %s203
    %v205 = vmul.f32 %v204, %v90
    %v206 = vadd.f32 %v190, %v205
    %s207 = sld [smem:[#allocation2 + $0x4e]]
    %v208 = vstv %s207
    %v209 = vmul.f32 %v208, %v90
    %v210 = vadd.f32 %v194, %v209
    %s211 = sld [smem:[#allocation2 + $0x72]]
    %v212 = vstv %s211
    %v213 = vmul.f32 %v212, %v90
    %v214 = vadd.f32 %v198, %v213
    %s215 = sld [smem:[#allocation2 + $0x7]]
    %v216 = vstv %s215
    %v217 = vmul.f32 %v216, %v77
    %v218 = vadd.f32 %v202, %v217
    %s219 = sld [smem:[#allocation2 + $0x2b]]
    %v220 = vstv %s219
    %v221 = vmul.f32 %v220, %v77
    %v222 = vadd.f32 %v206, %v221
    %s223 = sld [smem:[#allocation2 + $0x4f]]
    %v224 = vstv %s223
    %v225 = vmul.f32 %v224, %v77
    %v226 = vadd.f32 %v210, %v225
    %s227 = sld [smem:[#allocation2 + $0x73]]
    %v228 = vstv %s227
    %v229 = vmul.f32 %v228, %v77
    %v230 = vadd.f32 %v214, %v229
    %s231 = sld [smem:[#allocation2 + $0x8]]
    %v232 = vstv %s231
    %v233 = vmul.f32 %v232, %v79
    %v234 = vadd.f32 %v218, %v233
    %s235 = sld [smem:[#allocation2 + $0x2c]]
    %v236 = vstv %s235
    %v237 = vmul.f32 %v236, %v79
    %v238 = vadd.f32 %v222, %v237
    %s239 = sld [smem:[#allocation2 + $0x50]]
    %v240 = vstv %s239
    %v241 = vmul.f32 %v240, %v79
    %v242 = vadd.f32 %v226, %v241
    %s243 = sld [smem:[#allocation2 + $0x74]]
    %v244 = vstv %s243
    %v245 = vmul.f32 %v244, %v79
    %v246 = vadd.f32 %v230, %v245
    %v247 = vmax.f32 %v73, %v75
    %v248 = vmax.f32 %v77, %v79
    %v249 = vmax.f32 %v247, %v248
    %s250 = sld [smem:[#allocation7]]
    %v251 = vstv %s250
    %v252 = vmul.f32 %v249, %v251
    %s253 = sld [smem:[#allocation8]]
    %v254 = vstv %s253
    %v255 = vadd.f32 %v252, %v254
    %v256 = vmax.f32 %v255, 0.0
    %s257 = scalar_lea.vmem [#allocation10], 32
    %vm258 = vcmask 64512
    %259 = vst.msk [vmem:[%s257] sm:$0xff] %vm258, %v256
    %s260 = scalar_lea.vmem %s0, 8
    %v261 = vld [vmem:[%s260] sm:$0xff]
    %s262 = scalar_lea.vmem %s0, 40
    %v263 = vld [vmem:[%s262] sm:$0xff]
    %s264 = scalar_lea.vmem %s0, 72
    %v265 = vld [vmem:[%s264] sm:$0xff]
    %s266 = scalar_lea.vmem %s0, 104
    %v267 = vld [vmem:[%s266] sm:$0xff]
    %269 = vrot.lane.b32.xlu0 %v263, 1
    %v270 = vpop.permute.xlu0 %269
    %v272 = vsel %vm84, 0.0, %v270
    %274 = vrot.lane.b32.xlu0 %v267, 1
    %v275 = vpop.permute.xlu0 %274
    %v277 = vsel %vm84, 0.0, %v275
    %v278 = vrot.slane %v72, 1
    %v281 = vrot.slane %v265, 7
    %v283 = vsel %vm94, %v278, %v281
    %v284 = vrot.slane %v72, 5
    %v286 = vrot.slane %v267, 7
    %v288 = vsel %vm94, %v284, %v286
    %290 = vrot.lane.b32.xlu0 %v288, 1
    %v291 = vpop.permute.xlu0 %290
    %v293 = vsel %vm84, 0.0, %v291
    %s294 = sld [smem:[#allocation2 + $0x9]]
    %v295 = vstv %s294
    %v296 = vmul.f32 %v295, %v293
    %v297 = vadd.f32 %v234, %v296
    %s298 = sld [smem:[#allocation2 + $0x2d]]
    %v299 = vstv %s298
    %v300 = vmul.f32 %v299, %v293
    %v301 = vadd.f32 %v238, %v300
    %s302 = sld [smem:[#allocation2 + $0x51]]
    %v303 = vstv %s302
    %v304 = vmul.f32 %v303, %v293
    %v305 = vadd.f32 %v242, %v304
    %s306 = sld [smem:[#allocation2 + $0x75]]
    %v307 = vstv %s306
    %v308 = vmul.f32 %v307, %v293
    %v309 = vadd.f32 %v246, %v308
    %s310 = sld [smem:[#allocation2 + $0xa]]
    %v311 = vstv %s310
    %v312 = vmul.f32 %v311, %v283
    %v313 = vadd.f32 %v297, %v312
    %s314 = sld [smem:[#allocation2 + $0x2e]]
    %v315 = vstv %s314
    %v316 = vmul.f32 %v315, %v283
    %v317 = vadd.f32 %v301, %v316
    %s318 = sld [smem:[#allocation2 + $0x52]]
    %v319 = vstv %s318
    %v320 = vmul.f32 %v319, %v283
    %v321 = vadd.f32 %v305, %v320
    %s322 = sld [smem:[#allocation2 + $0x76]]
    %v323 = vstv %s322
    %v324 = vmul.f32 %v323, %v283
    %v325 = vadd.f32 %v309, %v324
    %s326 = sld [smem:[#allocation2 + $0xb]]
    %v327 = vstv %s326
    %v328 = vmul.f32 %v327, %v288
    %v329 = vadd.f32 %v313, %v328
    %s330 = sld [smem:[#allocation2 + $0x2f]]
    %v331 = vstv %s330
    %v332 = vmul.f32 %v331, %v288
    %v333 = vadd.f32 %v317, %v332
    %s334 = sld [smem:[#allocation2 + $0x53]]
    %v335 = vstv %s334
    %v336 = vmul.f32 %v335, %v288
    %v337 = vadd.f32 %v321, %v336
    %s338 = sld [smem:[#allocation2 + $0x77]]
    %v339 = vstv %s338
    %v340 = vmul.f32 %v339, %v288
    %v341 = vadd.f32 %v325, %v340
    %s342 = sld [smem:[#allocation2 + $0xc]]
    %v343 = vstv %s342
    %v344 = vmul.f32 %v343, %v272
    %v345 = vadd.f32 %v329, %v344
    %s346 = sld [smem:[#allocation2 + $0x30]]
    %v347 = vstv %s346
    %v348 = vmul.f32 %v347, %v272
    %v349 = vadd.f32 %v333, %v348
    %s350 = sld [smem:[#allocation2 + $0x54]]
    %v351 = vstv %s350
    %v352 = vmul.f32 %v351, %v272
    %v353 = vadd.f32 %v337, %v352
    %s354 = sld [smem:[#allocation2 + $0x78]]
    %v355 = vstv %s354
    %v356 = vmul.f32 %v355, %v272
    %v357 = vadd.f32 %v341, %v356
    %s358 = sld [smem:[#allocation2 + $0xd]]
    %v359 = vstv %s358
    %v360 = vmul.f32 %v359, %v261
    %v361 = vadd.f32 %v345, %v360
    %s362 = sld [smem:[#allocation2 + $0x31]]
    %v363 = vstv %s362
    %v364 = vmul.f32 %v363, %v261
    %v365 = vadd.f32 %v349, %v364
    %s366 = sld [smem:[#allocation2 + $0x55]]
    %v367 = vstv %s366
    %v368 = vmul.f32 %v367, %v261
    %v369 = vadd.f32 %v353, %v368
    %s370 = sld [smem:[#allocation2 + $0x79]]
    %v371 = vstv %s370
    %v372 = vmul.f32 %v371, %v261
    %v373 = vadd.f32 %v357, %v372
    %s374 = sld [smem:[#allocation2 + $0xe]]
    %v375 = vstv %s374
    %v376 = vmul.f32 %v375, %v263
    %v377 = vadd.f32 %v361, %v376
    %s378 = sld [smem:[#allocation2 + $0x32]]
    %v379 = vstv %s378
    %v380 = vmul.f32 %v379, %v263
    %v381 = vadd.f32 %v365, %v380
    %s382 = sld [smem:[#allocation2 + $0x56]]
    %v383 = vstv %s382
    %v384 = vmul.f32 %v383, %v263
    %v385 = vadd.f32 %v369, %v384
    %s386 = sld [smem:[#allocation2 + $0x7a]]
    %v387 = vstv %s386
    %v388 = vmul.f32 %v387, %v263
    %v389 = vadd.f32 %v373, %v388
    %s390 = sld [smem:[#allocation2 + $0xf]]
    %v391 = vstv %s390
    %v392 = vmul.f32 %v391, %v277
    %v393 = vadd.f32 %v377, %v392
    %s394 = sld [smem:[#allocation2 + $0x33]]
    %v395 = vstv %s394
    %v396 = vmul.f32 %v395, %v277
    %v397 = vadd.f32 %v381, %v396
    %s398 = sld [smem:[#allocation2 + $0x57]]
    %v399 = vstv %s398
    %v400 = vmul.f32 %v399, %v277
    %v401 = vadd.f32 %v385, %v400
    %s402 = sld [smem:[#allocation2 + $0x7b]]
    %v403 = vstv %s402
    %v404 = vmul.f32 %v403, %v277
    %v405 = vadd.f32 %v389, %v404
    %s406 = sld [smem:[#allocation2 + $0x10]]
    %v407 = vstv %s406
    %v408 = vmul.f32 %v407, %v265
    %v409 = vadd.f32 %v393, %v408
    %s410 = sld [smem:[#allocation2 + $0x34]]
    %v411 = vstv %s410
    %v412 = vmul.f32 %v411, %v265
    %v413 = vadd.f32 %v397, %v412
    %s414 = sld [smem:[#allocation2 + $0x58]]
    %v415 = vstv %s414
    %v416 = vmul.f32 %v415, %v265
    %v417 = vadd.f32 %v401, %v416
    %s418 = sld [smem:[#allocation2 + $0x7c]]
    %v419 = vstv %s418
    %v420 = vmul.f32 %v419, %v265
    %v421 = vadd.f32 %v405, %v420
    %s422 = sld [smem:[#allocation2 + $0x11]]
    %v423 = vstv %s422
    %v424 = vmul.f32 %v423, %v267
    %v425 = vadd.f32 %v409, %v424
    %s426 = sld [smem:[#allocation2 + $0x35]]
    %v427 = vstv %s426
    %v428 = vmul.f32 %v427, %v267
    %v429 = vadd.f32 %v413, %v428
    %s430 = sld [smem:[#allocation2 + $0x59]]
    %v431 = vstv %s430
    %v432 = vmul.f32 %v431, %v267
    %v433 = vadd.f32 %v417, %v432
    %s434 = sld [smem:[#allocation2 + $0x7d]]
    %v435 = vstv %s434
    %v436 = vmul.f32 %v435, %v267
    %v437 = vadd.f32 %v421, %v436
    %v438 = vmax.f32 %v261, %v263
    %v439 = vmax.f32 %v265, %v267
    %v440 = vmax.f32 %v438, %v439
    %s441 = sld [smem:[#allocation7 + $0x1]]
    %v442 = vstv %s441
    %v443 = vmul.f32 %v440, %v442
    %s444 = sld [smem:[#allocation8 + $0x1]]
    %v445 = vstv %s444
    %v446 = vadd.f32 %v443, %v445
    %v447 = vmax.f32 %v446, 0.0
    %s448 = scalar_lea.vmem [#allocation10], 40
    %449 = vst.msk [vmem:[%s448] sm:$0xff] %vm258, %v447
    %s450 = scalar_lea.vmem %s0, 16
    %v451 = vld [vmem:[%s450] sm:$0xff]
    %s452 = scalar_lea.vmem %s0, 48
    %v453 = vld [vmem:[%s452] sm:$0xff]
    %s454 = scalar_lea.vmem %s0, 80
    %v455 = vld [vmem:[%s454] sm:$0xff]
    %s456 = scalar_lea.vmem %s0, 112
    %v457 = vld [vmem:[%s456] sm:$0xff]
    %459 = vrot.lane.b32.xlu0 %v453, 1
    %v460 = vpop.permute.xlu0 %459
    %v462 = vsel %vm84, 0.0, %v460
    %464 = vrot.lane.b32.xlu0 %v457, 1
    %v465 = vpop.permute.xlu0 %464
    %v467 = vsel %vm84, 0.0, %v465
    %v468 = vrot.slane %v72, 2
    %v471 = vrot.slane %v455, 7
    %v473 = vsel %vm94, %v468, %v471
    %v474 = vrot.slane %v72, 6
    %v476 = vrot.slane %v457, 7
    %v478 = vsel %vm94, %v474, %v476
    %480 = vrot.lane.b32.xlu0 %v478, 1
    %v481 = vpop.permute.xlu0 %480
    %v483 = vsel %vm84, 0.0, %v481
    %s484 = sld [smem:[#allocation2 + $0x12]]
    %v485 = vstv %s484
    %v486 = vmul.f32 %v485, %v483
    %v487 = vadd.f32 %v425, %v486
    %s488 = sld [smem:[#allocation2 + $0x36]]
    %v489 = vstv %s488
    %v490 = vmul.f32 %v489, %v483
    %v491 = vadd.f32 %v429, %v490
    %s492 = sld [smem:[#allocation2 + $0x5a]]
    %v493 = vstv %s492
    %v494 = vmul.f32 %v493, %v483
    %v495 = vadd.f32 %v433, %v494
    %s496 = sld [smem:[#allocation2 + $0x7e]]
    %v497 = vstv %s496
    %v498 = vmul.f32 %v497, %v483
    %v499 = vadd.f32 %v437, %v498
    %s500 = sld [smem:[#allocation2 + $0x13]]
    %v501 = vstv %s500
    %v502 = vmul.f32 %v501, %v473
    %v503 = vadd.f32 %v487, %v502
    %s504 = sld [smem:[#allocation2 + $0x37]]
    %v505 = vstv %s504
    %v506 = vmul.f32 %v505, %v473
    %v507 = vadd.f32 %v491, %v506
    %s508 = sld [smem:[#allocation2 + $0x5b]]
    %v509 = vstv %s508
    %v510 = vmul.f32 %v509, %v473
    %v511 = vadd.f32 %v495, %v510
    %s512 = sld [smem:[#allocation2 + $0x7f]]
    %v513 = vstv %s512
    %v514 = vmul.f32 %v513, %v473
    %v515 = vadd.f32 %v499, %v514
    %s516 = sld [smem:[#allocation2 + $0x14]]
    %v517 = vstv %s516
    %v518 = vmul.f32 %v517, %v478
    %v519 = vadd.f32 %v503, %v518
    %s520 = sld [smem:[#allocation2 + $0x38]]
    %v521 = vstv %s520
    %v522 = vmul.f32 %v521, %v478
    %v523 = vadd.f32 %v507, %v522
    %s524 = sld [smem:[#allocation2 + $0x5c]]
    %v525 = vstv %s524
    %v526 = vmul.f32 %v525, %v478
    %v527 = vadd.f32 %v511, %v526
    %s528 = sld [smem:[#allocation2 + $0x80]]
    %v529 = vstv %s528
    %v530 = vmul.f32 %v529, %v478
    %v531 = vadd.f32 %v515, %v530
    %s532 = sld [smem:[#allocation2 + $0x15]]
    %v533 = vstv %s532
    %v534 = vmul.f32 %v533, %v462
    %v535 = vadd.f32 %v519, %v534
    %s536 = sld [smem:[#allocation2 + $0x39]]
    %v537 = vstv %s536
    %v538 = vmul.f32 %v537, %v462
    %v539 = vadd.f32 %v523, %v538
    %s540 = sld [smem:[#allocation2 + $0x5d]]
    %v541 = vstv %s540
    %v542 = vmul.f32 %v541, %v462
    %v543 = vadd.f32 %v527, %v542
    %s544 = sld [smem:[#allocation2 + $0x81]]
    %v545 = vstv %s544
    %v546 = vmul.f32 %v545, %v462
    %v547 = vadd.f32 %v531, %v546
    %s548 = sld [smem:[#allocation2 + $0x16]]
    %v549 = vstv %s548
    %v550 = vmul.f32 %v549, %v451
    %v551 = vadd.f32 %v535, %v550
    %s552 = sld [smem:[#allocation2 + $0x3a]]
    %v553 = vstv %s552
    %v554 = vmul.f32 %v553, %v451
    %v555 = vadd.f32 %v539, %v554
    %s556 = sld [smem:[#allocation2 + $0x5e]]
    %v557 = vstv %s556
    %v558 = vmul.f32 %v557, %v451
    %v559 = vadd.f32 %v543, %v558
    %s560 = sld [smem:[#allocation2 + $0x82]]
    %v561 = vstv %s560
    %v562 = vmul.f32 %v561, %v451
    %v563 = vadd.f32 %v547, %v562
    %s564 = sld [smem:[#allocation2 + $0x17]]
    %v565 = vstv %s564
    %v566 = vmul.f32 %v565, %v453
    %v567 = vadd.f32 %v551, %v566
    %s568 = sld [smem:[#allocation2 + $0x3b]]
    %v569 = vstv %s568
    %v570 = vmul.f32 %v569, %v453
    %v571 = vadd.f32 %v555, %v570
    %s572 = sld [smem:[#allocation2 + $0x5f]]
    %v573 = vstv %s572
    %v574 = vmul.f32 %v573, %v453
    %v575 = vadd.f32 %v559, %v574
    %s576 = sld [smem:[#allocation2 + $0x83]]
    %v577 = vstv %s576
    %v578 = vmul.f32 %v577, %v453
    %v579 = vadd.f32 %v563, %v578
    %s580 = sld [smem:[#allocation2 + $0x18]]
    %v581 = vstv %s580
    %v582 = vmul.f32 %v581, %v467
    %v583 = vadd.f32 %v567, %v582
    %s584 = sld [smem:[#allocation2 + $0x3c]]
    %v585 = vstv %s584
    %v586 = vmul.f32 %v585, %v467
    %v587 = vadd.f32 %v571, %v586
    %s588 = sld [smem:[#allocation2 + $0x60]]
    %v589 = vstv %s588
    %v590 = vmul.f32 %v589, %v467
    %v591 = vadd.f32 %v575, %v590
    %s592 = sld [smem:[#allocation2 + $0x84]]
    %v593 = vstv %s592
    %v594 = vmul.f32 %v593, %v467
    %v595 = vadd.f32 %v579, %v594
    %s596 = sld [smem:[#allocation2 + $0x19]]
    %v597 = vstv %s596
    %v598 = vmul.f32 %v597, %v455
    %v599 = vadd.f32 %v583, %v598
    %s600 = sld [smem:[#allocation2 + $0x3d]]
    %v601 = vstv %s600
    %v602 = vmul.f32 %v601, %v455
    %v603 = vadd.f32 %v587, %v602
    %s604 = sld [smem:[#allocation2 + $0x61]]
    %v605 = vstv %s604
    %v606 = vmul.f32 %v605, %v455
    %v607 = vadd.f32 %v591, %v606
    %s608 = sld [smem:[#allocation2 + $0x85]]
    %v609 = vstv %s608
    %v610 = vmul.f32 %v609, %v455
    %v611 = vadd.f32 %v595, %v610
    %s612 = sld [smem:[#allocation2 + $0x1a]]
    %v613 = vstv %s612
    %v614 = vmul.f32 %v613, %v457
    %v615 = vadd.f32 %v599, %v614
    %s616 = sld [smem:[#allocation2 + $0x3e]]
    %v617 = vstv %s616
    %v618 = vmul.f32 %v617, %v457
    %v619 = vadd.f32 %v603, %v618
    %s620 = sld [smem:[#allocation2 + $0x62]]
    %v621 = vstv %s620
    %v622 = vmul.f32 %v621, %v457
    %v623 = vadd.f32 %v607, %v622
    %s624 = sld [smem:[#allocation2 + $0x86]]
    %v625 = vstv %s624
    %v626 = vmul.f32 %v625, %v457
    %v627 = vadd.f32 %v611, %v626
    %v628 = vmax.f32 %v451, %v453
    %v629 = vmax.f32 %v455, %v457
    %v630 = vmax.f32 %v628, %v629
    %s631 = sld [smem:[#allocation7 + $0x2]]
    %v632 = vstv %s631
    %v633 = vmul.f32 %v630, %v632
    %s634 = sld [smem:[#allocation8 + $0x2]]
    %v635 = vstv %s634
    %v636 = vadd.f32 %v633, %v635
    %v637 = vmax.f32 %v636, 0.0
    %s638 = scalar_lea.vmem [#allocation10], 48
    %639 = vst.msk [vmem:[%s638] sm:$0xff] %vm258, %v637
    %s640 = scalar_lea.vmem %s0, 24
    %v641 = vld [vmem:[%s640] sm:$0xff]
    %s642 = scalar_lea.vmem %s0, 56
    %v643 = vld [vmem:[%s642] sm:$0xff]
    %s644 = scalar_lea.vmem %s0, 88
    %v645 = vld [vmem:[%s644] sm:$0xff]
    %s646 = scalar_lea.vmem %s0, 120
    %v647 = vld [vmem:[%s646] sm:$0xff]
    %649 = vrot.lane.b32.xlu0 %v643, 1
    %v650 = vpop.permute.xlu0 %649
    %v652 = vsel %vm84, 0.0, %v650
    %654 = vrot.lane.b32.xlu0 %v647, 1
    %v655 = vpop.permute.xlu0 %654
    %v657 = vsel %vm84, 0.0, %v655
    %v658 = vrot.slane %v72, 3
    %v661 = vrot.slane %v645, 7
    %v663 = vsel %vm94, %v658, %v661
    %v664 = vrot.slane %v72, 7
    %v666 = vrot.slane %v647, 7
    %v668 = vsel %vm94, %v664, %v666
    %670 = vrot.lane.b32.xlu0 %v668, 1
    %v671 = vpop.permute.xlu0 %670
    %v673 = vsel %vm84, 0.0, %v671
    %s674 = sld [smem:[#allocation2 + $0x1b]]
    %v675 = vstv %s674
    %v676 = vmul.f32 %v675, %v673
    %v677 = vadd.f32 %v615, %v676
    %s678 = sld [smem:[#allocation2 + $0x3f]]
    %v679 = vstv %s678
    %v680 = vmul.f32 %v679, %v673
    %v681 = vadd.f32 %v619, %v680
    %s682 = sld [smem:[#allocation2 + $0x63]]
    %v683 = vstv %s682
    %v684 = vmul.f32 %v683, %v673
    %v685 = vadd.f32 %v623, %v684
    %s686 = sld [smem:[#allocation2 + $0x87]]
    %v687 = vstv %s686
    %v688 = vmul.f32 %v687, %v673
    %v689 = vadd.f32 %v627, %v688
    %s690 = sld [smem:[#allocation2 + $0x1c]]
    %v691 = vstv %s690
    %v692 = vmul.f32 %v691, %v663
    %v693 = vadd.f32 %v677, %v692
    %s694 = sld [smem:[#allocation2 + $0x40]]
    %v695 = vstv %s694
    %v696 = vmul.f32 %v695, %v663
    %v697 = vadd.f32 %v681, %v696
    %s698 = sld [smem:[#allocation2 + $0x64]]
    %v699 = vstv %s698
    %v700 = vmul.f32 %v699, %v663
    %v701 = vadd.f32 %v685, %v700
    %s702 = sld [smem:[#allocation2 + $0x88]]
    %v703 = vstv %s702
    %v704 = vmul.f32 %v703, %v663
    %v705 = vadd.f32 %v689, %v704
    %s706 = sld [smem:[#allocation2 + $0x1d]]
    %v707 = vstv %s706
    %v708 = vmul.f32 %v707, %v668
    %v709 = vadd.f32 %v693, %v708
    %s710 = sld [smem:[#allocation2 + $0x41]]
    %v711 = vstv %s710
    %v712 = vmul.f32 %v711, %v668
    %v713 = vadd.f32 %v697, %v712
    %s714 = sld [smem:[#allocation2 + $0x65]]
    %v715 = vstv %s714
    %v716 = vmul.f32 %v715, %v668
    %v717 = vadd.f32 %v701, %v716
    %s718 = sld [smem:[#allocation2 + $0x89]]
    %v719 = vstv %s718
    %v720 = vmul.f32 %v719, %v668
    %v721 = vadd.f32 %v705, %v720
    %s722 = sld [smem:[#allocation2 + $0x1e]]
    %v723 = vstv %s722
    %v724 = vmul.f32 %v723, %v652
    %v725 = vadd.f32 %v709, %v724
    %s726 = sld [smem:[#allocation2 + $0x42]]
    %v727 = vstv %s726
    %v728 = vmul.f32 %v727, %v652
    %v729 = vadd.f32 %v713, %v728
    %s730 = sld [smem:[#allocation2 + $0x66]]
    %v731 = vstv %s730
    %v732 = vmul.f32 %v731, %v652
    %v733 = vadd.f32 %v717, %v732
    %s734 = sld [smem:[#allocation2 + $0x8a]]
    %v735 = vstv %s734
    %v736 = vmul.f32 %v735, %v652
    %v737 = vadd.f32 %v721, %v736
    %s738 = sld [smem:[#allocation2 + $0x1f]]
    %v739 = vstv %s738
    %v740 = vmul.f32 %v739, %v641
    %v741 = vadd.f32 %v725, %v740
    %s742 = sld [smem:[#allocation2 + $0x43]]
    %v743 = vstv %s742
    %v744 = vmul.f32 %v743, %v641
    %v745 = vadd.f32 %v729, %v744
    %s746 = sld [smem:[#allocation2 + $0x67]]
    %v747 = vstv %s746
    %v748 = vmul.f32 %v747, %v641
    %v749 = vadd.f32 %v733, %v748
    %s750 = sld [smem:[#allocation2 + $0x8b]]
    %v751 = vstv %s750
    %v752 = vmul.f32 %v751, %v641
    %v753 = vadd.f32 %v737, %v752
    %s754 = sld [smem:[#allocation2 + $0x20]]
    %v755 = vstv %s754
    %v756 = vmul.f32 %v755, %v643
    %v757 = vadd.f32 %v741, %v756
    %s758 = sld [smem:[#allocation2 + $0x44]]
    %v759 = vstv %s758
    %v760 = vmul.f32 %v759, %v643
    %v761 = vadd.f32 %v745, %v760
    %s762 = sld [smem:[#allocation2 + $0x68]]
    %v763 = vstv %s762
    %v764 = vmul.f32 %v763, %v643
    %v765 = vadd.f32 %v749, %v764
    %s766 = sld [smem:[#allocation2 + $0x8c]]
    %v767 = vstv %s766
    %v768 = vmul.f32 %v767, %v643
    %v769 = vadd.f32 %v753, %v768
    %s770 = sld [smem:[#allocation2 + $0x21]]
    %v771 = vstv %s770
    %v772 = vmul.f32 %v771, %v657
    %v773 = vadd.f32 %v757, %v772
    %s774 = sld [smem:[#allocation2 + $0x45]]
    %v775 = vstv %s774
    %v776 = vmul.f32 %v775, %v657
    %v777 = vadd.f32 %v761, %v776
    %s778 = sld [smem:[#allocation2 + $0x69]]
    %v779 = vstv %s778
    %v780 = vmul.f32 %v779, %v657
    %v781 = vadd.f32 %v765, %v780
    %s782 = sld [smem:[#allocation2 + $0x8d]]
    %v783 = vstv %s782
    %v784 = vmul.f32 %v783, %v657
    %v785 = vadd.f32 %v769, %v784
    %s786 = sld [smem:[#allocation2 + $0x22]]
    %v787 = vstv %s786
    %v788 = vmul.f32 %v787, %v645
    %v789 = vadd.f32 %v773, %v788
    %s790 = sld [smem:[#allocation2 + $0x46]]
    %v791 = vstv %s790
    %v792 = vmul.f32 %v791, %v645
    %v793 = vadd.f32 %v777, %v792
    %s794 = sld [smem:[#allocation2 + $0x6a]]
    %v795 = vstv %s794
    %v796 = vmul.f32 %v795, %v645
    %v797 = vadd.f32 %v781, %v796
    %s798 = sld [smem:[#allocation2 + $0x8e]]
    %v799 = vstv %s798
    %v800 = vmul.f32 %v799, %v645
    %v801 = vadd.f32 %v785, %v800
    %s802 = sld [smem:[#allocation2 + $0x23]]
    %v803 = vstv %s802
    %v804 = vmul.f32 %v803, %v647
    %v805 = vadd.f32 %v789, %v804
    %s806 = sld [smem:[#allocation2 + $0x47]]
    %v807 = vstv %s806
    %v808 = vmul.f32 %v807, %v647
    %v809 = vadd.f32 %v793, %v808
    %s810 = sld [smem:[#allocation2 + $0x6b]]
    %v811 = vstv %s810
    %v812 = vmul.f32 %v811, %v647
    %v813 = vadd.f32 %v797, %v812
    %s814 = sld [smem:[#allocation2 + $0x8f]]
    %v815 = vstv %s814
    %v816 = vmul.f32 %v815, %v647
    %v817 = vadd.f32 %v801, %v816
    %v818 = vmax.f32 %v641, %v643
    %v819 = vmax.f32 %v645, %v647
    %v820 = vmax.f32 %v818, %v819
    %s821 = sld [smem:[#allocation7 + $0x3]]
    %v822 = vstv %s821
    %v823 = vmul.f32 %v820, %v822
    %s824 = sld [smem:[#allocation8 + $0x3]]
    %v825 = vstv %s824
    %v826 = vadd.f32 %v823, %v825
    %v827 = vmax.f32 %v826, 0.0
    %s828 = scalar_lea.vmem [#allocation10], 56
    %829 = vst.msk [vmem:[%s828] sm:$0xff] %vm258, %v827
    %s830 = sld [smem:[#allocation5]]
    %v831 = vstv %s830
    %v832 = vadd.f32 %v805, %v831
    %v833 = vmax.f32 %v832, 0.0
    %834 = vst.msk [vmem:[#allocation10] sm:$0xff] %vm258, %v833
    %s835 = sld [smem:[#allocation5 + $0x1]]
    %v836 = vstv %s835
    %v837 = vadd.f32 %v809, %v836
    %v838 = vmax.f32 %v837, 0.0
    %s839 = scalar_lea.vmem [#allocation10], 8
    %840 = vst.msk [vmem:[%s839] sm:$0xff] %vm258, %v838
    %s841 = sld [smem:[#allocation5 + $0x2]]
    %v842 = vstv %s841
    %v843 = vadd.f32 %v813, %v842
    %v844 = vmax.f32 %v843, 0.0
    %s845 = scalar_lea.vmem [#allocation10], 16
    %846 = vst.msk [vmem:[%s845] sm:$0xff] %vm258, %v844
    %s847 = sld [smem:[#allocation5 + $0x3]]
    %v848 = vstv %s847
    %v849 = vadd.f32 %v817, %v848
    %v850 = vmax.f32 %v849, 0.0
    %s851 = scalar_lea.vmem [#allocation10], 24
    %852 = vst.msk [vmem:[%s851] sm:$0xff] %vm258, %v850
    %s853 = scalar_lea.vmem %s1, 8
    %v854 = vld [vmem:[%s853] sm:$0xff]
    %s855 = scalar_lea.vmem %s0, 128
    %v856 = vld [vmem:[%s855] sm:$0xff]
    %s857 = scalar_lea.vmem %s0, 160
    %v858 = vld [vmem:[%s857] sm:$0xff]
    %s859 = scalar_lea.vmem %s0, 192
    %v860 = vld [vmem:[%s859] sm:$0xff]
    %s861 = scalar_lea.vmem %s0, 224
    %v862 = vld [vmem:[%s861] sm:$0xff]
    %864 = vrot.lane.b32.xlu0 %v858, 1
    %v865 = vpop.permute.xlu0 %864
    %v867 = vsel %vm84, 0.0, %v865
    %869 = vrot.lane.b32.xlu0 %v862, 1
    %v870 = vpop.permute.xlu0 %869
    %v872 = vsel %vm84, 0.0, %v870
    %v874 = vrot.slane %v860, 7
    %v876 = vsel %vm94, %v854, %v874
    %v878 = vrot.slane %v854, 4
    %v880 = vrot.slane %v862, 7
    %v882 = vsel %vm94, %v878, %v880
    %884 = vrot.lane.b32.xlu0 %v882, 1
    %v885 = vpop.permute.xlu0 %884
    %v887 = vsel %vm84, 0.0, %v885
    %s888 = sld [smem:[#allocation2]]
    %v889 = vstv %s888
    %v890 = vmul.f32 %v889, %v887
    %s891 = sld [smem:[#allocation2 + $0x24]]
    %v892 = vstv %s891
    %v893 = vmul.f32 %v892, %v887
    %s894 = sld [smem:[#allocation2 + $0x48]]
    %v895 = vstv %s894
    %v896 = vmul.f32 %v895, %v887
    %s897 = sld [smem:[#allocation2 + $0x6c]]
    %v898 = vstv %s897
    %v899 = vmul.f32 %v898, %v887
    %s900 = sld [smem:[#allocation2 + $0x1]]
    %v901 = vstv %s900
    %v902 = vmul.f32 %v901, %v876
    %v903 = vadd.f32 %v890, %v902
    %s904 = sld [smem:[#allocation2 + $0x25]]
    %v905 = vstv %s904
    %v906 = vmul.f32 %v905, %v876
    %v907 = vadd.f32 %v893, %v906
    %s908 = sld [smem:[#allocation2 + $0x49]]
    %v909 = vstv %s908
    %v910 = vmul.f32 %v909, %v876
    %v911 = vadd.f32 %v896, %v910
    %s912 = sld [smem:[#allocation2 + $0x6d]]
    %v913 = vstv %s912
    %v914 = vmul.f32 %v913, %v876
    %v915 = vadd.f32 %v899, %v914
    %s916 = sld [smem:[#allocation2 + $0x2]]
    %v917 = vstv %s916
    %v918 = vmul.f32 %v917, %v882
    %v919 = vadd.f32 %v903, %v918
    %s920 = sld [smem:[#allocation2 + $0x26]]
    %v921 = vstv %s920
    %v922 = vmul.f32 %v921, %v882
    %v923 = vadd.f32 %v907, %v922
    %s924 = sld [smem:[#allocation2 + $0x4a]]
    %v925 = vstv %s924
    %v926 = vmul.f32 %v925, %v882
    %v927 = vadd.f32 %v911, %v926
    %s928 = sld [smem:[#allocation2 + $0x6e]]
    %v929 = vstv %s928
    %v930 = vmul.f32 %v929, %v882
    %v931 = vadd.f32 %v915, %v930
    %s932 = sld [smem:[#allocation2 + $0x3]]
    %v933 = vstv %s932
    %v934 = vmul.f32 %v933, %v867
    %v935 = vadd.f32 %v919, %v934
    %s936 = sld [smem:[#allocation2 + $0x27]]
    %v937 = vstv %s936
    %v938 = vmul.f32 %v937, %v867
    %v939 = vadd.f32 %v923, %v938
    %s940 = sld [smem:[#allocation2 + $0x4b]]
    %v941 = vstv %s940
    %v942 = vmul.f32 %v941, %v867
    %v943 = vadd.f32 %v927, %v942
    %s944 = sld [smem:[#allocation2 + $0x6f]]
    %v945 = vstv %s944
    %v946 = vmul.f32 %v945, %v867
    %v947 = vadd.f32 %v931, %v946
    %s948 = sld [smem:[#allocation2 + $0x4]]
    %v949 = vstv %s948
    %v950 = vmul.f32 %v949, %v856
    %v951 = vadd.f32 %v935, %v950
    %s952 = sld [smem:[#allocation2 + $0x28]]
    %v953 = vstv %s952
    %v954 = vmul.f32 %v953, %v856
    %v955 = vadd.f32 %v939, %v954
    %s956 = sld [smem:[#allocation2 + $0x4c]]
    %v957 = vstv %s956
    %v958 = vmul.f32 %v957, %v856
    %v959 = vadd.f32 %v943, %v958
    %s960 = sld [smem:[#allocation2 + $0x70]]
    %v961 = vstv %s960
    %v962 = vmul.f32 %v961, %v856
    %v963 = vadd.f32 %v947, %v962
    %s964 = sld [smem:[#allocation2 + $0x5]]
    %v965 = vstv %s964
    %v966 = vmul.f32 %v965, %v858
    %v967 = vadd.f32 %v951, %v966
    %s968 = sld [smem:[#allocation2 + $0x29]]
    %v969 = vstv %s968
    %v970 = vmul.f32 %v969, %v858
    %v971 = vadd.f32 %v955, %v970
    %s972 = sld [smem:[#allocation2 + $0x4d]]
    %v973 = vstv %s972
    %v974 = vmul.f32 %v973, %v858
    %v975 = vadd.f32 %v959, %v974
    %s976 = sld [smem:[#allocation2 + $0x71]]
    %v977 = vstv %s976
    %v978 = vmul.f32 %v977, %v858
    %v979 = vadd.f32 %v963, %v978
    %s980 = sld [smem:[#allocation2 + $0x6]]
    %v981 = vstv %s980
    %v982 = vmul.f32 %v981, %v872
    %v983 = vadd.f32 %v967, %v982
    %s984 = sld [smem:[#allocation2 + $0x2a]]
    %v985 = vstv %s984
    %v986 = vmul.f32 %v985, %v872
    %v987 = vadd.f32 %v971, %v986
    %s988 = sld [smem:[#allocation2 + $0x4e]]
    %v989 = vstv %s988
    %v990 = vmul.f32 %v989, %v872
    %v991 = vadd.f32 %v975, %v990
    %s992 = sld [smem:[#allocation2 + $0x72]]
    %v993 = vstv %s992
    %v994 = vmul.f32 %v993, %v872
    %v995 = vadd.f32 %v979, %v994
    %s996 = sld [smem:[#allocation2 + $0x7]]
    %v997 = vstv %s996
    %v998 = vmul.f32 %v997, %v860
    %v999 = vadd.f32 %v983, %v998
    %s1000 = sld [smem:[#allocation2 + $0x2b]]
    %v1001 = vstv %s1000
    %v1002 = vmul.f32 %v1001, %v860
    %v1003 = vadd.f32 %v987, %v1002
    %s1004 = sld [smem:[#allocation2 + $0x4f]]
    %v1005 = vstv %s1004
    %v1006 = vmul.f32 %v1005, %v860
    %v1007 = vadd.f32 %v991, %v1006
    %s1008 = sld [smem:[#allocation2 + $0x73]]
    %v1009 = vstv %s1008
    %v1010 = vmul.f32 %v1009, %v860
    %v1011 = vadd.f32 %v995, %v1010
    %s1012 = sld [smem:[#allocation2 + $0x8]]
    %v1013 = vstv %s1012
    %v1014 = vmul.f32 %v1013, %v862
    %v1015 = vadd.f32 %v999, %v1014
    %s1016 = sld [smem:[#allocation2 + $0x2c]]
    %v1017 = vstv %s1016
    %v1018 = vmul.f32 %v1017, %v862
    %v1019 = vadd.f32 %v1003, %v1018
    %s1020 = sld [smem:[#allocation2 + $0x50]]
    %v1021 = vstv %s1020
    %v1022 = vmul.f32 %v1021, %v862
    %v1023 = vadd.f32 %v1007, %v1022
    %s1024 = sld [smem:[#allocation2 + $0x74]]
    %v1025 = vstv %s1024
    %v1026 = vmul.f32 %v1025, %v862
    %v1027 = vadd.f32 %v1011, %v1026
    %v1028 = vmax.f32 %v856, %v858
    %v1029 = vmax.f32 %v860, %v862
    %v1030 = vmax.f32 %v1028, %v1029
    %s1031 = sld [smem:[#allocation7]]
    %v1032 = vstv %s1031
    %v1033 = vmul.f32 %v1030, %v1032
    %s1034 = sld [smem:[#allocation8]]
    %v1035 = vstv %s1034
    %v1036 = vadd.f32 %v1033, %v1035
    %v1037 = vmax.f32 %v1036, 0.0
    %s1038 = scalar_lea.vmem [#allocation10], 96
    %1039 = vst.msk [vmem:[%s1038] sm:$0xff] %vm258, %v1037
    %s1040 = scalar_lea.vmem %s0, 136
    %v1041 = vld [vmem:[%s1040] sm:$0xff]
    %s1042 = scalar_lea.vmem %s0, 168
    %v1043 = vld [vmem:[%s1042] sm:$0xff]
    %s1044 = scalar_lea.vmem %s0, 200
    %v1045 = vld [vmem:[%s1044] sm:$0xff]
    %s1046 = scalar_lea.vmem %s0, 232
    %v1047 = vld [vmem:[%s1046] sm:$0xff]
    %1049 = vrot.lane.b32.xlu0 %v1043, 1
    %v1050 = vpop.permute.xlu0 %1049
    %v1052 = vsel %vm84, 0.0, %v1050
    %1054 = vrot.lane.b32.xlu0 %v1047, 1
    %v1055 = vpop.permute.xlu0 %1054
    %v1057 = vsel %vm84, 0.0, %v1055
    %v1058 = vrot.slane %v854, 1
    %v1061 = vrot.slane %v1045, 7
    %v1063 = vsel %vm94, %v1058, %v1061
    %v1064 = vrot.slane %v854, 5
    %v1066 = vrot.slane %v1047, 7
    %v1068 = vsel %vm94, %v1064, %v1066
    %1070 = vrot.lane.b32.xlu0 %v1068, 1
    %v1071 = vpop.permute.xlu0 %1070
    %v1073 = vsel %vm84, 0.0, %v1071
    %s1074 = sld [smem:[#allocation2 + $0x9]]
    %v1075 = vstv %s1074
    %v1076 = vmul.f32 %v1075, %v1073
    %v1077 = vadd.f32 %v1015, %v1076
    %s1078 = sld [smem:[#allocation2 + $0x2d]]
    %v1079 = vstv %s1078
    %v1080 = vmul.f32 %v1079, %v1073
    %v1081 = vadd.f32 %v1019, %v1080
    %s1082 = sld [smem:[#allocation2 + $0x51]]
    %v1083 = vstv %s1082
    %v1084 = vmul.f32 %v1083, %v1073
    %v1085 = vadd.f32 %v1023, %v1084
    %s1086 = sld [smem:[#allocation2 + $0x75]]
    %v1087 = vstv %s1086
    %v1088 = vmul.f32 %v1087, %v1073
    %v1089 = vadd.f32 %v1027, %v1088
    %s1090 = sld [smem:[#allocation2 + $0xa]]
    %v1091 = vstv %s1090
    %v1092 = vmul.f32 %v1091, %v1063
    %v1093 = vadd.f32 %v1077, %v1092
    %s1094 = sld [smem:[#allocation2 + $0x2e]]
    %v1095 = vstv %s1094
    %v1096 = vmul.f32 %v1095, %v1063
    %v1097 = vadd.f32 %v1081, %v1096
    %s1098 = sld [smem:[#allocation2 + $0x52]]
    %v1099 = vstv %s1098
    %v1100 = vmul.f32 %v1099, %v1063
    %v1101 = vadd.f32 %v1085, %v1100
    %s1102 = sld [smem:[#allocation2 + $0x76]]
    %v1103 = vstv %s1102
    %v1104 = vmul.f32 %v1103, %v1063
    %v1105 = vadd.f32 %v1089, %v1104
    %s1106 = sld [smem:[#allocation2 + $0xb]]
    %v1107 = vstv %s1106
    %v1108 = vmul.f32 %v1107, %v1068
    %v1109 = vadd.f32 %v1093, %v1108
    %s1110 = sld [smem:[#allocation2 + $0x2f]]
    %v1111 = vstv %s1110
    %v1112 = vmul.f32 %v1111, %v1068
    %v1113 = vadd.f32 %v1097, %v1112
    %s1114 = sld [smem:[#allocation2 + $0x53]]
    %v1115 = vstv %s1114
    %v1116 = vmul.f32 %v1115, %v1068
    %v1117 = vadd.f32 %v1101, %v1116
    %s1118 = sld [smem:[#allocation2 + $0x77]]
    %v1119 = vstv %s1118
    %v1120 = vmul.f32 %v1119, %v1068
    %v1121 = vadd.f32 %v1105, %v1120
    %s1122 = sld [smem:[#allocation2 + $0xc]]
    %v1123 = vstv %s1122
    %v1124 = vmul.f32 %v1123, %v1052
    %v1125 = vadd.f32 %v1109, %v1124
    %s1126 = sld [smem:[#allocation2 + $0x30]]
    %v1127 = vstv %s1126
    %v1128 = vmul.f32 %v1127, %v1052
    %v1129 = vadd.f32 %v1113, %v1128
    %s1130 = sld [smem:[#allocation2 + $0x54]]
    %v1131 = vstv %s1130
    %v1132 = vmul.f32 %v1131, %v1052
    %v1133 = vadd.f32 %v1117, %v1132
    %s1134 = sld [smem:[#allocation2 + $0x78]]
    %v1135 = vstv %s1134
    %v1136 = vmul.f32 %v1135, %v1052
    %v1137 = vadd.f32 %v1121, %v1136
    %s1138 = sld [smem:[#allocation2 + $0xd]]
    %v1139 = vstv %s1138
    %v1140 = vmul.f32 %v1139, %v1041
    %v1141 = vadd.f32 %v1125, %v1140
    %s1142 = sld [smem:[#allocation2 + $0x31]]
    %v1143 = vstv %s1142
    %v1144 = vmul.f32 %v1143, %v1041
    %v1145 = vadd.f32 %v1129, %v1144
    %s1146 = sld [smem:[#allocation2 + $0x55]]
    %v1147 = vstv %s1146
    %v1148 = vmul.f32 %v1147, %v1041
    %v1149 = vadd.f32 %v1133, %v1148
    %s1150 = sld [smem:[#allocation2 + $0x79]]
    %v1151 = vstv %s1150
    %v1152 = vmul.f32 %v1151, %v1041
    %v1153 = vadd.f32 %v1137, %v1152
    %s1154 = sld [smem:[#allocation2 + $0xe]]
    %v1155 = vstv %s1154
    %v1156 = vmul.f32 %v1155, %v1043
    %v1157 = vadd.f32 %v1141, %v1156
    %s1158 = sld [smem:[#allocation2 + $0x32]]
    %v1159 = vstv %s1158
    %v1160 = vmul.f32 %v1159, %v1043
    %v1161 = vadd.f32 %v1145, %v1160
    %s1162 = sld [smem:[#allocation2 + $0x56]]
    %v1163 = vstv %s1162
    %v1164 = vmul.f32 %v1163, %v1043
    %v1165 = vadd.f32 %v1149, %v1164
    %s1166 = sld [smem:[#allocation2 + $0x7a]]
    %v1167 = vstv %s1166
    %v1168 = vmul.f32 %v1167, %v1043
    %v1169 = vadd.f32 %v1153, %v1168
    %s1170 = sld [smem:[#allocation2 + $0xf]]
    %v1171 = vstv %s1170
    %v1172 = vmul.f32 %v1171, %v1057
    %v1173 = vadd.f32 %v1157, %v1172
    %s1174 = sld [smem:[#allocation2 + $0x33]]
    %v1175 = vstv %s1174
    %v1176 = vmul.f32 %v1175, %v1057
    %v1177 = vadd.f32 %v1161, %v1176
    %s1178 = sld [smem:[#allocation2 + $0x57]]
    %v1179 = vstv %s1178
    %v1180 = vmul.f32 %v1179, %v1057
    %v1181 = vadd.f32 %v1165, %v1180
    %s1182 = sld [smem:[#allocation2 + $0x7b]]
    %v1183 = vstv %s1182
    %v1184 = vmul.f32 %v1183, %v1057
    %v1185 = vadd.f32 %v1169, %v1184
    %s1186 = sld [smem:[#allocation2 + $0x10]]
    %v1187 = vstv %s1186
    %v1188 = vmul.f32 %v1187, %v1045
    %v1189 = vadd.f32 %v1173, %v1188
    %s1190 = sld [smem:[#allocation2 + $0x34]]
    %v1191 = vstv %s1190
    %v1192 = vmul.f32 %v1191, %v1045
    %v1193 = vadd.f32 %v1177, %v1192
    %s1194 = sld [smem:[#allocation2 + $0x58]]
    %v1195 = vstv %s1194
    %v1196 = vmul.f32 %v1195, %v1045
    %v1197 = vadd.f32 %v1181, %v1196
    %s1198 = sld [smem:[#allocation2 + $0x7c]]
    %v1199 = vstv %s1198
    %v1200 = vmul.f32 %v1199, %v1045
    %v1201 = vadd.f32 %v1185, %v1200
    %s1202 = sld [smem:[#allocation2 + $0x11]]
    %v1203 = vstv %s1202
    %v1204 = vmul.f32 %v1203, %v1047
    %v1205 = vadd.f32 %v1189, %v1204
    %s1206 = sld [smem:[#allocation2 + $0x35]]
    %v1207 = vstv %s1206
    %v1208 = vmul.f32 %v1207, %v1047
    %v1209 = vadd.f32 %v1193, %v1208
    %s1210 = sld [smem:[#allocation2 + $0x59]]
    %v1211 = vstv %s1210
    %v1212 = vmul.f32 %v1211, %v1047
    %v1213 = vadd.f32 %v1197, %v1212
    %s1214 = sld [smem:[#allocation2 + $0x7d]]
    %v1215 = vstv %s1214
    %v1216 = vmul.f32 %v1215, %v1047
    %v1217 = vadd.f32 %v1201, %v1216
    %v1218 = vmax.f32 %v1041, %v1043
    %v1219 = vmax.f32 %v1045, %v1047
    %v1220 = vmax.f32 %v1218, %v1219
    %s1221 = sld [smem:[#allocation7 + $0x1]]
    %v1222 = vstv %s1221
    %v1223 = vmul.f32 %v1220, %v1222
    %s1224 = sld [smem:[#allocation8 + $0x1]]
    %v1225 = vstv %s1224
    %v1226 = vadd.f32 %v1223, %v1225
    %v1227 = vmax.f32 %v1226, 0.0
    %s1228 = scalar_lea.vmem [#allocation10], 104
    %1229 = vst.msk [vmem:[%s1228] sm:$0xff] %vm258, %v1227
    %s1230 = scalar_lea.vmem %s0, 144
    %v1231 = vld [vmem:[%s1230] sm:$0xff]
    %s1232 = scalar_lea.vmem %s0, 176
    %v1233 = vld [vmem:[%s1232] sm:$0xff]
    %s1234 = scalar_lea.vmem %s0, 208
    %v1235 = vld [vmem:[%s1234] sm:$0xff]
    %s1236 = scalar_lea.vmem %s0, 240
    %v1237 = vld [vmem:[%s1236] sm:$0xff]
    %1239 = vrot.lane.b32.xlu0 %v1233, 1
    %v1240 = vpop.permute.xlu0 %1239
    %v1242 = vsel %vm84, 0.0, %v1240
    %1244 = vrot.lane.b32.xlu0 %v1237, 1
    %v1245 = vpop.permute.xlu0 %1244
    %v1247 = vsel %vm84, 0.0, %v1245
    %v1248 = vrot.slane %v854, 2
    %v1251 = vrot.slane %v1235, 7
    %v1253 = vsel %vm94, %v1248, %v1251
    %v1254 = vrot.slane %v854, 6
    %v1256 = vrot.slane %v1237, 7
    %v1258 = vsel %vm94, %v1254, %v1256
    %1260 = vrot.lane.b32.xlu0 %v1258, 1
    %v1261 = vpop.permute.xlu0 %1260
    %v1263 = vsel %vm84, 0.0, %v1261
    %s1264 = sld [smem:[#allocation2 + $0x12]]
    %v1265 = vstv %s1264
    %v1266 = vmul.f32 %v1265, %v1263
    %v1267 = vadd.f32 %v1205, %v1266
    %s1268 = sld [smem:[#allocation2 + $0x36]]
    %v1269 = vstv %s1268
    %v1270 = vmul.f32 %v1269, %v1263
    %v1271 = vadd.f32 %v1209, %v1270
    %s1272 = sld [smem:[#allocation2 + $0x5a]]
    %v1273 = vstv %s1272
    %v1274 = vmul.f32 %v1273, %v1263
    %v1275 = vadd.f32 %v1213, %v1274
    %s1276 = sld [smem:[#allocation2 + $0x7e]]
    %v1277 = vstv %s1276
    %v1278 = vmul.f32 %v1277, %v1263
    %v1279 = vadd.f32 %v1217, %v1278
    %s1280 = sld [smem:[#allocation2 + $0x13]]
    %v1281 = vstv %s1280
    %v1282 = vmul.f32 %v1281, %v1253
    %v1283 = vadd.f32 %v1267, %v1282
    %s1284 = sld [smem:[#allocation2 + $0x37]]
    %v1285 = vstv %s1284
    %v1286 = vmul.f32 %v1285, %v1253
    %v1287 = vadd.f32 %v1271, %v1286
    %s1288 = sld [smem:[#allocation2 + $0x5b]]
    %v1289 = vstv %s1288
    %v1290 = vmul.f32 %v1289, %v1253
    %v1291 = vadd.f32 %v1275, %v1290
    %s1292 = sld [smem:[#allocation2 + $0x7f]]
    %v1293 = vstv %s1292
    %v1294 = vmul.f32 %v1293, %v1253
    %v1295 = vadd.f32 %v1279, %v1294
    %s1296 = sld [smem:[#allocation2 + $0x14]]
    %v1297 = vstv %s1296
    %v1298 = vmul.f32 %v1297, %v1258
    %v1299 = vadd.f32 %v1283, %v1298
    %s1300 = sld [smem:[#allocation2 + $0x38]]
    %v1301 = vstv %s1300
    %v1302 = vmul.f32 %v1301, %v1258
    %v1303 = vadd.f32 %v1287, %v1302
    %s1304 = sld [smem:[#allocation2 + $0x5c]]
    %v1305 = vstv %s1304
    %v1306 = vmul.f32 %v1305, %v1258
    %v1307 = vadd.f32 %v1291, %v1306
    %s1308 = sld [smem:[#allocation2 + $0x80]]
    %v1309 = vstv %s1308
    %v1310 = vmul.f32 %v1309, %v1258
    %v1311 = vadd.f32 %v1295, %v1310
    %s1312 = sld [smem:[#allocation2 + $0x15]]
    %v1313 = vstv %s1312
    %v1314 = vmul.f32 %v1313, %v1242
    %v1315 = vadd.f32 %v1299, %v1314
    %s1316 = sld [smem:[#allocation2 + $0x39]]
    %v1317 = vstv %s1316
    %v1318 = vmul.f32 %v1317, %v1242
    %v1319 = vadd.f32 %v1303, %v1318
    %s1320 = sld [smem:[#allocation2 + $0x5d]]
    %v1321 = vstv %s1320
    %v1322 = vmul.f32 %v1321, %v1242
    %v1323 = vadd.f32 %v1307, %v1322
    %s1324 = sld [smem:[#allocation2 + $0x81]]
    %v1325 = vstv %s1324
    %v1326 = vmul.f32 %v1325, %v1242
    %v1327 = vadd.f32 %v1311, %v1326
    %s1328 = sld [smem:[#allocation2 + $0x16]]
    %v1329 = vstv %s1328
    %v1330 = vmul.f32 %v1329, %v1231
    %v1331 = vadd.f32 %v1315, %v1330
    %s1332 = sld [smem:[#allocation2 + $0x3a]]
    %v1333 = vstv %s1332
    %v1334 = vmul.f32 %v1333, %v1231
    %v1335 = vadd.f32 %v1319, %v1334
    %s1336 = sld [smem:[#allocation2 + $0x5e]]
    %v1337 = vstv %s1336
    %v1338 = vmul.f32 %v1337, %v1231
    %v1339 = vadd.f32 %v1323, %v1338
    %s1340 = sld [smem:[#allocation2 + $0x82]]
    %v1341 = vstv %s1340
    %v1342 = vmul.f32 %v1341, %v1231
    %v1343 = vadd.f32 %v1327, %v1342
    %s1344 = sld [smem:[#allocation2 + $0x17]]
    %v1345 = vstv %s1344
    %v1346 = vmul.f32 %v1345, %v1233
    %v1347 = vadd.f32 %v1331, %v1346
    %s1348 = sld [smem:[#allocation2 + $0x3b]]
    %v1349 = vstv %s1348
    %v1350 = vmul.f32 %v1349, %v1233
    %v1351 = vadd.f32 %v1335, %v1350
    %s1352 = sld [smem:[#allocation2 + $0x5f]]
    %v1353 = vstv %s1352
    %v1354 = vmul.f32 %v1353, %v1233
    %v1355 = vadd.f32 %v1339, %v1354
    %s1356 = sld [smem:[#allocation2 + $0x83]]
    %v1357 = vstv %s1356
    %v1358 = vmul.f32 %v1357, %v1233
    %v1359 = vadd.f32 %v1343, %v1358
    %s1360 = sld [smem:[#allocation2 + $0x18]]
    %v1361 = vstv %s1360
    %v1362 = vmul.f32 %v1361, %v1247
    %v1363 = vadd.f32 %v1347, %v1362
    %s1364 = sld [smem:[#allocation2 + $0x3c]]
    %v1365 = vstv %s1364
    %v1366 = vmul.f32 %v1365, %v1247
    %v1367 = vadd.f32 %v1351, %v1366
    %s1368 = sld [smem:[#allocation2 + $0x60]]
    %v1369 = vstv %s1368
    %v1370 = vmul.f32 %v1369, %v1247
    %v1371 = vadd.f32 %v1355, %v1370
    %s1372 = sld [smem:[#allocation2 + $0x84]]
    %v1373 = vstv %s1372
    %v1374 = vmul.f32 %v1373, %v1247
    %v1375 = vadd.f32 %v1359, %v1374
    %s1376 = sld [smem:[#allocation2 + $0x19]]
    %v1377 = vstv %s1376
    %v1378 = vmul.f32 %v1377, %v1235
    %v1379 = vadd.f32 %v1363, %v1378
    %s1380 = sld [smem:[#allocation2 + $0x3d]]
    %v1381 = vstv %s1380
    %v1382 = vmul.f32 %v1381, %v1235
    %v1383 = vadd.f32 %v1367, %v1382
    %s1384 = sld [smem:[#allocation2 + $0x61]]
    %v1385 = vstv %s1384
    %v1386 = vmul.f32 %v1385, %v1235
    %v1387 = vadd.f32 %v1371, %v1386
    %s1388 = sld [smem:[#allocation2 + $0x85]]
    %v1389 = vstv %s1388
    %v1390 = vmul.f32 %v1389, %v1235
    %v1391 = vadd.f32 %v1375, %v1390
    %s1392 = sld [smem:[#allocation2 + $0x1a]]
    %v1393 = vstv %s1392
    %v1394 = vmul.f32 %v1393, %v1237
    %v1395 = vadd.f32 %v1379, %v1394
    %s1396 = sld [smem:[#allocation2 + $0x3e]]
    %v1397 = vstv %s1396
    %v1398 = vmul.f32 %v1397, %v1237
    %v1399 = vadd.f32 %v1383, %v1398
    %s1400 = sld [smem:[#allocation2 + $0x62]]
    %v1401 = vstv %s1400
    %v1402 = vmul.f32 %v1401, %v1237
    %v1403 = vadd.f32 %v1387, %v1402
    %s1404 = sld [smem:[#allocation2 + $0x86]]
    %v1405 = vstv %s1404
    %v1406 = vmul.f32 %v1405, %v1237
    %v1407 = vadd.f32 %v1391, %v1406
    %v1408 = vmax.f32 %v1231, %v1233
    %v1409 = vmax.f32 %v1235, %v1237
    %v1410 = vmax.f32 %v1408, %v1409
    %s1411 = sld [smem:[#allocation7 + $0x2]]
    %v1412 = vstv %s1411
    %v1413 = vmul.f32 %v1410, %v1412
    %s1414 = sld [smem:[#allocation8 + $0x2]]
    %v1415 = vstv %s1414
    %v1416 = vadd.f32 %v1413, %v1415
    %v1417 = vmax.f32 %v1416, 0.0
    %s1418 = scalar_lea.vmem [#allocation10], 112
    %1419 = vst.msk [vmem:[%s1418] sm:$0xff] %vm258, %v1417
    %s1420 = scalar_lea.vmem %s0, 152
    %v1421 = vld [vmem:[%s1420] sm:$0xff]
    %s1422 = scalar_lea.vmem %s0, 184
    %v1423 = vld [vmem:[%s1422] sm:$0xff]
    %s1424 = scalar_lea.vmem %s0, 216
    %v1425 = vld [vmem:[%s1424] sm:$0xff]
    %s1426 = scalar_lea.vmem %s0, 248
    %v1427 = vld [vmem:[%s1426] sm:$0xff]
    %1429 = vrot.lane.b32.xlu0 %v1423, 1
    %v1430 = vpop.permute.xlu0 %1429
    %v1432 = vsel %vm84, 0.0, %v1430
    %1434 = vrot.lane.b32.xlu0 %v1427, 1
    %v1435 = vpop.permute.xlu0 %1434
    %v1437 = vsel %vm84, 0.0, %v1435
    %v1438 = vrot.slane %v854, 3
    %v1441 = vrot.slane %v1425, 7
    %v1443 = vsel %vm94, %v1438, %v1441
    %v1444 = vrot.slane %v854, 7
    %v1446 = vrot.slane %v1427, 7
    %v1448 = vsel %vm94, %v1444, %v1446
    %1450 = vrot.lane.b32.xlu0 %v1448, 1
    %v1451 = vpop.permute.xlu0 %1450
    %v1453 = vsel %vm84, 0.0, %v1451
    %s1454 = sld [smem:[#allocation2 + $0x1b]]
    %v1455 = vstv %s1454
    %v1456 = vmul.f32 %v1455, %v1453
    %v1457 = vadd.f32 %v1395, %v1456
    %s1458 = sld [smem:[#allocation2 + $0x3f]]
    %v1459 = vstv %s1458
    %v1460 = vmul.f32 %v1459, %v1453
    %v1461 = vadd.f32 %v1399, %v1460
    %s1462 = sld [smem:[#allocation2 + $0x63]]
    %v1463 = vstv %s1462
    %v1464 = vmul.f32 %v1463, %v1453
    %v1465 = vadd.f32 %v1403, %v1464
    %s1466 = sld [smem:[#allocation2 + $0x87]]
    %v1467 = vstv %s1466
    %v1468 = vmul.f32 %v1467, %v1453
    %v1469 = vadd.f32 %v1407, %v1468
    %s1470 = sld [smem:[#allocation2 + $0x1c]]
    %v1471 = vstv %s1470
    %v1472 = vmul.f32 %v1471, %v1443
    %v1473 = vadd.f32 %v1457, %v1472
    %s1474 = sld [smem:[#allocation2 + $0x40]]
    %v1475 = vstv %s1474
    %v1476 = vmul.f32 %v1475, %v1443
    %v1477 = vadd.f32 %v1461, %v1476
    %s1478 = sld [smem:[#allocation2 + $0x64]]
    %v1479 = vstv %s1478
    %v1480 = vmul.f32 %v1479, %v1443
    %v1481 = vadd.f32 %v1465, %v1480
    %s1482 = sld [smem:[#allocation2 + $0x88]]
    %v1483 = vstv %s1482
    %v1484 = vmul.f32 %v1483, %v1443
    %v1485 = vadd.f32 %v1469, %v1484
    %s1486 = sld [smem:[#allocation2 + $0x1d]]
    %v1487 = vstv %s1486
    %v1488 = vmul.f32 %v1487, %v1448
    %v1489 = vadd.f32 %v1473, %v1488
    %s1490 = sld [smem:[#allocation2 + $0x41]]
    %v1491 = vstv %s1490
    %v1492 = vmul.f32 %v1491, %v1448
    %v1493 = vadd.f32 %v1477, %v1492
    %s1494 = sld [smem:[#allocation2 + $0x65]]
    %v1495 = vstv %s1494
    %v1496 = vmul.f32 %v1495, %v1448
    %v1497 = vadd.f32 %v1481, %v1496
    %s1498 = sld [smem:[#allocation2 + $0x89]]
    %v1499 = vstv %s1498
    %v1500 = vmul.f32 %v1499, %v1448
    %v1501 = vadd.f32 %v1485, %v1500
    %s1502 = sld [smem:[#allocation2 + $0x1e]]
    %v1503 = vstv %s1502
    %v1504 = vmul.f32 %v1503, %v1432
    %v1505 = vadd.f32 %v1489, %v1504
    %s1506 = sld [smem:[#allocation2 + $0x42]]
    %v1507 = vstv %s1506
    %v1508 = vmul.f32 %v1507, %v1432
    %v1509 = vadd.f32 %v1493, %v1508
    %s1510 = sld [smem:[#allocation2 + $0x66]]
    %v1511 = vstv %s1510
    %v1512 = vmul.f32 %v1511, %v1432
    %v1513 = vadd.f32 %v1497, %v1512
    %s1514 = sld [smem:[#allocation2 + $0x8a]]
    %v1515 = vstv %s1514
    %v1516 = vmul.f32 %v1515, %v1432
    %v1517 = vadd.f32 %v1501, %v1516
    %s1518 = sld [smem:[#allocation2 + $0x1f]]
    %v1519 = vstv %s1518
    %v1520 = vmul.f32 %v1519, %v1421
    %v1521 = vadd.f32 %v1505, %v1520
    %s1522 = sld [smem:[#allocation2 + $0x43]]
    %v1523 = vstv %s1522
    %v1524 = vmul.f32 %v1523, %v1421
    %v1525 = vadd.f32 %v1509, %v1524
    %s1526 = sld [smem:[#allocation2 + $0x67]]
    %v1527 = vstv %s1526
    %v1528 = vmul.f32 %v1527, %v1421
    %v1529 = vadd.f32 %v1513, %v1528
    %s1530 = sld [smem:[#allocation2 + $0x8b]]
    %v1531 = vstv %s1530
    %v1532 = vmul.f32 %v1531, %v1421
    %v1533 = vadd.f32 %v1517, %v1532
    %s1534 = sld [smem:[#allocation2 + $0x20]]
    %v1535 = vstv %s1534
    %v1536 = vmul.f32 %v1535, %v1423
    %v1537 = vadd.f32 %v1521, %v1536
    %s1538 = sld [smem:[#allocation2 + $0x44]]
    %v1539 = vstv %s1538
    %v1540 = vmul.f32 %v1539, %v1423
    %v1541 = vadd.f32 %v1525, %v1540
    %s1542 = sld [smem:[#allocation2 + $0x68]]
    %v1543 = vstv %s1542
    %v1544 = vmul.f32 %v1543, %v1423
    %v1545 = vadd.f32 %v1529, %v1544
    %s1546 = sld [smem:[#allocation2 + $0x8c]]
    %v1547 = vstv %s1546
    %v1548 = vmul.f32 %v1547, %v1423
    %v1549 = vadd.f32 %v1533, %v1548
    %s1550 = sld [smem:[#allocation2 + $0x21]]
    %v1551 = vstv %s1550
    %v1552 = vmul.f32 %v1551, %v1437
    %v1553 = vadd.f32 %v1537, %v1552
    %s1554 = sld [smem:[#allocation2 + $0x45]]
    %v1555 = vstv %s1554
    %v1556 = vmul.f32 %v1555, %v1437
    %v1557 = vadd.f32 %v1541, %v1556
    %s1558 = sld [smem:[#allocation2 + $0x69]]
    %v1559 = vstv %s1558
    %v1560 = vmul.f32 %v1559, %v1437
    %v1561 = vadd.f32 %v1545, %v1560
    %s1562 = sld [smem:[#allocation2 + $0x8d]]
    %v1563 = vstv %s1562
    %v1564 = vmul.f32 %v1563, %v1437
    %v1565 = vadd.f32 %v1549, %v1564
    %s1566 = sld [smem:[#allocation2 + $0x22]]
    %v1567 = vstv %s1566
    %v1568 = vmul.f32 %v1567, %v1425
    %v1569 = vadd.f32 %v1553, %v1568
    %s1570 = sld [smem:[#allocation2 + $0x46]]
    %v1571 = vstv %s1570
    %v1572 = vmul.f32 %v1571, %v1425
    %v1573 = vadd.f32 %v1557, %v1572
    %s1574 = sld [smem:[#allocation2 + $0x6a]]
    %v1575 = vstv %s1574
    %v1576 = vmul.f32 %v1575, %v1425
    %v1577 = vadd.f32 %v1561, %v1576
    %s1578 = sld [smem:[#allocation2 + $0x8e]]
    %v1579 = vstv %s1578
    %v1580 = vmul.f32 %v1579, %v1425
    %v1581 = vadd.f32 %v1565, %v1580
    %s1582 = sld [smem:[#allocation2 + $0x23]]
    %v1583 = vstv %s1582
    %v1584 = vmul.f32 %v1583, %v1427
    %v1585 = vadd.f32 %v1569, %v1584
    %s1586 = sld [smem:[#allocation2 + $0x47]]
    %v1587 = vstv %s1586
    %v1588 = vmul.f32 %v1587, %v1427
    %v1589 = vadd.f32 %v1573, %v1588
    %s1590 = sld [smem:[#allocation2 + $0x6b]]
    %v1591 = vstv %s1590
    %v1592 = vmul.f32 %v1591, %v1427
    %v1593 = vadd.f32 %v1577, %v1592
    %s1594 = sld [smem:[#allocation2 + $0x8f]]
    %v1595 = vstv %s1594
    %v1596 = vmul.f32 %v1595, %v1427
    %v1597 = vadd.f32 %v1581, %v1596
    %v1598 = vmax.f32 %v1421, %v1423
    %v1599 = vmax.f32 %v1425, %v1427
    %v1600 = vmax.f32 %v1598, %v1599
    %s1601 = sld [smem:[#allocation7 + $0x3]]
    %v1602 = vstv %s1601
    %v1603 = vmul.f32 %v1600, %v1602
    %s1604 = sld [smem:[#allocation8 + $0x3]]
    %v1605 = vstv %s1604
    %v1606 = vadd.f32 %v1603, %v1605
    %v1607 = vmax.f32 %v1606, 0.0
    %s1608 = scalar_lea.vmem [#allocation10], 120
    %1609 = vst.msk [vmem:[%s1608] sm:$0xff] %vm258, %v1607
    %s1610 = sld [smem:[#allocation5]]
    %v1611 = vstv %s1610
    %v1612 = vadd.f32 %v1585, %v1611
    %v1613 = vmax.f32 %v1612, 0.0
    %s1614 = scalar_lea.vmem [#allocation10], 64
    %1615 = vst.msk [vmem:[%s1614] sm:$0xff] %vm258, %v1613
    %s1616 = sld [smem:[#allocation5 + $0x1]]
    %v1617 = vstv %s1616
    %v1618 = vadd.f32 %v1589, %v1617
    %v1619 = vmax.f32 %v1618, 0.0
    %s1620 = scalar_lea.vmem [#allocation10], 72
    %1621 = vst.msk [vmem:[%s1620] sm:$0xff] %vm258, %v1619
    %s1622 = sld [smem:[#allocation5 + $0x2]]
    %v1623 = vstv %s1622
    %v1624 = vadd.f32 %v1593, %v1623
    %v1625 = vmax.f32 %v1624, 0.0
    %s1626 = scalar_lea.vmem [#allocation10], 80
    %1627 = vst.msk [vmem:[%s1626] sm:$0xff] %vm258, %v1625
    %s1628 = sld [smem:[#allocation5 + $0x3]]
    %v1629 = vstv %s1628
    %v1630 = vadd.f32 %v1597, %v1629
    %v1631 = vmax.f32 %v1630, 0.0
    %s1632 = scalar_lea.vmem [#allocation10], 88
    %1633 = vst.msk [vmem:[%s1632] sm:$0xff] %vm258, %v1631
    // Predicated region
    $region42: #{downsampler_block.1} parent=1 // pred_check
      _
    $region43: #{downsampler_block.1} parent=1 // pred_check_branch
      %1635 = sbr.rel (0) target = $region45
    $region44: #{downsampler_block.1} parent=1 // pred_region
      %s1637 = ssub.s32 2048, 2048
      %1638 = vsyncadd [#allocation3], %s1637
      %s1639 = sshll.u32 [#allocation10], 4
      %s1640 = int_to_ptr.vmem [resolvable:$true] %s1639
      %1645 = dma.vmem_to_hbm [thread:$0]  %s1640, 2048, %s6, [#allocation3], 128, 128, 8
    $region45: #{downsampler_block.1} parent=1 // pred_fallthru
      _
    // Predicated region
    $region46: #{downsampler_block.1} parent=1 // pred_check
      _
    $region47: #{downsampler_block.1} parent=1 // pred_check_branch
      %1647 = sbr.rel (0) target = $region49
    $region48: #{downsampler_block.1} parent=1 // pred_region
      %1648 = dma.done [#allocation3], 2048
    $region49: #{downsampler_block.1} parent=1 // pred_fallthru
      _
    %1649 = vsyncpa [#allocation3], 1
    %1650 = vsyncpa [#allocation4], 1
    %1651 = vsyncpa [#allocation6], 1
    %1652 = vsyncpa [#allocation9], 1

</llo_original>
